<compile_context>
chip_gen: v6e
topology: v6e:2x2x1
jax: 0.10.0
libtpu: 0.0.40
codegen_flags: <defaults>
</compile_context>

<pallas_src>
import functools

import jax
import jax.numpy as jnp
from jax import lax
from jax.experimental import pallas as pl
from jax.experimental.pallas import tpu as pltpu


def gaussian_blstm_kernel(T, B,
                          x_ref, eps_ref,
                          wih_ref, bih_ref, whh_ref,
                          we1_ref, we2_ref, be_ref,
                          wd_ref, bd_ref,
                          musd_ref, logit_ref,
                          gx_ref, hf_ref, hb_ref):
    """Single-invocation kernel; all refs VMEM-resident.

    Shapes (E = hidden per direction, K = 2E):
      x_ref    (T*B, F)   time-major rows: row t*B + b = x[b, :, t]
      eps_ref  (T*B, K)   reparametrization noise
      wih_ref  (F, 4K)    both directions' input projection, gate-interleaved cols
      bih_ref  (1, 4K)    (b_ih + b_hh), same column layout
      whh_ref  (K, 4K)    block-structured recurrent weights
      we1_ref  (K, 2K)    encode weight, only fwd rows nonzero
      we2_ref  (K, 2K)    encode weight, only bwd rows nonzero
      be_ref   (1, 2K);  wd_ref (K, C);  bd_ref (1, C)
      musd_ref (T*B, 2K)  output: [mu | std]   (lane-dense 128 wide)
      logit_ref(T*B, C)   output
      gx_ref   (T*B, 4K)  scratch: hoisted x-projection (+bias)
      hf_ref   (T*B, K)   scratch: h of step s stored at time s
      hb_ref   (T*B, K)   scratch: h of step s stored at time T-1-s
    """
    K = whh_ref.shape[0]            # 2E
    E = K // 2
    G = whh_ref.shape[1]            # 4K = 8E
    f32 = jnp.float32

    # ---- hoisted input projection for BOTH directions, biases folded in ----
    gx_ref[...] = (jnp.dot(x_ref[...], wih_ref[...], preferred_element_type=f32)
                   + bih_ref[...])

    whh = whh_ref[...]
    # gate column c belongs to the FORWARD direction iff (c % K) < E
    lane = lax.broadcasted_iota(jnp.int32, (B, G), 1)
    is_fwd_lane = (lane % K) < E

    def step(s, carry):
        h, c = carry                                   # (B, K): [h_f | h_b]
        row_f = pl.multiple_of(s * B, B)               # rows of time s      (fwd)
        row_b = pl.multiple_of((T - 1 - s) * B, B)     # rows of time T-1-s  (bwd)
        # one recurrent matmul for both directions
        hh = jnp.dot(h, whh, preferred_element_type=f32)          # (B, 4K)
        # x-gate term: forward lanes come from time s, backward from time T-1-s
        gx = jnp.where(is_fwd_lane,
                       gx_ref[pl.ds(row_f, B), :],
                       gx_ref[pl.ds(row_b, B), :])
        gates = hh + gx
        # gate layout: [i | f | g | o], each K wide ([fwd E | bwd E])
        i_g = jax.nn.sigmoid(gates[:, 0 * K:1 * K])
        f_g = jax.nn.sigmoid(gates[:, 1 * K:2 * K])
        g_g = jnp.tanh(gates[:, 2 * K:3 * K])
        o_g = jax.nn.sigmoid(gates[:, 3 * K:4 * K])
        c = f_g * c + i_g * g_g
        h = o_g * jnp.tanh(c)
        # stash the full-width hidden state (no in-loop lane slicing); fwd/bwd
        # lane selection is folded into the zero rows of we1/we2 after the loop.
        hf_ref[pl.ds(row_f, B), :] = h   # lanes [:E] = forward h at time s
        hb_ref[pl.ds(row_b, B), :] = h   # lanes [E:] = backward h at time T-1-s
        return (h, c)

    zeros = jnp.zeros((B, K), f32)
    lax.fori_loop(0, T, step, (zeros, zeros), unroll=True)

    # ---- encode -> (mu, std) -> reparametrize -> decode, as big matmuls ----
    stats = (jnp.dot(hf_ref[...], we1_ref[...], preferred_element_type=f32)
             + jnp.dot(hb_ref[...], we2_ref[...], preferred_element_type=f32)
             + be_ref[...])                                        # (T*B, 2K)
    sp = jax.nn.softplus(stats - 5.0)
    lane2 = lax.broadcasted_iota(jnp.int32, stats.shape, 1)
    musd_ref[...] = jnp.where(lane2 < K, stats, sp)                # [mu | std]

    mu = stats[:, :K]
    std = sp[:, K:]
    enc = mu + eps_ref[...] * std
    logit_ref[...] = (jnp.dot(enc, wd_ref[...], preferred_element_type=f32)
                      + bd_ref[...])


def gaussian_blstm_forward(x, eps, params):
    """x: (B, input_size, T) float32 (pre-permute layout, as the PyTorch module takes).
    eps: (B, T, 2E) standard-normal noise.
    Returns ((mu, std), logit) with shapes ((B,T,2E), (B,T,2E)), (B,T,n_class)."""
    B, F, T = x.shape
    K = params["whh_cat"].shape[0]            # 2E
    C = params["wd"].shape[1]

    # time-major row layout: row t*B + b
    x_tm = jnp.transpose(x, (2, 0, 1)).reshape(T * B, F)
    eps_tm = jnp.transpose(eps, (1, 0, 2)).reshape(T * B, K)

    kern = functools.partial(gaussian_blstm_kernel, T, B)
    vmem = pl.BlockSpec(memory_space=pltpu.MemorySpace.VMEM)

    # NOTE(scale-up): for production B/T, grid over blocks of batch rows with
    # dimension_semantics=("parallel",) (two TensorCores on v7x) and cast the
    # matmul operands to bf16 on v6e/v7x; a single gridless call is right for
    # these small demo shapes (everything fits VMEM with large margin).
    musd, logit = pl.pallas_call(
        kern,
        out_shape=(jax.ShapeDtypeStruct((T * B, 2 * K), jnp.float32),
                   jax.ShapeDtypeStruct((T * B, C), jnp.float32)),
        in_specs=[vmem] * 10,
        out_specs=(vmem, vmem),
        scratch_shapes=[pltpu.VMEM((T * B, 4 * K), jnp.float32),   # gx
                        pltpu.VMEM((T * B, K), jnp.float32),       # hf
                        pltpu.VMEM((T * B, K), jnp.float32)],      # hb
    )(x_tm, eps_tm,
      params["wih_cat"], params["bih_cat"], params["whh_cat"],
      params["we1"], params["we2"], params["be"],
      params["wd"], params["bd"])

    musd = musd.reshape(T, B, 2 * K).transpose(1, 0, 2)
    mu, std = musd[..., :K], musd[..., K:]
    logit = logit.reshape(T, B, C).transpose(1, 0, 2)
    return (mu, std), logit


def init_raw_params(key, input_size, E, n_class):
    """Synthetic parameters in (transposed) PyTorch layout, gate order i,f,g,o."""
    ks = jax.random.split(key, 10)
    s = 0.1
    K = 2 * E
    rnd = lambda k, shape: s * jax.random.normal(k, shape, jnp.float32)
    return {
        "wih_f": rnd(ks[0], (input_size, 4 * E)),
        "whh_f": rnd(ks[1], (E, 4 * E)),
        "b_f":   rnd(ks[2], (1, 4 * E)),          # b_ih + b_hh combined
        "wih_b": rnd(ks[3], (input_size, 4 * E)),
        "whh_b": rnd(ks[4], (E, 4 * E)),
        "b_b":   rnd(ks[5], (1, 4 * E)),
        "we":    rnd(ks[6], (K, 2 * K)),          # encode: Linear(2E, 4E)
        "be":    rnd(ks[7], (1, 2 * K)),
        "wd":    rnd(ks[8], (K, n_class)),        # decode: Linear(2E, n_class)
        "bd":    rnd(ks[9], (1, n_class)),
    }


def build_kernel_params(raw):
    """Repack raw weights into the kernel's fused / gate-interleaved layout."""
    E = raw["whh_f"].shape[0]

    def interleave(a, b):
        # (n, 4E) x2 -> (n, 8E) with columns [i_f i_b f_f f_b g_f g_b o_f o_b]
        n = a.shape[0]
        return jnp.stack([a.reshape(n, 4, E), b.reshape(n, 4, E)],
                         axis=2).reshape(n, 8 * E)

    z_hh = jnp.zeros_like(raw["whh_f"])
    we = raw["we"]
    z_e = jnp.zeros_like(we[:E])
    return {
        "wih_cat": interleave(raw["wih_f"], raw["wih_b"]),            # (F, 8E)
        "bih_cat": interleave(raw["b_f"], raw["b_b"]),                # (1, 8E)
        # block structure: fwd h-rows feed fwd gate cols, bwd rows feed bwd cols
        "whh_cat": jnp.concatenate([interleave(raw["whh_f"], z_hh),
                                    interleave(z_hh, raw["whh_b"])], axis=0),
        # encode weight split into zero-padded row blocks so the kernel can use
        # the full-width [fwd|bwd] hidden blocks without lane slicing.
        "we1": jnp.concatenate([we[:E], z_e], axis=0),                # (2E, 2K)
        "we2": jnp.concatenate([z_e, we[E:]], axis=0),                # (2E, 2K)
        "be": raw["be"],
        "wd": raw["wd"],
        "bd": raw["bd"],
    }


def reference_forward(x, eps, raw):
    """Pure-JAX reference mirroring GaussianBLSTM.forward (num_sample=1)."""
    B, F, T = x.shape
    E = raw["whh_f"].shape[0]
    K = 2 * E
    hi = jax.lax.Precision.HIGHEST
    x_t = jnp.transpose(x, (2, 0, 1))             # (T, B, F)

    def make_cell(wih, whh, b):
        def cell(carry, xt):
            h, c = carry
            g = jnp.dot(xt, wih, precision=hi) + jnp.dot(h, whh, precision=hi) + b
            i = jax.nn.sigmoid(g[:, :E])
            f = jax.nn.sigmoid(g[:, E:2 * E])
            gg = jnp.tanh(g[:, 2 * E:3 * E])
            o = jax.nn.sigmoid(g[:, 3 * E:])
            c = f * c + i * gg
            h = o * jnp.tanh(c)
            return (h, c), h
        return cell

    h0 = jnp.zeros((B, E), jnp.float32)
    c0 = jnp.zeros((B, E), jnp.float32)
    _, hf = lax.scan(make_cell(raw["wih_f"], raw["whh_f"], raw["b_f"]), (h0, c0), x_t)
    _, hb_rev = lax.scan(make_cell(raw["wih_b"], raw["whh_b"], raw["b_b"]),
                         (h0, c0), x_t[::-1])
    hb = hb_rev[::-1]
    emb = jnp.transpose(jnp.concatenate([hf, hb], axis=-1), (1, 0, 2))  # (B, T, 2E)

    stats = jnp.dot(emb, raw["we"], precision=hi) + raw["be"]
    mu = stats[..., :K]
    std = jax.nn.softplus(stats[..., K:] - 5.0)
    enc = mu + eps * std
    logit = jnp.dot(enc, raw["wd"], precision=hi) + raw["bd"]
    return (mu, std), logit


if __name__ == "__main__":
    # Small shapes consistent with the module: embedding_dim E=32 (self.K=64),
    # input_size=16, T=12 frames, batch B=8, n_class=16.
    B, F, T, E, C = 8, 16, 12, 32, 16
    K = 2 * E

    key = jax.random.PRNGKey(0)
    kx, ke, kp = jax.random.split(key, 3)
    x = jax.random.normal(kx, (B, F, T), jnp.float32)     # module layout (B, input_size, T)
    eps = jax.random.normal(ke, (B, T, K), jnp.float32)   # reparametrization noise

    raw = init_raw_params(kp, F, E, C)
    params = build_kernel_params(raw)

    (mu, std), logit = gaussian_blstm_forward(x, eps, params)
    (mu, std), logit = jax.block_until_ready(((mu, std), logit))

    assert mu.shape == (B, T, K) and std.shape == (B, T, K) and logit.shape == (B, T, C)
    assert bool(jnp.all(jnp.isfinite(mu)))
    assert bool(jnp.all(jnp.isfinite(std))) and bool(jnp.all(std > 0))
    assert bool(jnp.all(jnp.isfinite(logit)))

    # pure-JAX reference check (tolerances cover MXU f32/bf16-pass differences)
    (mu_r, std_r), logit_r = reference_forward(x, eps, raw)
    assert bool(jnp.allclose(mu, mu_r, atol=1e-2, rtol=1e-2))
    assert bool(jnp.allclose(std, std_r, atol=1e-2, rtol=1e-2))
    assert bool(jnp.allclose(logit, logit_r, atol=1e-2, rtol=1e-2))

    print("KERNEL_OK")
</pallas_src>

<mosaic_0001>
module attributes {stable_mosaic.version = 11 : i64} {
  func.func @gaussian_blstm_kernel(%arg0: memref<96x16xf32, #tpu.memory_space<vmem>>, %arg1: memref<96x64xf32, #tpu.memory_space<vmem>>, %arg2: memref<16x256xf32, #tpu.memory_space<vmem>>, %arg3: memref<1x256xf32, #tpu.memory_space<vmem>>, %arg4: memref<64x256xf32, #tpu.memory_space<vmem>>, %arg5: memref<64x128xf32, #tpu.memory_space<vmem>>, %arg6: memref<64x128xf32, #tpu.memory_space<vmem>>, %arg7: memref<1x128xf32, #tpu.memory_space<vmem>>, %arg8: memref<64x16xf32, #tpu.memory_space<vmem>>, %arg9: memref<1x16xf32, #tpu.memory_space<vmem>>, %arg10: memref<96x128xf32, #tpu.memory_space<vmem>>, %arg11: memref<96x16xf32, #tpu.memory_space<vmem>>, %arg12: memref<96x256xf32, #tpu.memory_space<vmem>>, %arg13: memref<96x64xf32, #tpu.memory_space<vmem>>, %arg14: memref<96x64xf32, #tpu.memory_space<vmem>>) attributes {dimension_semantics = [], scalar_prefetch = 0 : i64, scratch_operands = 3 : i64, tpu.core_type = #tpu.core_type<tc>} {
    %c0 = arith.constant 0 : index
    %c0_0 = arith.constant 0 : index
    %0 = vector.load %arg0[%c0, %c0_0] : memref<96x16xf32, #tpu.memory_space<vmem>>, vector<96x16xf32>
    %c0_1 = arith.constant 0 : index
    %c0_2 = arith.constant 0 : index
    %1 = vector.load %arg2[%c0_1, %c0_2] : memref<16x256xf32, #tpu.memory_space<vmem>>, vector<16x256xf32>
    %cst = arith.constant dense<0.000000e+00> : vector<96x256xf32>
    %2 = tpu.matmul %0, %1, %cst {dimension_numbers = #tpu.dot_dimension_numbers<[1], [0], [0], [1], [0, 0, 1, 1], [], []>} : vector<96x16xf32>, vector<16x256xf32>, vector<96x256xf32> -> vector<96x256xf32>
    %c0_3 = arith.constant 0 : index
    %c0_4 = arith.constant 0 : index
    %3 = vector.load %arg3[%c0_3, %c0_4] : memref<1x256xf32, #tpu.memory_space<vmem>>, vector<1x256xf32>
    %4 = vector.broadcast %3 : vector<1x256xf32> to vector<96x256xf32>
    %5 = arith.addf %2, %4 : vector<96x256xf32>
    %c0_5 = arith.constant 0 : index
    %c0_6 = arith.constant 0 : index
    %6 = vector.load %arg12[%c0_5, %c0_6] : memref<96x256xf32, #tpu.memory_space<vmem>>, vector<96x256xf32>
    tpu.vector_store %arg12[%c0_5, %c0_6], %5 {strides = array<i32>} : memref<96x256xf32, #tpu.memory_space<vmem>>, vector<96x256xf32>,
    %c0_7 = arith.constant 0 : index
    %c0_8 = arith.constant 0 : index
    %7 = vector.load %arg4[%c0_7, %c0_8] : memref<64x256xf32, #tpu.memory_space<vmem>>, vector<64x256xf32>
    %8 = tpu.iota {dimensions = array<i32: 1>} : vector<8x256xi32>
    %c64_i32 = arith.constant 64 : i32
    %c0_i32 = arith.constant 0 : i32
    %9 = arith.cmpi eq, %c64_i32, %c0_i32 : i32
    %c1_i32 = arith.constant 1 : i32
    %10 = arith.select %9, %c1_i32, %c64_i32 : i32
    %11 = vector.broadcast %10 : i32 to vector<8x256xi32>
    %12 = arith.remsi %8, %11 : vector<8x256xi32>
    %c0_i32_9 = arith.constant 0 : i32
    %13 = vector.broadcast %c0_i32_9 : i32 to vector<8x256xi32>
    %14 = arith.cmpi ne, %12, %13 : vector<8x256xi32>
    %c0_i32_10 = arith.constant 0 : i32
    %15 = vector.broadcast %c0_i32_10 : i32 to vector<8x256xi32>
    %16 = arith.cmpi slt, %12, %15 : vector<8x256xi32>
    %c0_i32_11 = arith.constant 0 : i32
    %17 = arith.cmpi slt, %10, %c0_i32_11 : i32
    %18 = vector.broadcast %17 : i1 to vector<8x256xi1>
    %19 = vector.broadcast %18 : vector<8x256xi1> to vector<8x256xi1>
    %20 = arith.xori %16, %19 : vector<8x256xi1>
    %21 = arith.andi %20, %14 : vector<8x256xi1>
    %22 = vector.broadcast %10 : i32 to vector<8x256xi32>
    %23 = arith.addi %12, %22 : vector<8x256xi32>
    %24 = arith.select %21, %23, %12 : vector<8x256xi1>, vector<8x256xi32>
    %c32_i32 = arith.constant 32 : i32
    %25 = vector.broadcast %c32_i32 : i32 to vector<8x256xi32>
    %26 = arith.cmpi slt, %24, %25 : vector<8x256xi32>
    %cst_12 = arith.constant 0.000000e+00 : f32
    %27 = vector.broadcast %cst_12 : f32 to vector<8x64xf32>
    %c0_i32_13 = arith.constant 0 : i32
    %c8_i32 = arith.constant 8 : i32
    %28 = arith.muli %c0_i32_13, %c8_i32 : i32
    %29 = tpu.assume_multiple %28, 8 : i32
    %c11_i32 = arith.constant 11 : i32
    %30 = arith.subi %c11_i32, %c0_i32_13 : i32
    %c8_i32_14 = arith.constant 8 : i32
    %31 = arith.muli %30, %c8_i32_14 : i32
    %32 = tpu.assume_multiple %31, 8 : i32
    %cst_15 = arith.constant dense<0.000000e+00> : vector<8x256xf32>
    %33 = tpu.matmul %27, %7, %cst_15 {dimension_numbers = #tpu.dot_dimension_numbers<[1], [0], [0], [1], [0, 0, 1, 1], [], []>} : vector<8x64xf32>, vector<64x256xf32>, vector<8x256xf32> -> vector<8x256xf32>
    %34 = arith.index_cast %29 : i32 to index
    %c0_16 = arith.constant 0 : index
    %35 = vector.load %arg12[%34, %c0_16] : memref<96x256xf32, #tpu.memory_space<vmem>>, vector<8x256xf32>
    %36 = arith.index_cast %32 : i32 to index
    %c0_17 = arith.constant 0 : index
    %37 = vector.load %arg12[%36, %c0_17] : memref<96x256xf32, #tpu.memory_space<vmem>>, vector<8x256xf32>
    %38 = arith.select %26, %35, %37 : vector<8x256xi1>, vector<8x256xf32>
    %39 = arith.addf %33, %38 : vector<8x256xf32>
    %40 = vector.extract_strided_slice %39 {offsets = [0, 0], sizes = [8, 64], strides = [1, 1]} : vector<8x256xf32> to vector<8x64xf32>
    %41 = arith.negf %40 : vector<8x64xf32>
    %42 = math.exp %41 : vector<8x64xf32>
    %cst_18 = arith.constant 1.000000e+00 : f32
    %43 = vector.broadcast %cst_18 : f32 to vector<8x64xf32>
    %44 = arith.addf %43, %42 : vector<8x64xf32>
    %45 = arith.divf %43, %44 : vector<8x64xf32>
    %46 = vector.extract_strided_slice %39 {offsets = [0, 64], sizes = [8, 64], strides = [1, 1]} : vector<8x256xf32> to vector<8x64xf32>
    %47 = arith.negf %46 : vector<8x64xf32>
    %48 = math.exp %47 : vector<8x64xf32>
    %cst_19 = arith.constant 1.000000e+00 : f32
    %49 = vector.broadcast %cst_19 : f32 to vector<8x64xf32>
    %50 = arith.addf %49, %48 : vector<8x64xf32>
    %51 = arith.divf %49, %50 : vector<8x64xf32>
    %52 = vector.extract_strided_slice %39 {offsets = [0, 128], sizes = [8, 64], strides = [1, 1]} : vector<8x256xf32> to vector<8x64xf32>
    %53 = math.tanh %52 : vector<8x64xf32>
    %54 = vector.extract_strided_slice %39 {offsets = [0, 192], sizes = [8, 64], strides = [1, 1]} : vector<8x256xf32> to vector<8x64xf32>
    %55 = arith.negf %54 : vector<8x64xf32>
    %56 = math.exp %55 : vector<8x64xf32>
    %cst_20 = arith.constant 1.000000e+00 : f32
    %57 = vector.broadcast %cst_20 : f32 to vector<8x64xf32>
    %58 = arith.addf %57, %56 : vector<8x64xf32>
    %59 = arith.divf %57, %58 : vector<8x64xf32>
    %60 = arith.mulf %51, %27 : vector<8x64xf32>
    %61 = arith.mulf %45, %53 : vector<8x64xf32>
    %62 = arith.addf %60, %61 : vector<8x64xf32>
    %63 = math.tanh %62 : vector<8x64xf32>
    %64 = arith.mulf %59, %63 : vector<8x64xf32>
    %65 = arith.index_cast %29 : i32 to index
    %c0_21 = arith.constant 0 : index
    %66 = vector.load %arg13[%65, %c0_21] : memref<96x64xf32, #tpu.memory_space<vmem>>, vector<8x64xf32>
    tpu.vector_store %arg13[%65, %c0_21], %64 {strides = array<i32>} : memref<96x64xf32, #tpu.memory_space<vmem>>, vector<8x64xf32>,
    %67 = arith.index_cast %32 : i32 to index
    %c0_22 = arith.constant 0 : index
    %68 = vector.load %arg14[%67, %c0_22] : memref<96x64xf32, #tpu.memory_space<vmem>>, vector<8x64xf32>
    tpu.vector_store %arg14[%67, %c0_22], %64 {strides = array<i32>} : memref<96x64xf32, #tpu.memory_space<vmem>>, vector<8x64xf32>,
    %c1_i32_23 = arith.constant 1 : i32
    %c8_i32_24 = arith.constant 8 : i32
    %69 = arith.muli %c1_i32_23, %c8_i32_24 : i32
    %70 = tpu.assume_multiple %69, 8 : i32
    %c11_i32_25 = arith.constant 11 : i32
    %71 = arith.subi %c11_i32_25, %c1_i32_23 : i32
    %c8_i32_26 = arith.constant 8 : i32
    %72 = arith.muli %71, %c8_i32_26 : i32
    %73 = tpu.assume_multiple %72, 8 : i32
    %cst_27 = arith.constant dense<0.000000e+00> : vector<8x256xf32>
    %74 = tpu.matmul %64, %7, %cst_27 {dimension_numbers = #tpu.dot_dimension_numbers<[1], [0], [0], [1], [0, 0, 1, 1], [], []>} : vector<8x64xf32>, vector<64x256xf32>, vector<8x256xf32> -> vector<8x256xf32>
    %75 = arith.index_cast %70 : i32 to index
    %c0_28 = arith.constant 0 : index
    %76 = vector.load %arg12[%75, %c0_28] : memref<96x256xf32, #tpu.memory_space<vmem>>, vector<8x256xf32>
    %77 = arith.index_cast %73 : i32 to index
    %c0_29 = arith.constant 0 : index
    %78 = vector.load %arg12[%77, %c0_29] : memref<96x256xf32, #tpu.memory_space<vmem>>, vector<8x256xf32>
    %79 = arith.select %26, %76, %78 : vector<8x256xi1>, vector<8x256xf32>
    %80 = arith.addf %74, %79 : vector<8x256xf32>
    %81 = vector.extract_strided_slice %80 {offsets = [0, 0], sizes = [8, 64], strides = [1, 1]} : vector<8x256xf32> to vector<8x64xf32>
    %82 = arith.negf %81 : vector<8x64xf32>
    %83 = math.exp %82 : vector<8x64xf32>
    %cst_30 = arith.constant 1.000000e+00 : f32
    %84 = vector.broadcast %cst_30 : f32 to vector<8x64xf32>
    %85 = arith.addf %84, %83 : vector<8x64xf32>
    %86 = arith.divf %84, %85 : vector<8x64xf32>
    %87 = vector.extract_strided_slice %80 {offsets = [0, 64], sizes = [8, 64], strides = [1, 1]} : vector<8x256xf32> to vector<8x64xf32>
    %88 = arith.negf %87 : vector<8x64xf32>
    %89 = math.exp %88 : vector<8x64xf32>
    %cst_31 = arith.constant 1.000000e+00 : f32
    %90 = vector.broadcast %cst_31 : f32 to vector<8x64xf32>
    %91 = arith.addf %90, %89 : vector<8x64xf32>
    %92 = arith.divf %90, %91 : vector<8x64xf32>
    %93 = vector.extract_strided_slice %80 {offsets = [0, 128], sizes = [8, 64], strides = [1, 1]} : vector<8x256xf32> to vector<8x64xf32>
    %94 = math.tanh %93 : vector<8x64xf32>
    %95 = vector.extract_strided_slice %80 {offsets = [0, 192], sizes = [8, 64], strides = [1, 1]} : vector<8x256xf32> to vector<8x64xf32>
    %96 = arith.negf %95 : vector<8x64xf32>
    %97 = math.exp %96 : vector<8x64xf32>
    %cst_32 = arith.constant 1.000000e+00 : f32
    %98 = vector.broadcast %cst_32 : f32 to vector<8x64xf32>
    %99 = arith.addf %98, %97 : vector<8x64xf32>
    %100 = arith.divf %98, %99 : vector<8x64xf32>
    %101 = arith.mulf %92, %62 : vector<8x64xf32>
    %102 = arith.mulf %86, %94 : vector<8x64xf32>
    %103 = arith.addf %101, %102 : vector<8x64xf32>
    %104 = math.tanh %103 : vector<8x64xf32>
    %105 = arith.mulf %100, %104 : vector<8x64xf32>
    %106 = arith.index_cast %70 : i32 to index
    %c0_33 = arith.constant 0 : index
    %107 = vector.load %arg13[%106, %c0_33] : memref<96x64xf32, #tpu.memory_space<vmem>>, vector<8x64xf32>
    tpu.vector_store %arg13[%106, %c0_33], %105 {strides = array<i32>} : memref<96x64xf32, #tpu.memory_space<vmem>>, vector<8x64xf32>,
    %108 = arith.index_cast %73 : i32 to index
    %c0_34 = arith.constant 0 : index
    %109 = vector.load %arg14[%108, %c0_34] : memref<96x64xf32, #tpu.memory_space<vmem>>, vector<8x64xf32>
    tpu.vector_store %arg14[%108, %c0_34], %105 {strides = array<i32>} : memref<96x64xf32, #tpu.memory_space<vmem>>, vector<8x64xf32>,
    %c2_i32 = arith.constant 2 : i32
    %c8_i32_35 = arith.constant 8 : i32
    %110 = arith.muli %c2_i32, %c8_i32_35 : i32
    %111 = tpu.assume_multiple %110, 8 : i32
    %c11_i32_36 = arith.constant 11 : i32
    %112 = arith.subi %c11_i32_36, %c2_i32 : i32
    %c8_i32_37 = arith.constant 8 : i32
    %113 = arith.muli %112, %c8_i32_37 : i32
    %114 = tpu.assume_multiple %113, 8 : i32
    %cst_38 = arith.constant dense<0.000000e+00> : vector<8x256xf32>
    %115 = tpu.matmul %105, %7, %cst_38 {dimension_numbers = #tpu.dot_dimension_numbers<[1], [0], [0], [1], [0, 0, 1, 1], [], []>} : vector<8x64xf32>, vector<64x256xf32>, vector<8x256xf32> -> vector<8x256xf32>
    %116 = arith.index_cast %111 : i32 to index
    %c0_39 = arith.constant 0 : index
    %117 = vector.load %arg12[%116, %c0_39] : memref<96x256xf32, #tpu.memory_space<vmem>>, vector<8x256xf32>
    %118 = arith.index_cast %114 : i32 to index
    %c0_40 = arith.constant 0 : index
    %119 = vector.load %arg12[%118, %c0_40] : memref<96x256xf32, #tpu.memory_space<vmem>>, vector<8x256xf32>
    %120 = arith.select %26, %117, %119 : vector<8x256xi1>, vector<8x256xf32>
    %121 = arith.addf %115, %120 : vector<8x256xf32>
    %122 = vector.extract_strided_slice %121 {offsets = [0, 0], sizes = [8, 64], strides = [1, 1]} : vector<8x256xf32> to vector<8x64xf32>
    %123 = arith.negf %122 : vector<8x64xf32>
    %124 = math.exp %123 : vector<8x64xf32>
    %cst_41 = arith.constant 1.000000e+00 : f32
    %125 = vector.broadcast %cst_41 : f32 to vector<8x64xf32>
    %126 = arith.addf %125, %124 : vector<8x64xf32>
    %127 = arith.divf %125, %126 : vector<8x64xf32>
    %128 = vector.extract_strided_slice %121 {offsets = [0, 64], sizes = [8, 64], strides = [1, 1]} : vector<8x256xf32> to vector<8x64xf32>
    %129 = arith.negf %128 : vector<8x64xf32>
    %130 = math.exp %129 : vector<8x64xf32>
    %cst_42 = arith.constant 1.000000e+00 : f32
    %131 = vector.broadcast %cst_42 : f32 to vector<8x64xf32>
    %132 = arith.addf %131, %130 : vector<8x64xf32>
    %133 = arith.divf %131, %132 : vector<8x64xf32>
    %134 = vector.extract_strided_slice %121 {offsets = [0, 128], sizes = [8, 64], strides = [1, 1]} : vector<8x256xf32> to vector<8x64xf32>
    %135 = math.tanh %134 : vector<8x64xf32>
    %136 = vector.extract_strided_slice %121 {offsets = [0, 192], sizes = [8, 64], strides = [1, 1]} : vector<8x256xf32> to vector<8x64xf32>
    %137 = arith.negf %136 : vector<8x64xf32>
    %138 = math.exp %137 : vector<8x64xf32>
    %cst_43 = arith.constant 1.000000e+00 : f32
    %139 = vector.broadcast %cst_43 : f32 to vector<8x64xf32>
    %140 = arith.addf %139, %138 : vector<8x64xf32>
    %141 = arith.divf %139, %140 : vector<8x64xf32>
    %142 = arith.mulf %133, %103 : vector<8x64xf32>
    %143 = arith.mulf %127, %135 : vector<8x64xf32>
    %144 = arith.addf %142, %143 : vector<8x64xf32>
    %145 = math.tanh %144 : vector<8x64xf32>
    %146 = arith.mulf %141, %145 : vector<8x64xf32>
    %147 = arith.index_cast %111 : i32 to index
    %c0_44 = arith.constant 0 : index
    %148 = vector.load %arg13[%147, %c0_44] : memref<96x64xf32, #tpu.memory_space<vmem>>, vector<8x64xf32>
    tpu.vector_store %arg13[%147, %c0_44], %146 {strides = array<i32>} : memref<96x64xf32, #tpu.memory_space<vmem>>, vector<8x64xf32>,
    %149 = arith.index_cast %114 : i32 to index
    %c0_45 = arith.constant 0 : index
    %150 = vector.load %arg14[%149, %c0_45] : memref<96x64xf32, #tpu.memory_space<vmem>>, vector<8x64xf32>
    tpu.vector_store %arg14[%149, %c0_45], %146 {strides = array<i32>} : memref<96x64xf32, #tpu.memory_space<vmem>>, vector<8x64xf32>,
    %c3_i32 = arith.constant 3 : i32
    %c8_i32_46 = arith.constant 8 : i32
    %151 = arith.muli %c3_i32, %c8_i32_46 : i32
    %152 = tpu.assume_multiple %151, 8 : i32
    %c11_i32_47 = arith.constant 11 : i32
    %153 = arith.subi %c11_i32_47, %c3_i32 : i32
    %c8_i32_48 = arith.constant 8 : i32
    %154 = arith.muli %153, %c8_i32_48 : i32
    %155 = tpu.assume_multiple %154, 8 : i32
    %cst_49 = arith.constant dense<0.000000e+00> : vector<8x256xf32>
    %156 = tpu.matmul %146, %7, %cst_49 {dimension_numbers = #tpu.dot_dimension_numbers<[1], [0], [0], [1], [0, 0, 1, 1], [], []>} : vector<8x64xf32>, vector<64x256xf32>, vector<8x256xf32> -> vector<8x256xf32>
    %157 = arith.index_cast %152 : i32 to index
    %c0_50 = arith.constant 0 : index
    %158 = vector.load %arg12[%157, %c0_50] : memref<96x256xf32, #tpu.memory_space<vmem>>, vector<8x256xf32>
    %159 = arith.index_cast %155 : i32 to index
    %c0_51 = arith.constant 0 : index
    %160 = vector.load %arg12[%159, %c0_51] : memref<96x256xf32, #tpu.memory_space<vmem>>, vector<8x256xf32>
    %161 = arith.select %26, %158, %160 : vector<8x256xi1>, vector<8x256xf32>
    %162 = arith.addf %156, %161 : vector<8x256xf32>
    %163 = vector.extract_strided_slice %162 {offsets = [0, 0], sizes = [8, 64], strides = [1, 1]} : vector<8x256xf32> to vector<8x64xf32>
    %164 = arith.negf %163 : vector<8x64xf32>
    %165 = math.exp %164 : vector<8x64xf32>
    %cst_52 = arith.constant 1.000000e+00 : f32
    %166 = vector.broadcast %cst_52 : f32 to vector<8x64xf32>
    %167 = arith.addf %166, %165 : vector<8x64xf32>
    %168 = arith.divf %166, %167 : vector<8x64xf32>
    %169 = vector.extract_strided_slice %162 {offsets = [0, 64], sizes = [8, 64], strides = [1, 1]} : vector<8x256xf32> to vector<8x64xf32>
    %170 = arith.negf %169 : vector<8x64xf32>
    %171 = math.exp %170 : vector<8x64xf32>
    %cst_53 = arith.constant 1.000000e+00 : f32
    %172 = vector.broadcast %cst_53 : f32 to vector<8x64xf32>
    %173 = arith.addf %172, %171 : vector<8x64xf32>
    %174 = arith.divf %172, %173 : vector<8x64xf32>
    %175 = vector.extract_strided_slice %162 {offsets = [0, 128], sizes = [8, 64], strides = [1, 1]} : vector<8x256xf32> to vector<8x64xf32>
    %176 = math.tanh %175 : vector<8x64xf32>
    %177 = vector.extract_strided_slice %162 {offsets = [0, 192], sizes = [8, 64], strides = [1, 1]} : vector<8x256xf32> to vector<8x64xf32>
    %178 = arith.negf %177 : vector<8x64xf32>
    %179 = math.exp %178 : vector<8x64xf32>
    %cst_54 = arith.constant 1.000000e+00 : f32
    %180 = vector.broadcast %cst_54 : f32 to vector<8x64xf32>
    %181 = arith.addf %180, %179 : vector<8x64xf32>
    %182 = arith.divf %180, %181 : vector<8x64xf32>
    %183 = arith.mulf %174, %144 : vector<8x64xf32>
    %184 = arith.mulf %168, %176 : vector<8x64xf32>
    %185 = arith.addf %183, %184 : vector<8x64xf32>
    %186 = math.tanh %185 : vector<8x64xf32>
    %187 = arith.mulf %182, %186 : vector<8x64xf32>
    %188 = arith.index_cast %152 : i32 to index
    %c0_55 = arith.constant 0 : index
    %189 = vector.load %arg13[%188, %c0_55] : memref<96x64xf32, #tpu.memory_space<vmem>>, vector<8x64xf32>
    tpu.vector_store %arg13[%188, %c0_55], %187 {strides = array<i32>} : memref<96x64xf32, #tpu.memory_space<vmem>>, vector<8x64xf32>,
    %190 = arith.index_cast %155 : i32 to index
    %c0_56 = arith.constant 0 : index
    %191 = vector.load %arg14[%190, %c0_56] : memref<96x64xf32, #tpu.memory_space<vmem>>, vector<8x64xf32>
    tpu.vector_store %arg14[%190, %c0_56], %187 {strides = array<i32>} : memref<96x64xf32, #tpu.memory_space<vmem>>, vector<8x64xf32>,
    %c4_i32 = arith.constant 4 : i32
    %c8_i32_57 = arith.constant 8 : i32
    %192 = arith.muli %c4_i32, %c8_i32_57 : i32
    %193 = tpu.assume_multiple %192, 8 : i32
    %c11_i32_58 = arith.constant 11 : i32
    %194 = arith.subi %c11_i32_58, %c4_i32 : i32
    %c8_i32_59 = arith.constant 8 : i32
    %195 = arith.muli %194, %c8_i32_59 : i32
    %196 = tpu.assume_multiple %195, 8 : i32
    %cst_60 = arith.constant dense<0.000000e+00> : vector<8x256xf32>
    %197 = tpu.matmul %187, %7, %cst_60 {dimension_numbers = #tpu.dot_dimension_numbers<[1], [0], [0], [1], [0, 0, 1, 1], [], []>} : vector<8x64xf32>, vector<64x256xf32>, vector<8x256xf32> -> vector<8x256xf32>
    %198 = arith.index_cast %193 : i32 to index
    %c0_61 = arith.constant 0 : index
    %199 = vector.load %arg12[%198, %c0_61] : memref<96x256xf32, #tpu.memory_space<vmem>>, vector<8x256xf32>
    %200 = arith.index_cast %196 : i32 to index
    %c0_62 = arith.constant 0 : index
    %201 = vector.load %arg12[%200, %c0_62] : memref<96x256xf32, #tpu.memory_space<vmem>>, vector<8x256xf32>
    %202 = arith.select %26, %199, %201 : vector<8x256xi1>, vector<8x256xf32>
    %203 = arith.addf %197, %202 : vector<8x256xf32>
    %204 = vector.extract_strided_slice %203 {offsets = [0, 0], sizes = [8, 64], strides = [1, 1]} : vector<8x256xf32> to vector<8x64xf32>
    %205 = arith.negf %204 : vector<8x64xf32>
    %206 = math.exp %205 : vector<8x64xf32>
    %cst_63 = arith.constant 1.000000e+00 : f32
    %207 = vector.broadcast %cst_63 : f32 to vector<8x64xf32>
    %208 = arith.addf %207, %206 : vector<8x64xf32>
    %209 = arith.divf %207, %208 : vector<8x64xf32>
    %210 = vector.extract_strided_slice %203 {offsets = [0, 64], sizes = [8, 64], strides = [1, 1]} : vector<8x256xf32> to vector<8x64xf32>
    %211 = arith.negf %210 : vector<8x64xf32>
    %212 = math.exp %211 : vector<8x64xf32>
    %cst_64 = arith.constant 1.000000e+00 : f32
    %213 = vector.broadcast %cst_64 : f32 to vector<8x64xf32>
    %214 = arith.addf %213, %212 : vector<8x64xf32>
    %215 = arith.divf %213, %214 : vector<8x64xf32>
    %216 = vector.extract_strided_slice %203 {offsets = [0, 128], sizes = [8, 64], strides = [1, 1]} : vector<8x256xf32> to vector<8x64xf32>
    %217 = math.tanh %216 : vector<8x64xf32>
    %218 = vector.extract_strided_slice %203 {offsets = [0, 192], sizes = [8, 64], strides = [1, 1]} : vector<8x256xf32> to vector<8x64xf32>
    %219 = arith.negf %218 : vector<8x64xf32>
    %220 = math.exp %219 : vector<8x64xf32>
    %cst_65 = arith.constant 1.000000e+00 : f32
    %221 = vector.broadcast %cst_65 : f32 to vector<8x64xf32>
    %222 = arith.addf %221, %220 : vector<8x64xf32>
    %223 = arith.divf %221, %222 : vector<8x64xf32>
    %224 = arith.mulf %215, %185 : vector<8x64xf32>
    %225 = arith.mulf %209, %217 : vector<8x64xf32>
    %226 = arith.addf %224, %225 : vector<8x64xf32>
    %227 = math.tanh %226 : vector<8x64xf32>
    %228 = arith.mulf %223, %227 : vector<8x64xf32>
    %229 = arith.index_cast %193 : i32 to index
    %c0_66 = arith.constant 0 : index
    %230 = vector.load %arg13[%229, %c0_66] : memref<96x64xf32, #tpu.memory_space<vmem>>, vector<8x64xf32>
    tpu.vector_store %arg13[%229, %c0_66], %228 {strides = array<i32>} : memref<96x64xf32, #tpu.memory_space<vmem>>, vector<8x64xf32>,
    %231 = arith.index_cast %196 : i32 to index
    %c0_67 = arith.constant 0 : index
    %232 = vector.load %arg14[%231, %c0_67] : memref<96x64xf32, #tpu.memory_space<vmem>>, vector<8x64xf32>
    tpu.vector_store %arg14[%231, %c0_67], %228 {strides = array<i32>} : memref<96x64xf32, #tpu.memory_space<vmem>>, vector<8x64xf32>,
    %c5_i32 = arith.constant 5 : i32
    %c8_i32_68 = arith.constant 8 : i32
    %233 = arith.muli %c5_i32, %c8_i32_68 : i32
    %234 = tpu.assume_multiple %233, 8 : i32
    %c11_i32_69 = arith.constant 11 : i32
    %235 = arith.subi %c11_i32_69, %c5_i32 : i32
    %c8_i32_70 = arith.constant 8 : i32
    %236 = arith.muli %235, %c8_i32_70 : i32
    %237 = tpu.assume_multiple %236, 8 : i32
    %cst_71 = arith.constant dense<0.000000e+00> : vector<8x256xf32>
    %238 = tpu.matmul %228, %7, %cst_71 {dimension_numbers = #tpu.dot_dimension_numbers<[1], [0], [0], [1], [0, 0, 1, 1], [], []>} : vector<8x64xf32>, vector<64x256xf32>, vector<8x256xf32> -> vector<8x256xf32>
    %239 = arith.index_cast %234 : i32 to index
    %c0_72 = arith.constant 0 : index
    %240 = vector.load %arg12[%239, %c0_72] : memref<96x256xf32, #tpu.memory_space<vmem>>, vector<8x256xf32>
    %241 = arith.index_cast %237 : i32 to index
    %c0_73 = arith.constant 0 : index
    %242 = vector.load %arg12[%241, %c0_73] : memref<96x256xf32, #tpu.memory_space<vmem>>, vector<8x256xf32>
    %243 = arith.select %26, %240, %242 : vector<8x256xi1>, vector<8x256xf32>
    %244 = arith.addf %238, %243 : vector<8x256xf32>
    %245 = vector.extract_strided_slice %244 {offsets = [0, 0], sizes = [8, 64], strides = [1, 1]} : vector<8x256xf32> to vector<8x64xf32>
    %246 = arith.negf %245 : vector<8x64xf32>
    %247 = math.exp %246 : vector<8x64xf32>
    %cst_74 = arith.constant 1.000000e+00 : f32
    %248 = vector.broadcast %cst_74 : f32 to vector<8x64xf32>
    %249 = arith.addf %248, %247 : vector<8x64xf32>
    %250 = arith.divf %248, %249 : vector<8x64xf32>
    %251 = vector.extract_strided_slice %244 {offsets = [0, 64], sizes = [8, 64], strides = [1, 1]} : vector<8x256xf32> to vector<8x64xf32>
    %252 = arith.negf %251 : vector<8x64xf32>
    %253 = math.exp %252 : vector<8x64xf32>
    %cst_75 = arith.constant 1.000000e+00 : f32
    %254 = vector.broadcast %cst_75 : f32 to vector<8x64xf32>
    %255 = arith.addf %254, %253 : vector<8x64xf32>
    %256 = arith.divf %254, %255 : vector<8x64xf32>
    %257 = vector.extract_strided_slice %244 {offsets = [0, 128], sizes = [8, 64], strides = [1, 1]} : vector<8x256xf32> to vector<8x64xf32>
    %258 = math.tanh %257 : vector<8x64xf32>
    %259 = vector.extract_strided_slice %244 {offsets = [0, 192], sizes = [8, 64], strides = [1, 1]} : vector<8x256xf32> to vector<8x64xf32>
    %260 = arith.negf %259 : vector<8x64xf32>
    %261 = math.exp %260 : vector<8x64xf32>
    %cst_76 = arith.constant 1.000000e+00 : f32
    %262 = vector.broadcast %cst_76 : f32 to vector<8x64xf32>
    %263 = arith.addf %262, %261 : vector<8x64xf32>
    %264 = arith.divf %262, %263 : vector<8x64xf32>
    %265 = arith.mulf %256, %226 : vector<8x64xf32>
    %266 = arith.mulf %250, %258 : vector<8x64xf32>
    %267 = arith.addf %265, %266 : vector<8x64xf32>
    %268 = math.tanh %267 : vector<8x64xf32>
    %269 = arith.mulf %264, %268 : vector<8x64xf32>
    %270 = arith.index_cast %234 : i32 to index
    %c0_77 = arith.constant 0 : index
    %271 = vector.load %arg13[%270, %c0_77] : memref<96x64xf32, #tpu.memory_space<vmem>>, vector<8x64xf32>
    tpu.vector_store %arg13[%270, %c0_77], %269 {strides = array<i32>} : memref<96x64xf32, #tpu.memory_space<vmem>>, vector<8x64xf32>,
    %272 = arith.index_cast %237 : i32 to index
    %c0_78 = arith.constant 0 : index
    %273 = vector.load %arg14[%272, %c0_78] : memref<96x64xf32, #tpu.memory_space<vmem>>, vector<8x64xf32>
    tpu.vector_store %arg14[%272, %c0_78], %269 {strides = array<i32>} : memref<96x64xf32, #tpu.memory_space<vmem>>, vector<8x64xf32>,
    %c6_i32 = arith.constant 6 : i32
    %c8_i32_79 = arith.constant 8 : i32
    %274 = arith.muli %c6_i32, %c8_i32_79 : i32
    %275 = tpu.assume_multiple %274, 8 : i32
    %c11_i32_80 = arith.constant 11 : i32
    %276 = arith.subi %c11_i32_80, %c6_i32 : i32
    %c8_i32_81 = arith.constant 8 : i32
    %277 = arith.muli %276, %c8_i32_81 : i32
    %278 = tpu.assume_multiple %277, 8 : i32
    %cst_82 = arith.constant dense<0.000000e+00> : vector<8x256xf32>
    %279 = tpu.matmul %269, %7, %cst_82 {dimension_numbers = #tpu.dot_dimension_numbers<[1], [0], [0], [1], [0, 0, 1, 1], [], []>} : vector<8x64xf32>, vector<64x256xf32>, vector<8x256xf32> -> vector<8x256xf32>
    %280 = arith.index_cast %275 : i32 to index
    %c0_83 = arith.constant 0 : index
    %281 = vector.load %arg12[%280, %c0_83] : memref<96x256xf32, #tpu.memory_space<vmem>>, vector<8x256xf32>
    %282 = arith.index_cast %278 : i32 to index
    %c0_84 = arith.constant 0 : index
    %283 = vector.load %arg12[%282, %c0_84] : memref<96x256xf32, #tpu.memory_space<vmem>>, vector<8x256xf32>
    %284 = arith.select %26, %281, %283 : vector<8x256xi1>, vector<8x256xf32>
    %285 = arith.addf %279, %284 : vector<8x256xf32>
    %286 = vector.extract_strided_slice %285 {offsets = [0, 0], sizes = [8, 64], strides = [1, 1]} : vector<8x256xf32> to vector<8x64xf32>
    %287 = arith.negf %286 : vector<8x64xf32>
    %288 = math.exp %287 : vector<8x64xf32>
    %cst_85 = arith.constant 1.000000e+00 : f32
    %289 = vector.broadcast %cst_85 : f32 to vector<8x64xf32>
    %290 = arith.addf %289, %288 : vector<8x64xf32>
    %291 = arith.divf %289, %290 : vector<8x64xf32>
    %292 = vector.extract_strided_slice %285 {offsets = [0, 64], sizes = [8, 64], strides = [1, 1]} : vector<8x256xf32> to vector<8x64xf32>
    %293 = arith.negf %292 : vector<8x64xf32>
    %294 = math.exp %293 : vector<8x64xf32>
    %cst_86 = arith.constant 1.000000e+00 : f32
    %295 = vector.broadcast %cst_86 : f32 to vector<8x64xf32>
    %296 = arith.addf %295, %294 : vector<8x64xf32>
    %297 = arith.divf %295, %296 : vector<8x64xf32>
    %298 = vector.extract_strided_slice %285 {offsets = [0, 128], sizes = [8, 64], strides = [1, 1]} : vector<8x256xf32> to vector<8x64xf32>
    %299 = math.tanh %298 : vector<8x64xf32>
    %300 = vector.extract_strided_slice %285 {offsets = [0, 192], sizes = [8, 64], strides = [1, 1]} : vector<8x256xf32> to vector<8x64xf32>
    %301 = arith.negf %300 : vector<8x64xf32>
    %302 = math.exp %301 : vector<8x64xf32>
    %cst_87 = arith.constant 1.000000e+00 : f32
    %303 = vector.broadcast %cst_87 : f32 to vector<8x64xf32>
    %304 = arith.addf %303, %302 : vector<8x64xf32>
    %305 = arith.divf %303, %304 : vector<8x64xf32>
    %306 = arith.mulf %297, %267 : vector<8x64xf32>
    %307 = arith.mulf %291, %299 : vector<8x64xf32>
    %308 = arith.addf %306, %307 : vector<8x64xf32>
    %309 = math.tanh %308 : vector<8x64xf32>
    %310 = arith.mulf %305, %309 : vector<8x64xf32>
    %311 = arith.index_cast %275 : i32 to index
    %c0_88 = arith.constant 0 : index
    %312 = vector.load %arg13[%311, %c0_88] : memref<96x64xf32, #tpu.memory_space<vmem>>, vector<8x64xf32>
    tpu.vector_store %arg13[%311, %c0_88], %310 {strides = array<i32>} : memref<96x64xf32, #tpu.memory_space<vmem>>, vector<8x64xf32>,
    %313 = arith.index_cast %278 : i32 to index
    %c0_89 = arith.constant 0 : index
    %314 = vector.load %arg14[%313, %c0_89] : memref<96x64xf32, #tpu.memory_space<vmem>>, vector<8x64xf32>
    tpu.vector_store %arg14[%313, %c0_89], %310 {strides = array<i32>} : memref<96x64xf32, #tpu.memory_space<vmem>>, vector<8x64xf32>,
    %c7_i32 = arith.constant 7 : i32
    %c8_i32_90 = arith.constant 8 : i32
    %315 = arith.muli %c7_i32, %c8_i32_90 : i32
    %316 = tpu.assume_multiple %315, 8 : i32
    %c11_i32_91 = arith.constant 11 : i32
    %317 = arith.subi %c11_i32_91, %c7_i32 : i32
    %c8_i32_92 = arith.constant 8 : i32
    %318 = arith.muli %317, %c8_i32_92 : i32
    %319 = tpu.assume_multiple %318, 8 : i32
    %cst_93 = arith.constant dense<0.000000e+00> : vector<8x256xf32>
    %320 = tpu.matmul %310, %7, %cst_93 {dimension_numbers = #tpu.dot_dimension_numbers<[1], [0], [0], [1], [0, 0, 1, 1], [], []>} : vector<8x64xf32>, vector<64x256xf32>, vector<8x256xf32> -> vector<8x256xf32>
    %321 = arith.index_cast %316 : i32 to index
    %c0_94 = arith.constant 0 : index
    %322 = vector.load %arg12[%321, %c0_94] : memref<96x256xf32, #tpu.memory_space<vmem>>, vector<8x256xf32>
    %323 = arith.index_cast %319 : i32 to index
    %c0_95 = arith.constant 0 : index
    %324 = vector.load %arg12[%323, %c0_95] : memref<96x256xf32, #tpu.memory_space<vmem>>, vector<8x256xf32>
    %325 = arith.select %26, %322, %324 : vector<8x256xi1>, vector<8x256xf32>
    %326 = arith.addf %320, %325 : vector<8x256xf32>
    %327 = vector.extract_strided_slice %326 {offsets = [0, 0], sizes = [8, 64], strides = [1, 1]} : vector<8x256xf32> to vector<8x64xf32>
    %328 = arith.negf %327 : vector<8x64xf32>
    %329 = math.exp %328 : vector<8x64xf32>
    %cst_96 = arith.constant 1.000000e+00 : f32
    %330 = vector.broadcast %cst_96 : f32 to vector<8x64xf32>
    %331 = arith.addf %330, %329 : vector<8x64xf32>
    %332 = arith.divf %330, %331 : vector<8x64xf32>
    %333 = vector.extract_strided_slice %326 {offsets = [0, 64], sizes = [8, 64], strides = [1, 1]} : vector<8x256xf32> to vector<8x64xf32>
    %334 = arith.negf %333 : vector<8x64xf32>
    %335 = math.exp %334 : vector<8x64xf32>
    %cst_97 = arith.constant 1.000000e+00 : f32
    %336 = vector.broadcast %cst_97 : f32 to vector<8x64xf32>
    %337 = arith.addf %336, %335 : vector<8x64xf32>
    %338 = arith.divf %336, %337 : vector<8x64xf32>
    %339 = vector.extract_strided_slice %326 {offsets = [0, 128], sizes = [8, 64], strides = [1, 1]} : vector<8x256xf32> to vector<8x64xf32>
    %340 = math.tanh %339 : vector<8x64xf32>
    %341 = vector.extract_strided_slice %326 {offsets = [0, 192], sizes = [8, 64], strides = [1, 1]} : vector<8x256xf32> to vector<8x64xf32>
    %342 = arith.negf %341 : vector<8x64xf32>
    %343 = math.exp %342 : vector<8x64xf32>
    %cst_98 = arith.constant 1.000000e+00 : f32
    %344 = vector.broadcast %cst_98 : f32 to vector<8x64xf32>
    %345 = arith.addf %344, %343 : vector<8x64xf32>
    %346 = arith.divf %344, %345 : vector<8x64xf32>
    %347 = arith.mulf %338, %308 : vector<8x64xf32>
    %348 = arith.mulf %332, %340 : vector<8x64xf32>
    %349 = arith.addf %347, %348 : vector<8x64xf32>
    %350 = math.tanh %349 : vector<8x64xf32>
    %351 = arith.mulf %346, %350 : vector<8x64xf32>
    %352 = arith.index_cast %316 : i32 to index
    %c0_99 = arith.constant 0 : index
    %353 = vector.load %arg13[%352, %c0_99] : memref<96x64xf32, #tpu.memory_space<vmem>>, vector<8x64xf32>
    tpu.vector_store %arg13[%352, %c0_99], %351 {strides = array<i32>} : memref<96x64xf32, #tpu.memory_space<vmem>>, vector<8x64xf32>,
    %354 = arith.index_cast %319 : i32 to index
    %c0_100 = arith.constant 0 : index
    %355 = vector.load %arg14[%354, %c0_100] : memref<96x64xf32, #tpu.memory_space<vmem>>, vector<8x64xf32>
    tpu.vector_store %arg14[%354, %c0_100], %351 {strides = array<i32>} : memref<96x64xf32, #tpu.memory_space<vmem>>, vector<8x64xf32>,
    %c8_i32_101 = arith.constant 8 : i32
    %c8_i32_102 = arith.constant 8 : i32
    %356 = arith.muli %c8_i32_101, %c8_i32_102 : i32
    %357 = tpu.assume_multiple %356, 8 : i32
    %c11_i32_103 = arith.constant 11 : i32
    %358 = arith.subi %c11_i32_103, %c8_i32_101 : i32
    %c8_i32_104 = arith.constant 8 : i32
    %359 = arith.muli %358, %c8_i32_104 : i32
    %360 = tpu.assume_multiple %359, 8 : i32
    %cst_105 = arith.constant dense<0.000000e+00> : vector<8x256xf32>
    %361 = tpu.matmul %351, %7, %cst_105 {dimension_numbers = #tpu.dot_dimension_numbers<[1], [0], [0], [1], [0, 0, 1, 1], [], []>} : vector<8x64xf32>, vector<64x256xf32>, vector<8x256xf32> -> vector<8x256xf32>
    %362 = arith.index_cast %357 : i32 to index
    %c0_106 = arith.constant 0 : index
    %363 = vector.load %arg12[%362, %c0_106] : memref<96x256xf32, #tpu.memory_space<vmem>>, vector<8x256xf32>
    %364 = arith.index_cast %360 : i32 to index
    %c0_107 = arith.constant 0 : index
    %365 = vector.load %arg12[%364, %c0_107] : memref<96x256xf32, #tpu.memory_space<vmem>>, vector<8x256xf32>
    %366 = arith.select %26, %363, %365 : vector<8x256xi1>, vector<8x256xf32>
    %367 = arith.addf %361, %366 : vector<8x256xf32>
    %368 = vector.extract_strided_slice %367 {offsets = [0, 0], sizes = [8, 64], strides = [1, 1]} : vector<8x256xf32> to vector<8x64xf32>
    %369 = arith.negf %368 : vector<8x64xf32>
    %370 = math.exp %369 : vector<8x64xf32>
    %cst_108 = arith.constant 1.000000e+00 : f32
    %371 = vector.broadcast %cst_108 : f32 to vector<8x64xf32>
    %372 = arith.addf %371, %370 : vector<8x64xf32>
    %373 = arith.divf %371, %372 : vector<8x64xf32>
    %374 = vector.extract_strided_slice %367 {offsets = [0, 64], sizes = [8, 64], strides = [1, 1]} : vector<8x256xf32> to vector<8x64xf32>
    %375 = arith.negf %374 : vector<8x64xf32>
    %376 = math.exp %375 : vector<8x64xf32>
    %cst_109 = arith.constant 1.000000e+00 : f32
    %377 = vector.broadcast %cst_109 : f32 to vector<8x64xf32>
    %378 = arith.addf %377, %376 : vector<8x64xf32>
    %379 = arith.divf %377, %378 : vector<8x64xf32>
    %380 = vector.extract_strided_slice %367 {offsets = [0, 128], sizes = [8, 64], strides = [1, 1]} : vector<8x256xf32> to vector<8x64xf32>
    %381 = math.tanh %380 : vector<8x64xf32>
    %382 = vector.extract_strided_slice %367 {offsets = [0, 192], sizes = [8, 64], strides = [1, 1]} : vector<8x256xf32> to vector<8x64xf32>
    %383 = arith.negf %382 : vector<8x64xf32>
    %384 = math.exp %383 : vector<8x64xf32>
    %cst_110 = arith.constant 1.000000e+00 : f32
    %385 = vector.broadcast %cst_110 : f32 to vector<8x64xf32>
    %386 = arith.addf %385, %384 : vector<8x64xf32>
    %387 = arith.divf %385, %386 : vector<8x64xf32>
    %388 = arith.mulf %379, %349 : vector<8x64xf32>
    %389 = arith.mulf %373, %381 : vector<8x64xf32>
    %390 = arith.addf %388, %389 : vector<8x64xf32>
    %391 = math.tanh %390 : vector<8x64xf32>
    %392 = arith.mulf %387, %391 : vector<8x64xf32>
    %393 = arith.index_cast %357 : i32 to index
    %c0_111 = arith.constant 0 : index
    %394 = vector.load %arg13[%393, %c0_111] : memref<96x64xf32, #tpu.memory_space<vmem>>, vector<8x64xf32>
    tpu.vector_store %arg13[%393, %c0_111], %392 {strides = array<i32>} : memref<96x64xf32, #tpu.memory_space<vmem>>, vector<8x64xf32>,
    %395 = arith.index_cast %360 : i32 to index
    %c0_112 = arith.constant 0 : index
    %396 = vector.load %arg14[%395, %c0_112] : memref<96x64xf32, #tpu.memory_space<vmem>>, vector<8x64xf32>
    tpu.vector_store %arg14[%395, %c0_112], %392 {strides = array<i32>} : memref<96x64xf32, #tpu.memory_space<vmem>>, vector<8x64xf32>,
    %c9_i32 = arith.constant 9 : i32
    %c8_i32_113 = arith.constant 8 : i32
    %397 = arith.muli %c9_i32, %c8_i32_113 : i32
    %398 = tpu.assume_multiple %397, 8 : i32
    %c11_i32_114 = arith.constant 11 : i32
    %399 = arith.subi %c11_i32_114, %c9_i32 : i32
    %c8_i32_115 = arith.constant 8 : i32
    %400 = arith.muli %399, %c8_i32_115 : i32
    %401 = tpu.assume_multiple %400, 8 : i32
    %cst_116 = arith.constant dense<0.000000e+00> : vector<8x256xf32>
    %402 = tpu.matmul %392, %7, %cst_116 {dimension_numbers = #tpu.dot_dimension_numbers<[1], [0], [0], [1], [0, 0, 1, 1], [], []>} : vector<8x64xf32>, vector<64x256xf32>, vector<8x256xf32> -> vector<8x256xf32>
    %403 = arith.index_cast %398 : i32 to index
    %c0_117 = arith.constant 0 : index
    %404 = vector.load %arg12[%403, %c0_117] : memref<96x256xf32, #tpu.memory_space<vmem>>, vector<8x256xf32>
    %405 = arith.index_cast %401 : i32 to index
    %c0_118 = arith.constant 0 : index
    %406 = vector.load %arg12[%405, %c0_118] : memref<96x256xf32, #tpu.memory_space<vmem>>, vector<8x256xf32>
    %407 = arith.select %26, %404, %406 : vector<8x256xi1>, vector<8x256xf32>
    %408 = arith.addf %402, %407 : vector<8x256xf32>
    %409 = vector.extract_strided_slice %408 {offsets = [0, 0], sizes = [8, 64], strides = [1, 1]} : vector<8x256xf32> to vector<8x64xf32>
    %410 = arith.negf %409 : vector<8x64xf32>
    %411 = math.exp %410 : vector<8x64xf32>
    %cst_119 = arith.constant 1.000000e+00 : f32
    %412 = vector.broadcast %cst_119 : f32 to vector<8x64xf32>
    %413 = arith.addf %412, %411 : vector<8x64xf32>
    %414 = arith.divf %412, %413 : vector<8x64xf32>
    %415 = vector.extract_strided_slice %408 {offsets = [0, 64], sizes = [8, 64], strides = [1, 1]} : vector<8x256xf32> to vector<8x64xf32>
    %416 = arith.negf %415 : vector<8x64xf32>
    %417 = math.exp %416 : vector<8x64xf32>
    %cst_120 = arith.constant 1.000000e+00 : f32
    %418 = vector.broadcast %cst_120 : f32 to vector<8x64xf32>
    %419 = arith.addf %418, %417 : vector<8x64xf32>
    %420 = arith.divf %418, %419 : vector<8x64xf32>
    %421 = vector.extract_strided_slice %408 {offsets = [0, 128], sizes = [8, 64], strides = [1, 1]} : vector<8x256xf32> to vector<8x64xf32>
    %422 = math.tanh %421 : vector<8x64xf32>
    %423 = vector.extract_strided_slice %408 {offsets = [0, 192], sizes = [8, 64], strides = [1, 1]} : vector<8x256xf32> to vector<8x64xf32>
    %424 = arith.negf %423 : vector<8x64xf32>
    %425 = math.exp %424 : vector<8x64xf32>
    %cst_121 = arith.constant 1.000000e+00 : f32
    %426 = vector.broadcast %cst_121 : f32 to vector<8x64xf32>
    %427 = arith.addf %426, %425 : vector<8x64xf32>
    %428 = arith.divf %426, %427 : vector<8x64xf32>
    %429 = arith.mulf %420, %390 : vector<8x64xf32>
    %430 = arith.mulf %414, %422 : vector<8x64xf32>
    %431 = arith.addf %429, %430 : vector<8x64xf32>
    %432 = math.tanh %431 : vector<8x64xf32>
    %433 = arith.mulf %428, %432 : vector<8x64xf32>
    %434 = arith.index_cast %398 : i32 to index
    %c0_122 = arith.constant 0 : index
    %435 = vector.load %arg13[%434, %c0_122] : memref<96x64xf32, #tpu.memory_space<vmem>>, vector<8x64xf32>
    tpu.vector_store %arg13[%434, %c0_122], %433 {strides = array<i32>} : memref<96x64xf32, #tpu.memory_space<vmem>>, vector<8x64xf32>,
    %436 = arith.index_cast %401 : i32 to index
    %c0_123 = arith.constant 0 : index
    %437 = vector.load %arg14[%436, %c0_123] : memref<96x64xf32, #tpu.memory_space<vmem>>, vector<8x64xf32>
    tpu.vector_store %arg14[%436, %c0_123], %433 {strides = array<i32>} : memref<96x64xf32, #tpu.memory_space<vmem>>, vector<8x64xf32>,
    %c10_i32 = arith.constant 10 : i32
    %c8_i32_124 = arith.constant 8 : i32
    %438 = arith.muli %c10_i32, %c8_i32_124 : i32
    %439 = tpu.assume_multiple %438, 8 : i32
    %c11_i32_125 = arith.constant 11 : i32
    %440 = arith.subi %c11_i32_125, %c10_i32 : i32
    %c8_i32_126 = arith.constant 8 : i32
    %441 = arith.muli %440, %c8_i32_126 : i32
    %442 = tpu.assume_multiple %441, 8 : i32
    %cst_127 = arith.constant dense<0.000000e+00> : vector<8x256xf32>
    %443 = tpu.matmul %433, %7, %cst_127 {dimension_numbers = #tpu.dot_dimension_numbers<[1], [0], [0], [1], [0, 0, 1, 1], [], []>} : vector<8x64xf32>, vector<64x256xf32>, vector<8x256xf32> -> vector<8x256xf32>
    %444 = arith.index_cast %439 : i32 to index
    %c0_128 = arith.constant 0 : index
    %445 = vector.load %arg12[%444, %c0_128] : memref<96x256xf32, #tpu.memory_space<vmem>>, vector<8x256xf32>
    %446 = arith.index_cast %442 : i32 to index
    %c0_129 = arith.constant 0 : index
    %447 = vector.load %arg12[%446, %c0_129] : memref<96x256xf32, #tpu.memory_space<vmem>>, vector<8x256xf32>
    %448 = arith.select %26, %445, %447 : vector<8x256xi1>, vector<8x256xf32>
    %449 = arith.addf %443, %448 : vector<8x256xf32>
    %450 = vector.extract_strided_slice %449 {offsets = [0, 0], sizes = [8, 64], strides = [1, 1]} : vector<8x256xf32> to vector<8x64xf32>
    %451 = arith.negf %450 : vector<8x64xf32>
    %452 = math.exp %451 : vector<8x64xf32>
    %cst_130 = arith.constant 1.000000e+00 : f32
    %453 = vector.broadcast %cst_130 : f32 to vector<8x64xf32>
    %454 = arith.addf %453, %452 : vector<8x64xf32>
    %455 = arith.divf %453, %454 : vector<8x64xf32>
    %456 = vector.extract_strided_slice %449 {offsets = [0, 64], sizes = [8, 64], strides = [1, 1]} : vector<8x256xf32> to vector<8x64xf32>
    %457 = arith.negf %456 : vector<8x64xf32>
    %458 = math.exp %457 : vector<8x64xf32>
    %cst_131 = arith.constant 1.000000e+00 : f32
    %459 = vector.broadcast %cst_131 : f32 to vector<8x64xf32>
    %460 = arith.addf %459, %458 : vector<8x64xf32>
    %461 = arith.divf %459, %460 : vector<8x64xf32>
    %462 = vector.extract_strided_slice %449 {offsets = [0, 128], sizes = [8, 64], strides = [1, 1]} : vector<8x256xf32> to vector<8x64xf32>
    %463 = math.tanh %462 : vector<8x64xf32>
    %464 = vector.extract_strided_slice %449 {offsets = [0, 192], sizes = [8, 64], strides = [1, 1]} : vector<8x256xf32> to vector<8x64xf32>
    %465 = arith.negf %464 : vector<8x64xf32>
    %466 = math.exp %465 : vector<8x64xf32>
    %cst_132 = arith.constant 1.000000e+00 : f32
    %467 = vector.broadcast %cst_132 : f32 to vector<8x64xf32>
    %468 = arith.addf %467, %466 : vector<8x64xf32>
    %469 = arith.divf %467, %468 : vector<8x64xf32>
    %470 = arith.mulf %461, %431 : vector<8x64xf32>
    %471 = arith.mulf %455, %463 : vector<8x64xf32>
    %472 = arith.addf %470, %471 : vector<8x64xf32>
    %473 = math.tanh %472 : vector<8x64xf32>
    %474 = arith.mulf %469, %473 : vector<8x64xf32>
    %475 = arith.index_cast %439 : i32 to index
    %c0_133 = arith.constant 0 : index
    %476 = vector.load %arg13[%475, %c0_133] : memref<96x64xf32, #tpu.memory_space<vmem>>, vector<8x64xf32>
    tpu.vector_store %arg13[%475, %c0_133], %474 {strides = array<i32>} : memref<96x64xf32, #tpu.memory_space<vmem>>, vector<8x64xf32>,
    %477 = arith.index_cast %442 : i32 to index
    %c0_134 = arith.constant 0 : index
    %478 = vector.load %arg14[%477, %c0_134] : memref<96x64xf32, #tpu.memory_space<vmem>>, vector<8x64xf32>
    tpu.vector_store %arg14[%477, %c0_134], %474 {strides = array<i32>} : memref<96x64xf32, #tpu.memory_space<vmem>>, vector<8x64xf32>,
    %c11_i32_135 = arith.constant 11 : i32
    %c8_i32_136 = arith.constant 8 : i32
    %479 = arith.muli %c11_i32_135, %c8_i32_136 : i32
    %480 = tpu.assume_multiple %479, 8 : i32
    %c11_i32_137 = arith.constant 11 : i32
    %481 = arith.subi %c11_i32_137, %c11_i32_135 : i32
    %c8_i32_138 = arith.constant 8 : i32
    %482 = arith.muli %481, %c8_i32_138 : i32
    %483 = tpu.assume_multiple %482, 8 : i32
    %cst_139 = arith.constant dense<0.000000e+00> : vector<8x256xf32>
    %484 = tpu.matmul %474, %7, %cst_139 {dimension_numbers = #tpu.dot_dimension_numbers<[1], [0], [0], [1], [0, 0, 1, 1], [], []>} : vector<8x64xf32>, vector<64x256xf32>, vector<8x256xf32> -> vector<8x256xf32>
    %485 = arith.index_cast %480 : i32 to index
    %c0_140 = arith.constant 0 : index
    %486 = vector.load %arg12[%485, %c0_140] : memref<96x256xf32, #tpu.memory_space<vmem>>, vector<8x256xf32>
    %487 = arith.index_cast %483 : i32 to index
    %c0_141 = arith.constant 0 : index
    %488 = vector.load %arg12[%487, %c0_141] : memref<96x256xf32, #tpu.memory_space<vmem>>, vector<8x256xf32>
    %489 = arith.select %26, %486, %488 : vector<8x256xi1>, vector<8x256xf32>
    %490 = arith.addf %484, %489 : vector<8x256xf32>
    %491 = vector.extract_strided_slice %490 {offsets = [0, 0], sizes = [8, 64], strides = [1, 1]} : vector<8x256xf32> to vector<8x64xf32>
    %492 = arith.negf %491 : vector<8x64xf32>
    %493 = math.exp %492 : vector<8x64xf32>
    %cst_142 = arith.constant 1.000000e+00 : f32
    %494 = vector.broadcast %cst_142 : f32 to vector<8x64xf32>
    %495 = arith.addf %494, %493 : vector<8x64xf32>
    %496 = arith.divf %494, %495 : vector<8x64xf32>
    %497 = vector.extract_strided_slice %490 {offsets = [0, 64], sizes = [8, 64], strides = [1, 1]} : vector<8x256xf32> to vector<8x64xf32>
    %498 = arith.negf %497 : vector<8x64xf32>
    %499 = math.exp %498 : vector<8x64xf32>
    %cst_143 = arith.constant 1.000000e+00 : f32
    %500 = vector.broadcast %cst_143 : f32 to vector<8x64xf32>
    %501 = arith.addf %500, %499 : vector<8x64xf32>
    %502 = arith.divf %500, %501 : vector<8x64xf32>
    %503 = vector.extract_strided_slice %490 {offsets = [0, 128], sizes = [8, 64], strides = [1, 1]} : vector<8x256xf32> to vector<8x64xf32>
    %504 = math.tanh %503 : vector<8x64xf32>
    %505 = vector.extract_strided_slice %490 {offsets = [0, 192], sizes = [8, 64], strides = [1, 1]} : vector<8x256xf32> to vector<8x64xf32>
    %506 = arith.negf %505 : vector<8x64xf32>
    %507 = math.exp %506 : vector<8x64xf32>
    %cst_144 = arith.constant 1.000000e+00 : f32
    %508 = vector.broadcast %cst_144 : f32 to vector<8x64xf32>
    %509 = arith.addf %508, %507 : vector<8x64xf32>
    %510 = arith.divf %508, %509 : vector<8x64xf32>
    %511 = arith.mulf %502, %472 : vector<8x64xf32>
    %512 = arith.mulf %496, %504 : vector<8x64xf32>
    %513 = arith.addf %511, %512 : vector<8x64xf32>
    %514 = math.tanh %513 : vector<8x64xf32>
    %515 = arith.mulf %510, %514 : vector<8x64xf32>
    %516 = arith.index_cast %480 : i32 to index
    %c0_145 = arith.constant 0 : index
    %517 = vector.load %arg13[%516, %c0_145] : memref<96x64xf32, #tpu.memory_space<vmem>>, vector<8x64xf32>
    tpu.vector_store %arg13[%516, %c0_145], %515 {strides = array<i32>} : memref<96x64xf32, #tpu.memory_space<vmem>>, vector<8x64xf32>,
    %518 = arith.index_cast %483 : i32 to index
    %c0_146 = arith.constant 0 : index
    %519 = vector.load %arg14[%518, %c0_146] : memref<96x64xf32, #tpu.memory_space<vmem>>, vector<8x64xf32>
    tpu.vector_store %arg14[%518, %c0_146], %515 {strides = array<i32>} : memref<96x64xf32, #tpu.memory_space<vmem>>, vector<8x64xf32>,
    %c12_i32 = arith.constant 12 : i32
    %c0_147 = arith.constant 0 : index
    %c0_148 = arith.constant 0 : index
    %520 = vector.load %arg13[%c0_147, %c0_148] : memref<96x64xf32, #tpu.memory_space<vmem>>, vector<96x64xf32>
    %c0_149 = arith.constant 0 : index
    %c0_150 = arith.constant 0 : index
    %521 = vector.load %arg5[%c0_149, %c0_150] : memref<64x128xf32, #tpu.memory_space<vmem>>, vector<64x128xf32>
    %cst_151 = arith.constant dense<0.000000e+00> : vector<96x128xf32>
    %522 = tpu.matmul %520, %521, %cst_151 {dimension_numbers = #tpu.dot_dimension_numbers<[1], [0], [0], [1], [0, 0, 1, 1], [], []>} : vector<96x64xf32>, vector<64x128xf32>, vector<96x128xf32> -> vector<96x128xf32>
    %c0_152 = arith.constant 0 : index
    %c0_153 = arith.constant 0 : index
    %523 = vector.load %arg14[%c0_152, %c0_153] : memref<96x64xf32, #tpu.memory_space<vmem>>, vector<96x64xf32>
    %c0_154 = arith.constant 0 : index
    %c0_155 = arith.constant 0 : index
    %524 = vector.load %arg6[%c0_154, %c0_155] : memref<64x128xf32, #tpu.memory_space<vmem>>, vector<64x128xf32>
    %cst_156 = arith.constant dense<0.000000e+00> : vector<96x128xf32>
    %525 = tpu.matmul %523, %524, %cst_156 {dimension_numbers = #tpu.dot_dimension_numbers<[1], [0], [0], [1], [0, 0, 1, 1], [], []>} : vector<96x64xf32>, vector<64x128xf32>, vector<96x128xf32> -> vector<96x128xf32>
    %526 = arith.addf %522, %525 : vector<96x128xf32>
    %c0_157 = arith.constant 0 : index
    %c0_158 = arith.constant 0 : index
    %527 = vector.load %arg7[%c0_157, %c0_158] : memref<1x128xf32, #tpu.memory_space<vmem>>, vector<1x128xf32>
    %528 = vector.broadcast %527 : vector<1x128xf32> to vector<96x128xf32>
    %529 = arith.addf %526, %528 : vector<96x128xf32>
    %cst_159 = arith.constant 5.000000e+00 : f32
    %530 = vector.broadcast %cst_159 : f32 to vector<96x128xf32>
    %531 = arith.subf %529, %530 : vector<96x128xf32>
    %cst_160 = arith.constant 0.000000e+00 : f32
    %532 = vector.broadcast %cst_160 : f32 to vector<96x128xf32>
    %533 = arith.maximumf %531, %532 : vector<96x128xf32>
    %534 = vector.broadcast %cst_160 : f32 to vector<96x128xf32>
    %535 = arith.subf %531, %534 : vector<96x128xf32>
    %536 = arith.cmpf one, %535, %535 : vector<96x128xf32>
    %537 = vector.broadcast %cst_160 : f32 to vector<96x128xf32>
    %538 = arith.addf %531, %537 : vector<96x128xf32>
    %539 = math.absf %535 : vector<96x128xf32>
    %cst_161 = arith.constant 0.000000e+00 : f32
    %540 = vector.broadcast %cst_161 : f32 to vector<96x128xf32>
    %541 = arith.subf %540, %539 : vector<96x128xf32>
    %542 = math.exp %541 : vector<96x128xf32>
    %543 = math.log1p %542 : vector<96x128xf32>
    %544 = arith.addf %533, %543 : vector<96x128xf32>
    %545 = arith.select %536, %538, %544 : vector<96x128xi1>, vector<96x128xf32>
    %546 = tpu.iota {dimensions = array<i32: 1>} : vector<96x128xi32>
    %c64_i32_162 = arith.constant 64 : i32
    %547 = vector.broadcast %c64_i32_162 : i32 to vector<96x128xi32>
    %548 = arith.cmpi slt, %546, %547 : vector<96x128xi32>
    %549 = arith.select %548, %529, %545 : vector<96x128xi1>, vector<96x128xf32>
    %c0_163 = arith.constant 0 : index
    %c0_164 = arith.constant 0 : index
    %550 = vector.load %arg10[%c0_163, %c0_164] : memref<96x128xf32, #tpu.memory_space<vmem>>, vector<96x128xf32>
    tpu.vector_store %arg10[%c0_163, %c0_164], %549 {strides = array<i32>} : memref<96x128xf32, #tpu.memory_space<vmem>>, vector<96x128xf32>,
    %551 = vector.extract_strided_slice %529 {offsets = [0, 0], sizes = [96, 64], strides = [1, 1]} : vector<96x128xf32> to vector<96x64xf32>
    %552 = vector.extract_strided_slice %545 {offsets = [0, 64], sizes = [96, 64], strides = [1, 1]} : vector<96x128xf32> to vector<96x64xf32>
    %c0_165 = arith.constant 0 : index
    %c0_166 = arith.constant 0 : index
    %553 = vector.load %arg1[%c0_165, %c0_166] : memref<96x64xf32, #tpu.memory_space<vmem>>, vector<96x64xf32>
    %554 = arith.mulf %553, %552 : vector<96x64xf32>
    %555 = arith.addf %551, %554 : vector<96x64xf32>
    %c0_167 = arith.constant 0 : index
    %c0_168 = arith.constant 0 : index
    %556 = vector.load %arg8[%c0_167, %c0_168] : memref<64x16xf32, #tpu.memory_space<vmem>>, vector<64x16xf32>
    %cst_169 = arith.constant dense<0.000000e+00> : vector<96x16xf32>
    %557 = tpu.matmul %555, %556, %cst_169 {dimension_numbers = #tpu.dot_dimension_numbers<[1], [0], [0], [1], [0, 0, 1, 1], [], []>} : vector<96x64xf32>, vector<64x16xf32>, vector<96x16xf32> -> vector<96x16xf32>
    %c0_170 = arith.constant 0 : index
    %c0_171 = arith.constant 0 : index
    %558 = vector.load %arg9[%c0_170, %c0_171] : memref<1x16xf32, #tpu.memory_space<vmem>>, vector<1x16xf32>
    %559 = vector.broadcast %558 : vector<1x16xf32> to vector<96x16xf32>
    %560 = arith.addf %557, %559 : vector<96x16xf32>
    %c0_172 = arith.constant 0 : index
    %c0_173 = arith.constant 0 : index
    %561 = vector.load %arg11[%c0_172, %c0_173] : memref<96x16xf32, #tpu.memory_space<vmem>>, vector<96x16xf32>
    tpu.vector_store %arg11[%c0_172, %c0_173], %560 {strides = array<i32>} : memref<96x16xf32, #tpu.memory_space<vmem>>, vector<96x16xf32>,
    return
  }
}

</mosaic_0001>

<llo_original>
// kernel: tpu_custom_call.1
$region0: #{tpu_custom_call.1}
  #allocation0 [shape = 'u32[]', space=smem, size = 0x4, offset = 0x4, fixed_abs, tag = 'smem constant byte address 0x4 - core index']
  #allocation1 [shape = 'u32[144,128]{1,0:T(1,128)}', space=vmem, size = 0x12000, scoped, tag = 'internal scratch']
  #allocation2 [shape = 'f32[96,256]{1,0:T(8,128)}', space=vmem, size = 0x18000, scoped, tag = 'scratch operand']
  #allocation3 [shape = 'f32[96,64]{1,0:T(8,128)}', space=vmem, size = 0xc000, scoped, tag = 'scratch operand']
  #allocation4 [shape = 'f32[96,64]{1,0:T(8,128)}', space=vmem, size = 0xc000, scoped, tag = 'scratch operand']
  %s0 = inlined_call_operand.vmem [shape: f32[96,16], index: 0, kind: input, shape index: {}]
  %s1 = inlined_call_operand.vmem [shape: f32[96,64], index: 1, kind: input, shape index: {}]
  %s2 = inlined_call_operand.vmem [shape: f32[16,256], index: 2, kind: input, shape index: {}]
  %s3 = inlined_call_operand.vmem [shape: f32[1,256], index: 3, kind: input, shape index: {}]
  %s4 = inlined_call_operand.vmem [shape: f32[64,256], index: 4, kind: input, shape index: {}]
  %s5 = inlined_call_operand.vmem [shape: f32[64,128], index: 5, kind: input, shape index: {}]
  %s6 = inlined_call_operand.vmem [shape: f32[64,128], index: 6, kind: input, shape index: {}]
  %s7 = inlined_call_operand.vmem [shape: f32[1,128], index: 7, kind: input, shape index: {}]
  %s8 = inlined_call_operand.vmem [shape: f32[64,16], index: 8, kind: input, shape index: {}]
  %s9 = inlined_call_operand.vmem [shape: f32[1,16], index: 9, kind: input, shape index: {}]
  %s10 = inlined_call_operand.hbm [shape: f32[96,128], index: 10, kind: output, shape index: {0}]
  %s11 = inlined_call_operand.vmem [shape: f32[96,16], index: 11, kind: output, shape index: {1}]
  %12 = xla_tuple %s10, %s11
  %s13 = sld [smem:[#allocation0]]
  $region58: #{tpu_custom_call.1} parent=0
    _
  %s15 = ssub.s32 1, %s13
  %s16 = scalar_select 0, %s15, %s13
  $region1: #{tpu_custom_call.1} parent=0
    #allocation5 [shape = 'u8[49152]{0}', space=vmem, size = 0xc000, scoped, tag = 'output window, operand 0, single buffered']
    #allocation6 [shape = 's32[1]{0}', space=sflag, size = 0x4, scoped, tag = 'scoped memory for tpu_custom_call.1']
    %17 = vsyncpa [#allocation6], 0
    // Predicated region
    $region2: #{tpu_custom_call.1} parent=1 // pred_check
      _
    $region3: #{tpu_custom_call.1} parent=1 // pred_check_branch
      %19 = sbr.rel (0) target = $region5
    $region4: #{tpu_custom_call.1} parent=1 // pred_region
      _
    $region5: #{tpu_custom_call.1} parent=1 // pred_fallthru
      _
    // Predicated region
    $region6: #{tpu_custom_call.1} parent=1 // pred_check
      _
    $region7: #{tpu_custom_call.1} parent=1 // pred_check_branch
      %21 = sbr.rel (0) target = $region9
    $region8: #{tpu_custom_call.1} parent=1 // pred_region
      _
    $region9: #{tpu_custom_call.1} parent=1 // pred_fallthru
      _
    // Predicated region
    $region10: #{tpu_custom_call.1} parent=1 // pred_check
      _
    $region11: #{tpu_custom_call.1} parent=1 // pred_check_branch
      %23 = sbr.rel (0) target = $region13
    $region12: #{tpu_custom_call.1} parent=1 // pred_region
      _
    $region13: #{tpu_custom_call.1} parent=1 // pred_fallthru
      _
    // Predicated region
    $region14: #{tpu_custom_call.1} parent=1 // pred_check
      _
    $region15: #{tpu_custom_call.1} parent=1 // pred_check_branch
      %25 = sbr.rel (0) target = $region17
    $region16: #{tpu_custom_call.1} parent=1 // pred_region
      _
    $region17: #{tpu_custom_call.1} parent=1 // pred_fallthru
      _
    // Predicated region
    $region18: #{tpu_custom_call.1} parent=1 // pred_check
      _
    $region19: #{tpu_custom_call.1} parent=1 // pred_check_branch
      %27 = sbr.rel (0) target = $region21
    $region20: #{tpu_custom_call.1} parent=1 // pred_region
      _
    $region21: #{tpu_custom_call.1} parent=1 // pred_fallthru
      _
    // Predicated region
    $region22: #{tpu_custom_call.1} parent=1 // pred_check
      _
    $region23: #{tpu_custom_call.1} parent=1 // pred_check_branch
      %29 = sbr.rel (0) target = $region25
    $region24: #{tpu_custom_call.1} parent=1 // pred_region
      _
    $region25: #{tpu_custom_call.1} parent=1 // pred_fallthru
      _
    // Predicated region
    $region26: #{tpu_custom_call.1} parent=1 // pred_check
      _
    $region27: #{tpu_custom_call.1} parent=1 // pred_check_branch
      %31 = sbr.rel (0) target = $region29
    $region28: #{tpu_custom_call.1} parent=1 // pred_region
      _
    $region29: #{tpu_custom_call.1} parent=1 // pred_fallthru
      _
    // Predicated region
    $region30: #{tpu_custom_call.1} parent=1 // pred_check
      _
    $region31: #{tpu_custom_call.1} parent=1 // pred_check_branch
      %33 = sbr.rel (0) target = $region33
    $region32: #{tpu_custom_call.1} parent=1 // pred_region
      _
    $region33: #{tpu_custom_call.1} parent=1 // pred_fallthru
      _
    // Predicated region
    $region34: #{tpu_custom_call.1} parent=1 // pred_check
      _
    $region35: #{tpu_custom_call.1} parent=1 // pred_check_branch
      %35 = sbr.rel (0) target = $region37
    $region36: #{tpu_custom_call.1} parent=1 // pred_region
      _
    $region37: #{tpu_custom_call.1} parent=1 // pred_fallthru
      _
    // Predicated region
    $region38: #{tpu_custom_call.1} parent=1 // pred_check
      _
    $region39: #{tpu_custom_call.1} parent=1 // pred_check_branch
      %37 = sbr.rel (0) target = $region41
    $region40: #{tpu_custom_call.1} parent=1 // pred_region
      _
    $region41: #{tpu_custom_call.1} parent=1 // pred_fallthru
      _
    %v38 = vld [vmem:[%s0] sm:$0xff]
    %v39 = vld [vmem:[%s0 + $0x8] sm:$0xff]
    %v40 = vld [vmem:[%s0 + $0x10] sm:$0xff]
    %v41 = vld [vmem:[%s0 + $0x18] sm:$0xff]
    %v42 = vld [vmem:[%s0 + $0x20] sm:$0xff]
    %v43 = vld [vmem:[%s0 + $0x28] sm:$0xff]
    %v44 = vld [vmem:[%s0 + $0x30] sm:$0xff]
    %v45 = vld [vmem:[%s0 + $0x38] sm:$0xff]
    %v46 = vld [vmem:[%s0 + $0x40] sm:$0xff]
    %v47 = vld [vmem:[%s0 + $0x48] sm:$0xff]
    %v48 = vld [vmem:[%s0 + $0x50] sm:$0xff]
    %v49 = vld [vmem:[%s0 + $0x58] sm:$0xff]
    %v50 = vld [vmem:[%s2] sm:$0xff]
    %v51 = vld [vmem:[%s2 + $0x8] sm:$0xff]
    %v52 = vld [vmem:[%s2 + $0x10] sm:$0xff]
    %v53 = vld [vmem:[%s2 + $0x18] sm:$0xff]
    %v54 = vld [vmem:[%s3] sm:$0x3]
    %v56 = vlaneseq
    %v57 = vshrl.u32 %v56, 7
    %v58 = vsub.s32 0, %v57
    %v59 = vrot.slane %v54, %v58
    %v60 = vlaneseq
    %v61 = vshrl.u32 %v60, 7
    %v62 = vsub.s32 1, %v61
    %v63 = vrot.slane %v54, %v62
    %vm66 = vcmask 130048
    %v68 = vsel %vm66, %v38, 0
    %v71 = vsel %vm66, %v39, 0
    %v74 = vsel %vm66, %v40, 0
    %v77 = vsel %vm66, %v41, 0
    %v80 = vsel %vm66, %v42, 0
    %v83 = vsel %vm66, %v43, 0
    %v86 = vsel %vm66, %v44, 0
    %v89 = vsel %vm66, %v45, 0
    %v92 = vsel %vm66, %v46, 0
    %v95 = vsel %vm66, %v47, 0
    %v98 = vsel %vm66, %v48, 0
    %v101 = vsel %vm66, %v49, 0
    %103 = vmatprep.subr.mxu0 0.0
    %104 = vmatpush1.msra.mxu0 0.0
    %105 = vmatprep.subr.mxu0 0.0
    %106 = vmatpush1.msra.mxu0 0.0
    %107 = vmatprep.subr.mxu0 0.0
    %108 = vmatpush1.msra.mxu0 0.0
    %109 = vmatprep.subr.mxu0 0.0
    %110 = vmatpush1.msra.mxu0 0.0
    %111 = vmatprep.subr.mxu0 0.0
    %112 = vmatpush1.msra.mxu0 0.0
    %113 = vmatprep.subr.mxu0 0.0
    %114 = vmatpush1.msra.mxu0 0.0
    %115 = vmatprep.subr.mxu0 0.0
    %116 = vmatpush1.msra.mxu0 0.0
    %117 = vmatprep.subr.mxu0 0.0
    %118 = vmatpush1.msra.mxu0 0.0
    %119 = vmatprep.subr.mxu0 0.0
    %120 = vmatpush1.msra.mxu0 0.0
    %121 = vmatprep.subr.mxu0 0.0
    %122 = vmatpush1.msra.mxu0 0.0
    %123 = vmatprep.subr.mxu0 0.0
    %124 = vmatpush1.msra.mxu0 0.0
    %125 = vmatprep.subr.mxu0 0.0
    %126 = vmatpush1.msra.mxu0 0.0
    %127 = vmatprep.subr.mxu0 0.0
    %128 = vmatpush1.msra.mxu0 0.0
    %129 = vmatprep.subr.mxu0 0.0
    %130 = vmatpush1.msra.mxu0 0.0
    %131 = vmatprep.subr.mxu0 %v53
    %132 = vmatpush1.msra.mxu0 %v52
    %133 = vmatprep.subr.mxu0 %v51
    %134 = vmatpush1.msra.mxu0 %v50
    %135 = vmatprep.subr.mxu0 0.0
    %136 = vmatpush2.msra.mxu0 0.0
    %137 = vmatprep.subr.mxu0 0.0
    %138 = vmatpush2.msra.mxu0 0.0
    %139 = vmatprep.subr.mxu0 0.0
    %140 = vmatpush2.msra.mxu0 0.0
    %141 = vmatprep.subr.mxu0 0.0
    %142 = vmatpush2.msra.mxu0 0.0
    %143 = vmatprep.subr.mxu0 0.0
    %144 = vmatpush2.msra.mxu0 0.0
    %145 = vmatprep.subr.mxu0 0.0
    %146 = vmatpush2.msra.mxu0 0.0
    %147 = vmatprep.subr.mxu0 0.0
    %148 = vmatpush2.msra.mxu0 0.0
    %149 = vmatprep.subr.mxu0 0.0
    %150 = vmatpush2.msra.mxu0 0.0
    %151 = vmatprep.subr.mxu0 0.0
    %152 = vmatpush2.msra.mxu0 0.0
    %153 = vmatprep.subr.mxu0 0.0
    %154 = vmatpush2.msra.mxu0 0.0
    %155 = vmatprep.subr.mxu0 0.0
    %156 = vmatpush2.msra.mxu0 0.0
    %157 = vmatprep.subr.mxu0 0.0
    %158 = vmatpush2.msra.mxu0 0.0
    %159 = vmatprep.subr.mxu0 0.0
    %160 = vmatpush2.msra.mxu0 0.0
    %161 = vmatprep.subr.mxu0 0.0
    %162 = vmatpush2.msra.mxu0 0.0
    %163 = vmatprep.subr.mxu0 0.0
    %164 = vmatpush2.msra.mxu0 0.0
    %165 = vmatprep.subr.mxu0 0.0
    %166 = vmatpush2.msra.mxu0 0.0
    %167 = vmatprep.mubr.f32.mxu0 0.0
    %168 = vmatmul.mubr.f32.gmra.mxu0 %v68
    %v169 = vpop.f32.mrf.mxu0
    %v170 = vadd.f32 %v59, %v169
    %v171 = vpop.f32.mrf.mxu0
    %v172 = vadd.f32 %v63, %v171
    %173 = vmatprep.mubr.f32.mxu0 0.0
    %174 = vmatmul.mubr.f32.gmra.mxu0 %v71
    %v175 = vpop.f32.mrf.mxu0
    %v176 = vadd.f32 %v59, %v175
    %v177 = vpop.f32.mrf.mxu0
    %v178 = vadd.f32 %v63, %v177
    %179 = vmatprep.mubr.f32.mxu0 0.0
    %180 = vmatmul.mubr.f32.gmra.mxu0 %v74
    %v181 = vpop.f32.mrf.mxu0
    %v182 = vadd.f32 %v59, %v181
    %v183 = vpop.f32.mrf.mxu0
    %v184 = vadd.f32 %v63, %v183
    %185 = vmatprep.mubr.f32.mxu0 0.0
    %186 = vmatmul.mubr.f32.gmra.mxu0 %v77
    %v187 = vpop.f32.mrf.mxu0
    %v188 = vadd.f32 %v59, %v187
    %v189 = vpop.f32.mrf.mxu0
    %v190 = vadd.f32 %v63, %v189
    %191 = vmatprep.mubr.f32.mxu0 0.0
    %192 = vmatmul.mubr.f32.gmra.mxu0 %v80
    %v193 = vpop.f32.mrf.mxu0
    %v194 = vadd.f32 %v59, %v193
    %v195 = vpop.f32.mrf.mxu0
    %v196 = vadd.f32 %v63, %v195
    %197 = vmatprep.mubr.f32.mxu0 0.0
    %198 = vmatmul.mubr.f32.gmra.mxu0 %v83
    %v199 = vpop.f32.mrf.mxu0
    %v200 = vadd.f32 %v59, %v199
    %v201 = vpop.f32.mrf.mxu0
    %v202 = vadd.f32 %v63, %v201
    %203 = vmatprep.mubr.f32.mxu0 0.0
    %204 = vmatmul.mubr.f32.gmra.mxu0 %v86
    %v205 = vpop.f32.mrf.mxu0
    %v206 = vadd.f32 %v59, %v205
    %v207 = vpop.f32.mrf.mxu0
    %v208 = vadd.f32 %v63, %v207
    %209 = vmatprep.mubr.f32.mxu0 0.0
    %210 = vmatmul.mubr.f32.gmra.mxu0 %v89
    %v211 = vpop.f32.mrf.mxu0
    %v212 = vadd.f32 %v59, %v211
    %v213 = vpop.f32.mrf.mxu0
    %v214 = vadd.f32 %v63, %v213
    %215 = vmatprep.mubr.f32.mxu0 0.0
    %216 = vmatmul.mubr.f32.gmra.mxu0 %v92
    %v217 = vpop.f32.mrf.mxu0
    %v218 = vadd.f32 %v59, %v217
    %v219 = vpop.f32.mrf.mxu0
    %v220 = vadd.f32 %v63, %v219
    %221 = vmatprep.mubr.f32.mxu0 0.0
    %222 = vmatmul.mubr.f32.gmra.mxu0 %v95
    %v223 = vpop.f32.mrf.mxu0
    %v224 = vadd.f32 %v59, %v223
    %v225 = vpop.f32.mrf.mxu0
    %v226 = vadd.f32 %v63, %v225
    %227 = vmatprep.mubr.f32.mxu0 0.0
    %228 = vmatmul.mubr.f32.gmra.mxu0 %v98
    %v229 = vpop.f32.mrf.mxu0
    %v230 = vadd.f32 %v59, %v229
    %v231 = vpop.f32.mrf.mxu0
    %v232 = vadd.f32 %v63, %v231
    %233 = vmatprep.mubr.f32.mxu0 0.0
    %234 = vmatmul.mubr.f32.gmra.mxu0 %v101
    %v235 = vpop.f32.mrf.mxu0
    %v236 = vadd.f32 %v59, %v235
    %v237 = vpop.f32.mrf.mxu0
    %v238 = vadd.f32 %v63, %v237
    %239 = vdwg.mxu0
    %240 = vst [vmem:[#allocation2] sm:$0xff] %v170
    %241 = vst [vmem:[#allocation2 + $0x8] sm:$0xff] %v172
    %242 = vst [vmem:[#allocation2 + $0x10] sm:$0xff] %v176
    %243 = vst [vmem:[#allocation2 + $0x18] sm:$0xff] %v178
    %244 = vst [vmem:[#allocation2 + $0x20] sm:$0xff] %v182
    %245 = vst [vmem:[#allocation2 + $0x28] sm:$0xff] %v184
    %246 = vst [vmem:[#allocation2 + $0x30] sm:$0xff] %v188
    %247 = vst [vmem:[#allocation2 + $0x38] sm:$0xff] %v190
    %248 = vst [vmem:[#allocation2 + $0x40] sm:$0xff] %v194
    %249 = vst [vmem:[#allocation2 + $0x48] sm:$0xff] %v196
    %250 = vst [vmem:[#allocation2 + $0x50] sm:$0xff] %v200
    %251 = vst [vmem:[#allocation2 + $0x58] sm:$0xff] %v202
    %252 = vst [vmem:[#allocation2 + $0x60] sm:$0xff] %v206
    %253 = vst [vmem:[#allocation2 + $0x68] sm:$0xff] %v208
    %254 = vst [vmem:[#allocation2 + $0x70] sm:$0xff] %v212
    %255 = vst [vmem:[#allocation2 + $0x78] sm:$0xff] %v214
    %256 = vst [vmem:[#allocation2 + $0x80] sm:$0xff] %v218
    %257 = vst [vmem:[#allocation2 + $0x88] sm:$0xff] %v220
    %258 = vst [vmem:[#allocation2 + $0x90] sm:$0xff] %v224
    %259 = vst [vmem:[#allocation2 + $0x98] sm:$0xff] %v226
    %260 = vst [vmem:[#allocation2 + $0xa0] sm:$0xff] %v230
    %261 = vst [vmem:[#allocation2 + $0xa8] sm:$0xff] %v232
    %262 = vst [vmem:[#allocation2 + $0xb0] sm:$0xff] %v236
    %263 = vst [vmem:[#allocation2 + $0xb8] sm:$0xff] %v238
    %v264 = vld [vmem:[%s4] sm:$0xff]
    %v265 = vld [vmem:[%s4 + $0x8] sm:$0xff]
    %v266 = vld [vmem:[%s4 + $0x10] sm:$0xff]
    %v267 = vld [vmem:[%s4 + $0x18] sm:$0xff]
    %v268 = vld [vmem:[%s4 + $0x20] sm:$0xff]
    %v269 = vld [vmem:[%s4 + $0x28] sm:$0xff]
    %v270 = vld [vmem:[%s4 + $0x30] sm:$0xff]
    %v271 = vld [vmem:[%s4 + $0x38] sm:$0xff]
    %v272 = vld [vmem:[%s4 + $0x40] sm:$0xff]
    %v273 = vld [vmem:[%s4 + $0x48] sm:$0xff]
    %v274 = vld [vmem:[%s4 + $0x50] sm:$0xff]
    %v275 = vld [vmem:[%s4 + $0x58] sm:$0xff]
    %v276 = vld [vmem:[%s4 + $0x60] sm:$0xff]
    %v277 = vld [vmem:[%s4 + $0x68] sm:$0xff]
    %v278 = vld [vmem:[%s4 + $0x70] sm:$0xff]
    %v279 = vld [vmem:[%s4 + $0x78] sm:$0xff]
    %v280 = vlaneseq
    %v281 = vand.u32 %v280, 127
    %v282 = vadd.s32 %v281, 128
    %vm283 = vcmp.lt.s32.totalorder %v281, 0
    %v284 = vsub.s32 0, %v281
    %v285 = vsel %vm283, %v284, %v281
    %v286 = vshrl.u32 %v285, 6
    %v287 = vand.u32 %v285, 63
    %v288 = vsub.s32 0, %v287
    %v289 = vsel %vm283, %v288, %v287
    %vm290 = vcmp.lt.s32.totalorder %v282, 0
    %v291 = vsub.s32 0, %v282
    %v292 = vsel %vm290, %v291, %v282
    %v293 = vshrl.u32 %v292, 6
    %v294 = vand.u32 %v292, 63
    %v295 = vsub.s32 0, %v294
    %v296 = vsel %vm290, %v295, %v294
    %vm297 = vcmp.ne.s32.totalorder %v289, 0
    %vm298 = vcmp.ne.s32.totalorder %v296, 0
    %vm299 = vcmp.lt.s32.totalorder %v289, 0
    %vm300 = vcmp.lt.s32.totalorder %v296, 0
    %vm301 = vmand %vm299, %vm297
    %vm302 = vmand %vm300, %vm298
    %v303 = vadd.s32 %v289, 64
    %v304 = vadd.s32 %v296, 64
    %v305 = vsel %vm301, %v303, %v289
    %v306 = vsel %vm302, %v304, %v296
    %vm307 = vcmp.lt.s32.totalorder %v305, 32
    %vm308 = vcmp.lt.s32.totalorder %v306, 32
    %s309 = smul.u32 0, 2
    %s310 = smul.addr %s309, 8
    %s311 = scalar_lea.vmem [#allocation2], %s310
    %v312 = vld [vmem:[%s311] sm:$0xff]
    %v313 = vld [vmem:[%s311 + $0x8] sm:$0xff]
    %s314 = smul.u32 11, 2
    %s315 = smul.addr %s314, 8
    %s316 = scalar_lea.vmem [#allocation2], %s315
    %v317 = vld [vmem:[%s316] sm:$0xff]
    %v318 = vld [vmem:[%s316 + $0x8] sm:$0xff]
    %v319 = vsel %vm307, %v312, %v317
    %v320 = vsel %vm308, %v313, %v318
    %vm321 = vcmask 523264
    %v323 = vsel %vm321, 0.0, 0
    %325 = vmatprep.subr.mxu0 0.0
    %326 = vmatpush1.msra.mxu0 0.0
    %327 = vmatprep.subr.mxu0 0.0
    %328 = vmatpush1.msra.mxu0 0.0
    %329 = vmatprep.subr.mxu0 0.0
    %330 = vmatpush1.msra.mxu0 0.0
    %331 = vmatprep.subr.mxu0 0.0
    %332 = vmatpush1.msra.mxu0 0.0
    %333 = vmatprep.subr.mxu0 0.0
    %334 = vmatpush1.msra.mxu0 0.0
    %335 = vmatprep.subr.mxu0 0.0
    %336 = vmatpush1.msra.mxu0 0.0
    %337 = vmatprep.subr.mxu0 0.0
    %338 = vmatpush1.msra.mxu0 0.0
    %339 = vmatprep.subr.mxu0 0.0
    %340 = vmatpush1.msra.mxu0 0.0
    %341 = vmatprep.subr.mxu0 %v279
    %342 = vmatpush1.msra.mxu0 %v278
    %343 = vmatprep.subr.mxu0 %v277
    %344 = vmatpush1.msra.mxu0 %v276
    %345 = vmatprep.subr.mxu0 %v275
    %346 = vmatpush1.msra.mxu0 %v274
    %347 = vmatprep.subr.mxu0 %v273
    %348 = vmatpush1.msra.mxu0 %v272
    %349 = vmatprep.subr.mxu0 %v271
    %350 = vmatpush1.msra.mxu0 %v270
    %351 = vmatprep.subr.mxu0 %v269
    %352 = vmatpush1.msra.mxu0 %v268
    %353 = vmatprep.subr.mxu0 %v267
    %354 = vmatpush1.msra.mxu0 %v266
    %355 = vmatprep.subr.mxu0 %v265
    %356 = vmatpush1.msra.mxu0 %v264
    %357 = vmatprep.subr.mxu0 0.0
    %358 = vmatpush2.msra.mxu0 0.0
    %359 = vmatprep.subr.mxu0 0.0
    %360 = vmatpush2.msra.mxu0 0.0
    %361 = vmatprep.subr.mxu0 0.0
    %362 = vmatpush2.msra.mxu0 0.0
    %363 = vmatprep.subr.mxu0 0.0
    %364 = vmatpush2.msra.mxu0 0.0
    %365 = vmatprep.subr.mxu0 0.0
    %366 = vmatpush2.msra.mxu0 0.0
    %367 = vmatprep.subr.mxu0 0.0
    %368 = vmatpush2.msra.mxu0 0.0
    %369 = vmatprep.subr.mxu0 0.0
    %370 = vmatpush2.msra.mxu0 0.0
    %371 = vmatprep.subr.mxu0 0.0
    %372 = vmatpush2.msra.mxu0 0.0
    %373 = vmatprep.subr.mxu0 0.0
    %374 = vmatpush2.msra.mxu0 0.0
    %375 = vmatprep.subr.mxu0 0.0
    %376 = vmatpush2.msra.mxu0 0.0
    %377 = vmatprep.subr.mxu0 0.0
    %378 = vmatpush2.msra.mxu0 0.0
    %379 = vmatprep.subr.mxu0 0.0
    %380 = vmatpush2.msra.mxu0 0.0
    %381 = vmatprep.subr.mxu0 0.0
    %382 = vmatpush2.msra.mxu0 0.0
    %383 = vmatprep.subr.mxu0 0.0
    %384 = vmatpush2.msra.mxu0 0.0
    %385 = vmatprep.subr.mxu0 0.0
    %386 = vmatpush2.msra.mxu0 0.0
    %387 = vmatprep.subr.mxu0 0.0
    %388 = vmatpush2.msra.mxu0 0.0
    %389 = vmatprep.mubr.f32.mxu0 0.0
    %390 = vmatmul.mubr.f32.gmra.mxu0 %v323
    %v391 = vpop.f32.mrf.mxu0
    %v392 = vadd.f32 %v319, %v391
    %v393 = vpop.f32.mrf.mxu0
    %v394 = vadd.f32 %v320, %v393
    %395 = vdwg.mxu0
    %v396 = vxor.u32 %v392, 2147483648
    %v397 = vmul.f32 %v396, 1.442695
    %v398 = vpow.pop %v397
    %v399 = vadd.f32 %v398, 1.0
    %v400 = vrcp.pop %v399
    %v401 = vmul.f32 1.0, %v400
    %v402 = vtanh.pop %v394
    %v403 = vxor.u32 %v394, 2147483648
    %v404 = vmul.f32 %v403, 1.442695
    %v405 = vpow.pop %v404
    %v406 = vadd.f32 %v405, 1.0
    %v407 = vrcp.pop %v406
    %v408 = vmul.f32 1.0, %v407
    %v409 = vmul.f32 %v401, 0.0
    %v410 = vmul.f32 %v401, %v402
    %412 = vrot.lane.b32.xlu0 %v410, 64
    %v413 = vpop.permute.xlu0 %412
    %v415 = vadd.f32 %v409, %v413
    %v416 = vtanh.pop %v415
    %v417 = vmul.f32 %v408, %v416
    %419 = vrot.lane.b32.xlu0 %v417, 64
    %v420 = vpop.permute.xlu0 %419
    %422 = vst.msk [vmem:[#allocation3] sm:$0xff] %vm321, %v420
    %s423 = scalar_lea.vmem [#allocation4], 88
    %424 = vst.msk [vmem:[%s423] sm:$0xff] %vm321, %v420
    %s425 = smul.u32 1, 2
    %s426 = smul.addr %s425, 8
    %s427 = scalar_lea.vmem [#allocation2], %s426
    %v428 = vld [vmem:[%s427] sm:$0xff]
    %v429 = vld [vmem:[%s427 + $0x8] sm:$0xff]
    %s430 = smul.u32 10, 2
    %s431 = smul.addr %s430, 8
    %s432 = scalar_lea.vmem [#allocation2], %s431
    %v433 = vld [vmem:[%s432] sm:$0xff]
    %v434 = vld [vmem:[%s432 + $0x8] sm:$0xff]
    %v435 = vsel %vm307, %v428, %v433
    %v436 = vsel %vm308, %v429, %v434
    %v437 = vsel %vm321, %v420, 0
    %439 = vmatprep.subr.mxu0 0.0
    %440 = vmatpush1.msra.mxu0 0.0
    %441 = vmatprep.subr.mxu0 0.0
    %442 = vmatpush1.msra.mxu0 0.0
    %443 = vmatprep.subr.mxu0 0.0
    %444 = vmatpush1.msra.mxu0 0.0
    %445 = vmatprep.subr.mxu0 0.0
    %446 = vmatpush1.msra.mxu0 0.0
    %447 = vmatprep.subr.mxu0 0.0
    %448 = vmatpush1.msra.mxu0 0.0
    %449 = vmatprep.subr.mxu0 0.0
    %450 = vmatpush1.msra.mxu0 0.0
    %451 = vmatprep.subr.mxu0 0.0
    %452 = vmatpush1.msra.mxu0 0.0
    %453 = vmatprep.subr.mxu0 0.0
    %454 = vmatpush1.msra.mxu0 0.0
    %455 = vmatprep.subr.mxu0 %v279
    %456 = vmatpush1.msra.mxu0 %v278
    %457 = vmatprep.subr.mxu0 %v277
    %458 = vmatpush1.msra.mxu0 %v276
    %459 = vmatprep.subr.mxu0 %v275
    %460 = vmatpush1.msra.mxu0 %v274
    %461 = vmatprep.subr.mxu0 %v273
    %462 = vmatpush1.msra.mxu0 %v272
    %463 = vmatprep.subr.mxu0 %v271
    %464 = vmatpush1.msra.mxu0 %v270
    %465 = vmatprep.subr.mxu0 %v269
    %466 = vmatpush1.msra.mxu0 %v268
    %467 = vmatprep.subr.mxu0 %v267
    %468 = vmatpush1.msra.mxu0 %v266
    %469 = vmatprep.subr.mxu0 %v265
    %470 = vmatpush1.msra.mxu0 %v264
    %471 = vmatprep.subr.mxu0 0.0
    %472 = vmatpush2.msra.mxu0 0.0
    %473 = vmatprep.subr.mxu0 0.0
    %474 = vmatpush2.msra.mxu0 0.0
    %475 = vmatprep.subr.mxu0 0.0
    %476 = vmatpush2.msra.mxu0 0.0
    %477 = vmatprep.subr.mxu0 0.0
    %478 = vmatpush2.msra.mxu0 0.0
    %479 = vmatprep.subr.mxu0 0.0
    %480 = vmatpush2.msra.mxu0 0.0
    %481 = vmatprep.subr.mxu0 0.0
    %482 = vmatpush2.msra.mxu0 0.0
    %483 = vmatprep.subr.mxu0 0.0
    %484 = vmatpush2.msra.mxu0 0.0
    %485 = vmatprep.subr.mxu0 0.0
    %486 = vmatpush2.msra.mxu0 0.0
    %487 = vmatprep.subr.mxu0 0.0
    %488 = vmatpush2.msra.mxu0 0.0
    %489 = vmatprep.subr.mxu0 0.0
    %490 = vmatpush2.msra.mxu0 0.0
    %491 = vmatprep.subr.mxu0 0.0
    %492 = vmatpush2.msra.mxu0 0.0
    %493 = vmatprep.subr.mxu0 0.0
    %494 = vmatpush2.msra.mxu0 0.0
    %495 = vmatprep.subr.mxu0 0.0
    %496 = vmatpush2.msra.mxu0 0.0
    %497 = vmatprep.subr.mxu0 0.0
    %498 = vmatpush2.msra.mxu0 0.0
    %499 = vmatprep.subr.mxu0 0.0
    %500 = vmatpush2.msra.mxu0 0.0
    %501 = vmatprep.subr.mxu0 0.0
    %502 = vmatpush2.msra.mxu0 0.0
    %503 = vmatprep.mubr.f32.mxu0 0.0
    %504 = vmatmul.mubr.f32.gmra.mxu0 %v437
    %v505 = vpop.f32.mrf.mxu0
    %v506 = vadd.f32 %v435, %v505
    %v507 = vpop.f32.mrf.mxu0
    %v508 = vadd.f32 %v436, %v507
    %509 = vdwg.mxu0
    %v510 = vxor.u32 %v506, 2147483648
    %v511 = vmul.f32 %v510, 1.442695
    %v512 = vpow.pop %v511
    %v513 = vadd.f32 %v512, 1.0
    %v514 = vrcp.pop %v513
    %v515 = vmul.f32 1.0, %v514
    %v516 = vtanh.pop %v508
    %v517 = vxor.u32 %v508, 2147483648
    %v518 = vmul.f32 %v517, 1.442695
    %v519 = vpow.pop %v518
    %v520 = vadd.f32 %v519, 1.0
    %v521 = vrcp.pop %v520
    %v522 = vmul.f32 1.0, %v521
    %v523 = vmul.f32 %v515, %v415
    %v524 = vmul.f32 %v515, %v516
    %526 = vrot.lane.b32.xlu0 %v524, 64
    %v527 = vpop.permute.xlu0 %526
    %v529 = vadd.f32 %v523, %v527
    %v530 = vtanh.pop %v529
    %v531 = vmul.f32 %v522, %v530
    %533 = vrot.lane.b32.xlu0 %v531, 64
    %v534 = vpop.permute.xlu0 %533
    %s536 = scalar_lea.vmem [#allocation3], 8
    %537 = vst.msk [vmem:[%s536] sm:$0xff] %vm321, %v534
    %s538 = scalar_lea.vmem [#allocation4], 80
    %539 = vst.msk [vmem:[%s538] sm:$0xff] %vm321, %v534
    %s540 = smul.u32 2, 2
    %s541 = smul.addr %s540, 8
    %s542 = scalar_lea.vmem [#allocation2], %s541
    %v543 = vld [vmem:[%s542] sm:$0xff]
    %v544 = vld [vmem:[%s542 + $0x8] sm:$0xff]
    %s545 = smul.u32 9, 2
    %s546 = smul.addr %s545, 8
    %s547 = scalar_lea.vmem [#allocation2], %s546
    %v548 = vld [vmem:[%s547] sm:$0xff]
    %v549 = vld [vmem:[%s547 + $0x8] sm:$0xff]
    %v550 = vsel %vm307, %v543, %v548
    %v551 = vsel %vm308, %v544, %v549
    %v552 = vsel %vm321, %v534, 0
    %554 = vmatprep.subr.mxu0 0.0
    %555 = vmatpush1.msra.mxu0 0.0
    %556 = vmatprep.subr.mxu0 0.0
    %557 = vmatpush1.msra.mxu0 0.0
    %558 = vmatprep.subr.mxu0 0.0
    %559 = vmatpush1.msra.mxu0 0.0
    %560 = vmatprep.subr.mxu0 0.0
    %561 = vmatpush1.msra.mxu0 0.0
    %562 = vmatprep.subr.mxu0 0.0
    %563 = vmatpush1.msra.mxu0 0.0
    %564 = vmatprep.subr.mxu0 0.0
    %565 = vmatpush1.msra.mxu0 0.0
    %566 = vmatprep.subr.mxu0 0.0
    %567 = vmatpush1.msra.mxu0 0.0
    %568 = vmatprep.subr.mxu0 0.0
    %569 = vmatpush1.msra.mxu0 0.0
    %570 = vmatprep.subr.mxu0 %v279
    %571 = vmatpush1.msra.mxu0 %v278
    %572 = vmatprep.subr.mxu0 %v277
    %573 = vmatpush1.msra.mxu0 %v276
    %574 = vmatprep.subr.mxu0 %v275
    %575 = vmatpush1.msra.mxu0 %v274
    %576 = vmatprep.subr.mxu0 %v273
    %577 = vmatpush1.msra.mxu0 %v272
    %578 = vmatprep.subr.mxu0 %v271
    %579 = vmatpush1.msra.mxu0 %v270
    %580 = vmatprep.subr.mxu0 %v269
    %581 = vmatpush1.msra.mxu0 %v268
    %582 = vmatprep.subr.mxu0 %v267
    %583 = vmatpush1.msra.mxu0 %v266
    %584 = vmatprep.subr.mxu0 %v265
    %585 = vmatpush1.msra.mxu0 %v264
    %586 = vmatprep.subr.mxu0 0.0
    %587 = vmatpush2.msra.mxu0 0.0
    %588 = vmatprep.subr.mxu0 0.0
    %589 = vmatpush2.msra.mxu0 0.0
    %590 = vmatprep.subr.mxu0 0.0
    %591 = vmatpush2.msra.mxu0 0.0
    %592 = vmatprep.subr.mxu0 0.0
    %593 = vmatpush2.msra.mxu0 0.0
    %594 = vmatprep.subr.mxu0 0.0
    %595 = vmatpush2.msra.mxu0 0.0
    %596 = vmatprep.subr.mxu0 0.0
    %597 = vmatpush2.msra.mxu0 0.0
    %598 = vmatprep.subr.mxu0 0.0
    %599 = vmatpush2.msra.mxu0 0.0
    %600 = vmatprep.subr.mxu0 0.0
    %601 = vmatpush2.msra.mxu0 0.0
    %602 = vmatprep.subr.mxu0 0.0
    %603 = vmatpush2.msra.mxu0 0.0
    %604 = vmatprep.subr.mxu0 0.0
    %605 = vmatpush2.msra.mxu0 0.0
    %606 = vmatprep.subr.mxu0 0.0
    %607 = vmatpush2.msra.mxu0 0.0
    %608 = vmatprep.subr.mxu0 0.0
    %609 = vmatpush2.msra.mxu0 0.0
    %610 = vmatprep.subr.mxu0 0.0
    %611 = vmatpush2.msra.mxu0 0.0
    %612 = vmatprep.subr.mxu0 0.0
    %613 = vmatpush2.msra.mxu0 0.0
    %614 = vmatprep.subr.mxu0 0.0
    %615 = vmatpush2.msra.mxu0 0.0
    %616 = vmatprep.subr.mxu0 0.0
    %617 = vmatpush2.msra.mxu0 0.0
    %618 = vmatprep.mubr.f32.mxu0 0.0
    %619 = vmatmul.mubr.f32.gmra.mxu0 %v552
    %v620 = vpop.f32.mrf.mxu0
    %v621 = vadd.f32 %v550, %v620
    %v622 = vpop.f32.mrf.mxu0
    %v623 = vadd.f32 %v551, %v622
    %624 = vdwg.mxu0
    %v625 = vxor.u32 %v621, 2147483648
    %v626 = vmul.f32 %v625, 1.442695
    %v627 = vpow.pop %v626
    %v628 = vadd.f32 %v627, 1.0
    %v629 = vrcp.pop %v628
    %v630 = vmul.f32 1.0, %v629
    %v631 = vtanh.pop %v623
    %v632 = vxor.u32 %v623, 2147483648
    %v633 = vmul.f32 %v632, 1.442695
    %v634 = vpow.pop %v633
    %v635 = vadd.f32 %v634, 1.0
    %v636 = vrcp.pop %v635
    %v637 = vmul.f32 1.0, %v636
    %v638 = vmul.f32 %v630, %v529
    %v639 = vmul.f32 %v630, %v631
    %641 = vrot.lane.b32.xlu0 %v639, 64
    %v642 = vpop.permute.xlu0 %641
    %v644 = vadd.f32 %v638, %v642
    %v645 = vtanh.pop %v644
    %v646 = vmul.f32 %v637, %v645
    %648 = vrot.lane.b32.xlu0 %v646, 64
    %v649 = vpop.permute.xlu0 %648
    %s651 = scalar_lea.vmem [#allocation3], 16
    %652 = vst.msk [vmem:[%s651] sm:$0xff] %vm321, %v649
    %s653 = scalar_lea.vmem [#allocation4], 72
    %654 = vst.msk [vmem:[%s653] sm:$0xff] %vm321, %v649
    %s655 = smul.u32 3, 2
    %s656 = smul.addr %s655, 8
    %s657 = scalar_lea.vmem [#allocation2], %s656
    %v658 = vld [vmem:[%s657] sm:$0xff]
    %v659 = vld [vmem:[%s657 + $0x8] sm:$0xff]
    %s660 = smul.u32 8, 2
    %s661 = smul.addr %s660, 8
    %s662 = scalar_lea.vmem [#allocation2], %s661
    %v663 = vld [vmem:[%s662] sm:$0xff]
    %v664 = vld [vmem:[%s662 + $0x8] sm:$0xff]
    %v665 = vsel %vm307, %v658, %v663
    %v666 = vsel %vm308, %v659, %v664
    %v667 = vsel %vm321, %v649, 0
    %669 = vmatprep.subr.mxu0 0.0
    %670 = vmatpush1.msra.mxu0 0.0
    %671 = vmatprep.subr.mxu0 0.0
    %672 = vmatpush1.msra.mxu0 0.0
    %673 = vmatprep.subr.mxu0 0.0
    %674 = vmatpush1.msra.mxu0 0.0
    %675 = vmatprep.subr.mxu0 0.0
    %676 = vmatpush1.msra.mxu0 0.0
    %677 = vmatprep.subr.mxu0 0.0
    %678 = vmatpush1.msra.mxu0 0.0
    %679 = vmatprep.subr.mxu0 0.0
    %680 = vmatpush1.msra.mxu0 0.0
    %681 = vmatprep.subr.mxu0 0.0
    %682 = vmatpush1.msra.mxu0 0.0
    %683 = vmatprep.subr.mxu0 0.0
    %684 = vmatpush1.msra.mxu0 0.0
    %685 = vmatprep.subr.mxu0 %v279
    %686 = vmatpush1.msra.mxu0 %v278
    %687 = vmatprep.subr.mxu0 %v277
    %688 = vmatpush1.msra.mxu0 %v276
    %689 = vmatprep.subr.mxu0 %v275
    %690 = vmatpush1.msra.mxu0 %v274
    %691 = vmatprep.subr.mxu0 %v273
    %692 = vmatpush1.msra.mxu0 %v272
    %693 = vmatprep.subr.mxu0 %v271
    %694 = vmatpush1.msra.mxu0 %v270
    %695 = vmatprep.subr.mxu0 %v269
    %696 = vmatpush1.msra.mxu0 %v268
    %697 = vmatprep.subr.mxu0 %v267
    %698 = vmatpush1.msra.mxu0 %v266
    %699 = vmatprep.subr.mxu0 %v265
    %700 = vmatpush1.msra.mxu0 %v264
    %701 = vmatprep.subr.mxu0 0.0
    %702 = vmatpush2.msra.mxu0 0.0
    %703 = vmatprep.subr.mxu0 0.0
    %704 = vmatpush2.msra.mxu0 0.0
    %705 = vmatprep.subr.mxu0 0.0
    %706 = vmatpush2.msra.mxu0 0.0
    %707 = vmatprep.subr.mxu0 0.0
    %708 = vmatpush2.msra.mxu0 0.0
    %709 = vmatprep.subr.mxu0 0.0
    %710 = vmatpush2.msra.mxu0 0.0
    %711 = vmatprep.subr.mxu0 0.0
    %712 = vmatpush2.msra.mxu0 0.0
    %713 = vmatprep.subr.mxu0 0.0
    %714 = vmatpush2.msra.mxu0 0.0
    %715 = vmatprep.subr.mxu0 0.0
    %716 = vmatpush2.msra.mxu0 0.0
    %717 = vmatprep.subr.mxu0 0.0
    %718 = vmatpush2.msra.mxu0 0.0
    %719 = vmatprep.subr.mxu0 0.0
    %720 = vmatpush2.msra.mxu0 0.0
    %721 = vmatprep.subr.mxu0 0.0
    %722 = vmatpush2.msra.mxu0 0.0
    %723 = vmatprep.subr.mxu0 0.0
    %724 = vmatpush2.msra.mxu0 0.0
    %725 = vmatprep.subr.mxu0 0.0
    %726 = vmatpush2.msra.mxu0 0.0
    %727 = vmatprep.subr.mxu0 0.0
    %728 = vmatpush2.msra.mxu0 0.0
    %729 = vmatprep.subr.mxu0 0.0
    %730 = vmatpush2.msra.mxu0 0.0
    %731 = vmatprep.subr.mxu0 0.0
    %732 = vmatpush2.msra.mxu0 0.0
    %733 = vmatprep.mubr.f32.mxu0 0.0
    %734 = vmatmul.mubr.f32.gmra.mxu0 %v667
    %v735 = vpop.f32.mrf.mxu0
    %v736 = vadd.f32 %v665, %v735
    %v737 = vpop.f32.mrf.mxu0
    %v738 = vadd.f32 %v666, %v737
    %739 = vdwg.mxu0
    %v740 = vxor.u32 %v736, 2147483648
    %v741 = vmul.f32 %v740, 1.442695
    %v742 = vpow.pop %v741
    %v743 = vadd.f32 %v742, 1.0
    %v744 = vrcp.pop %v743
    %v745 = vmul.f32 1.0, %v744
    %v746 = vtanh.pop %v738
    %v747 = vxor.u32 %v738, 2147483648
    %v748 = vmul.f32 %v747, 1.442695
    %v749 = vpow.pop %v748
    %v750 = vadd.f32 %v749, 1.0
    %v751 = vrcp.pop %v750
    %v752 = vmul.f32 1.0, %v751
    %v753 = vmul.f32 %v745, %v644
    %v754 = vmul.f32 %v745, %v746
    %756 = vrot.lane.b32.xlu0 %v754, 64
    %v757 = vpop.permute.xlu0 %756
    %v759 = vadd.f32 %v753, %v757
    %v760 = vtanh.pop %v759
    %v761 = vmul.f32 %v752, %v760
    %763 = vrot.lane.b32.xlu0 %v761, 64
    %v764 = vpop.permute.xlu0 %763
    %s766 = scalar_lea.vmem [#allocation3], 24
    %767 = vst.msk [vmem:[%s766] sm:$0xff] %vm321, %v764
    %s768 = scalar_lea.vmem [#allocation4], 64
    %769 = vst.msk [vmem:[%s768] sm:$0xff] %vm321, %v764
    %s770 = smul.u32 4, 2
    %s771 = smul.addr %s770, 8
    %s772 = scalar_lea.vmem [#allocation2], %s771
    %v773 = vld [vmem:[%s772] sm:$0xff]
    %v774 = vld [vmem:[%s772 + $0x8] sm:$0xff]
    %s775 = smul.u32 7, 2
    %s776 = smul.addr %s775, 8
    %s777 = scalar_lea.vmem [#allocation2], %s776
    %v778 = vld [vmem:[%s777] sm:$0xff]
    %v779 = vld [vmem:[%s777 + $0x8] sm:$0xff]
    %v780 = vsel %vm307, %v773, %v778
    %v781 = vsel %vm308, %v774, %v779
    %v782 = vsel %vm321, %v764, 0
    %784 = vmatprep.subr.mxu0 0.0
    %785 = vmatpush1.msra.mxu0 0.0
    %786 = vmatprep.subr.mxu0 0.0
    %787 = vmatpush1.msra.mxu0 0.0
    %788 = vmatprep.subr.mxu0 0.0
    %789 = vmatpush1.msra.mxu0 0.0
    %790 = vmatprep.subr.mxu0 0.0
    %791 = vmatpush1.msra.mxu0 0.0
    %792 = vmatprep.subr.mxu0 0.0
    %793 = vmatpush1.msra.mxu0 0.0
    %794 = vmatprep.subr.mxu0 0.0
    %795 = vmatpush1.msra.mxu0 0.0
    %796 = vmatprep.subr.mxu0 0.0
    %797 = vmatpush1.msra.mxu0 0.0
    %798 = vmatprep.subr.mxu0 0.0
    %799 = vmatpush1.msra.mxu0 0.0
    %800 = vmatprep.subr.mxu0 %v279
    %801 = vmatpush1.msra.mxu0 %v278
    %802 = vmatprep.subr.mxu0 %v277
    %803 = vmatpush1.msra.mxu0 %v276
    %804 = vmatprep.subr.mxu0 %v275
    %805 = vmatpush1.msra.mxu0 %v274
    %806 = vmatprep.subr.mxu0 %v273
    %807 = vmatpush1.msra.mxu0 %v272
    %808 = vmatprep.subr.mxu0 %v271
    %809 = vmatpush1.msra.mxu0 %v270
    %810 = vmatprep.subr.mxu0 %v269
    %811 = vmatpush1.msra.mxu0 %v268
    %812 = vmatprep.subr.mxu0 %v267
    %813 = vmatpush1.msra.mxu0 %v266
    %814 = vmatprep.subr.mxu0 %v265
    %815 = vmatpush1.msra.mxu0 %v264
    %816 = vmatprep.subr.mxu0 0.0
    %817 = vmatpush2.msra.mxu0 0.0
    %818 = vmatprep.subr.mxu0 0.0
    %819 = vmatpush2.msra.mxu0 0.0
    %820 = vmatprep.subr.mxu0 0.0
    %821 = vmatpush2.msra.mxu0 0.0
    %822 = vmatprep.subr.mxu0 0.0
    %823 = vmatpush2.msra.mxu0 0.0
    %824 = vmatprep.subr.mxu0 0.0
    %825 = vmatpush2.msra.mxu0 0.0
    %826 = vmatprep.subr.mxu0 0.0
    %827 = vmatpush2.msra.mxu0 0.0
    %828 = vmatprep.subr.mxu0 0.0
    %829 = vmatpush2.msra.mxu0 0.0
    %830 = vmatprep.subr.mxu0 0.0
    %831 = vmatpush2.msra.mxu0 0.0
    %832 = vmatprep.subr.mxu0 0.0
    %833 = vmatpush2.msra.mxu0 0.0
    %834 = vmatprep.subr.mxu0 0.0
    %835 = vmatpush2.msra.mxu0 0.0
    %836 = vmatprep.subr.mxu0 0.0
    %837 = vmatpush2.msra.mxu0 0.0
    %838 = vmatprep.subr.mxu0 0.0
    %839 = vmatpush2.msra.mxu0 0.0
    %840 = vmatprep.subr.mxu0 0.0
    %841 = vmatpush2.msra.mxu0 0.0
    %842 = vmatprep.subr.mxu0 0.0
    %843 = vmatpush2.msra.mxu0 0.0
    %844 = vmatprep.subr.mxu0 0.0
    %845 = vmatpush2.msra.mxu0 0.0
    %846 = vmatprep.subr.mxu0 0.0
    %847 = vmatpush2.msra.mxu0 0.0
    %848 = vmatprep.mubr.f32.mxu0 0.0
    %849 = vmatmul.mubr.f32.gmra.mxu0 %v782
    %v850 = vpop.f32.mrf.mxu0
    %v851 = vadd.f32 %v780, %v850
    %v852 = vpop.f32.mrf.mxu0
    %v853 = vadd.f32 %v781, %v852
    %854 = vdwg.mxu0
    %v855 = vxor.u32 %v851, 2147483648
    %v856 = vmul.f32 %v855, 1.442695
    %v857 = vpow.pop %v856
    %v858 = vadd.f32 %v857, 1.0
    %v859 = vrcp.pop %v858
    %v860 = vmul.f32 1.0, %v859
    %v861 = vtanh.pop %v853
    %v862 = vxor.u32 %v853, 2147483648
    %v863 = vmul.f32 %v862, 1.442695
    %v864 = vpow.pop %v863
    %v865 = vadd.f32 %v864, 1.0
    %v866 = vrcp.pop %v865
    %v867 = vmul.f32 1.0, %v866
    %v868 = vmul.f32 %v860, %v759
    %v869 = vmul.f32 %v860, %v861
    %871 = vrot.lane.b32.xlu0 %v869, 64
    %v872 = vpop.permute.xlu0 %871
    %v874 = vadd.f32 %v868, %v872
    %v875 = vtanh.pop %v874
    %v876 = vmul.f32 %v867, %v875
    %878 = vrot.lane.b32.xlu0 %v876, 64
    %v879 = vpop.permute.xlu0 %878
    %s881 = scalar_lea.vmem [#allocation3], 32
    %882 = vst.msk [vmem:[%s881] sm:$0xff] %vm321, %v879
    %s883 = scalar_lea.vmem [#allocation4], 56
    %884 = vst.msk [vmem:[%s883] sm:$0xff] %vm321, %v879
    %s885 = smul.u32 5, 2
    %s886 = smul.addr %s885, 8
    %s887 = scalar_lea.vmem [#allocation2], %s886
    %v888 = vld [vmem:[%s887] sm:$0xff]
    %v889 = vld [vmem:[%s887 + $0x8] sm:$0xff]
    %s890 = smul.u32 6, 2
    %s891 = smul.addr %s890, 8
    %s892 = scalar_lea.vmem [#allocation2], %s891
    %v893 = vld [vmem:[%s892] sm:$0xff]
    %v894 = vld [vmem:[%s892 + $0x8] sm:$0xff]
    %v895 = vsel %vm307, %v888, %v893
    %v896 = vsel %vm308, %v889, %v894
    %v897 = vsel %vm321, %v879, 0
    %899 = vmatprep.subr.mxu0 0.0
    %900 = vmatpush1.msra.mxu0 0.0
    %901 = vmatprep.subr.mxu0 0.0
    %902 = vmatpush1.msra.mxu0 0.0
    %903 = vmatprep.subr.mxu0 0.0
    %904 = vmatpush1.msra.mxu0 0.0
    %905 = vmatprep.subr.mxu0 0.0
    %906 = vmatpush1.msra.mxu0 0.0
    %907 = vmatprep.subr.mxu0 0.0
    %908 = vmatpush1.msra.mxu0 0.0
    %909 = vmatprep.subr.mxu0 0.0
    %910 = vmatpush1.msra.mxu0 0.0
    %911 = vmatprep.subr.mxu0 0.0
    %912 = vmatpush1.msra.mxu0 0.0
    %913 = vmatprep.subr.mxu0 0.0
    %914 = vmatpush1.msra.mxu0 0.0
    %915 = vmatprep.subr.mxu0 %v279
    %916 = vmatpush1.msra.mxu0 %v278
    %917 = vmatprep.subr.mxu0 %v277
    %918 = vmatpush1.msra.mxu0 %v276
    %919 = vmatprep.subr.mxu0 %v275
    %920 = vmatpush1.msra.mxu0 %v274
    %921 = vmatprep.subr.mxu0 %v273
    %922 = vmatpush1.msra.mxu0 %v272
    %923 = vmatprep.subr.mxu0 %v271
    %924 = vmatpush1.msra.mxu0 %v270
    %925 = vmatprep.subr.mxu0 %v269
    %926 = vmatpush1.msra.mxu0 %v268
    %927 = vmatprep.subr.mxu0 %v267
    %928 = vmatpush1.msra.mxu0 %v266
    %929 = vmatprep.subr.mxu0 %v265
    %930 = vmatpush1.msra.mxu0 %v264
    %931 = vmatprep.subr.mxu0 0.0
    %932 = vmatpush2.msra.mxu0 0.0
    %933 = vmatprep.subr.mxu0 0.0
    %934 = vmatpush2.msra.mxu0 0.0
    %935 = vmatprep.subr.mxu0 0.0
    %936 = vmatpush2.msra.mxu0 0.0
    %937 = vmatprep.subr.mxu0 0.0
    %938 = vmatpush2.msra.mxu0 0.0
    %939 = vmatprep.subr.mxu0 0.0
    %940 = vmatpush2.msra.mxu0 0.0
    %941 = vmatprep.subr.mxu0 0.0
    %942 = vmatpush2.msra.mxu0 0.0
    %943 = vmatprep.subr.mxu0 0.0
    %944 = vmatpush2.msra.mxu0 0.0
    %945 = vmatprep.subr.mxu0 0.0
    %946 = vmatpush2.msra.mxu0 0.0
    %947 = vmatprep.subr.mxu0 0.0
    %948 = vmatpush2.msra.mxu0 0.0
    %949 = vmatprep.subr.mxu0 0.0
    %950 = vmatpush2.msra.mxu0 0.0
    %951 = vmatprep.subr.mxu0 0.0
    %952 = vmatpush2.msra.mxu0 0.0
    %953 = vmatprep.subr.mxu0 0.0
    %954 = vmatpush2.msra.mxu0 0.0
    %955 = vmatprep.subr.mxu0 0.0
    %956 = vmatpush2.msra.mxu0 0.0
    %957 = vmatprep.subr.mxu0 0.0
    %958 = vmatpush2.msra.mxu0 0.0
    %959 = vmatprep.subr.mxu0 0.0
    %960 = vmatpush2.msra.mxu0 0.0
    %961 = vmatprep.subr.mxu0 0.0
    %962 = vmatpush2.msra.mxu0 0.0
    %963 = vmatprep.mubr.f32.mxu0 0.0
    %964 = vmatmul.mubr.f32.gmra.mxu0 %v897
    %v965 = vpop.f32.mrf.mxu0
    %v966 = vadd.f32 %v895, %v965
    %v967 = vpop.f32.mrf.mxu0
    %v968 = vadd.f32 %v896, %v967
    %969 = vdwg.mxu0
    %v970 = vxor.u32 %v966, 2147483648
    %v971 = vmul.f32 %v970, 1.442695
    %v972 = vpow.pop %v971
    %v973 = vadd.f32 %v972, 1.0
    %v974 = vrcp.pop %v973
    %v975 = vmul.f32 1.0, %v974
    %v976 = vtanh.pop %v968
    %v977 = vxor.u32 %v968, 2147483648
    %v978 = vmul.f32 %v977, 1.442695
    %v979 = vpow.pop %v978
    %v980 = vadd.f32 %v979, 1.0
    %v981 = vrcp.pop %v980
    %v982 = vmul.f32 1.0, %v981
    %v983 = vmul.f32 %v975, %v874
    %v984 = vmul.f32 %v975, %v976
    %986 = vrot.lane.b32.xlu0 %v984, 64
    %v987 = vpop.permute.xlu0 %986
    %v989 = vadd.f32 %v983, %v987
    %v990 = vtanh.pop %v989
    %v991 = vmul.f32 %v982, %v990
    %993 = vrot.lane.b32.xlu0 %v991, 64
    %v994 = vpop.permute.xlu0 %993
    %s996 = scalar_lea.vmem [#allocation3], 40
    %997 = vst.msk [vmem:[%s996] sm:$0xff] %vm321, %v994
    %s998 = scalar_lea.vmem [#allocation4], 48
    %999 = vst.msk [vmem:[%s998] sm:$0xff] %vm321, %v994
    %v1000 = vld [vmem:[%s892] sm:$0xff]
    %v1001 = vld [vmem:[%s892 + $0x8] sm:$0xff]
    %v1002 = vld [vmem:[%s887] sm:$0xff]
    %v1003 = vld [vmem:[%s887 + $0x8] sm:$0xff]
    %v1004 = vsel %vm307, %v1000, %v1002
    %v1005 = vsel %vm308, %v1001, %v1003
    %v1006 = vsel %vm321, %v994, 0
    %1008 = vmatprep.subr.mxu0 0.0
    %1009 = vmatpush1.msra.mxu0 0.0
    %1010 = vmatprep.subr.mxu0 0.0
    %1011 = vmatpush1.msra.mxu0 0.0
    %1012 = vmatprep.subr.mxu0 0.0
    %1013 = vmatpush1.msra.mxu0 0.0
    %1014 = vmatprep.subr.mxu0 0.0
    %1015 = vmatpush1.msra.mxu0 0.0
    %1016 = vmatprep.subr.mxu0 0.0
    %1017 = vmatpush1.msra.mxu0 0.0
    %1018 = vmatprep.subr.mxu0 0.0
    %1019 = vmatpush1.msra.mxu0 0.0
    %1020 = vmatprep.subr.mxu0 0.0
    %1021 = vmatpush1.msra.mxu0 0.0
    %1022 = vmatprep.subr.mxu0 0.0
    %1023 = vmatpush1.msra.mxu0 0.0
    %1024 = vmatprep.subr.mxu0 %v279
    %1025 = vmatpush1.msra.mxu0 %v278
    %1026 = vmatprep.subr.mxu0 %v277
    %1027 = vmatpush1.msra.mxu0 %v276
    %1028 = vmatprep.subr.mxu0 %v275
    %1029 = vmatpush1.msra.mxu0 %v274
    %1030 = vmatprep.subr.mxu0 %v273
    %1031 = vmatpush1.msra.mxu0 %v272
    %1032 = vmatprep.subr.mxu0 %v271
    %1033 = vmatpush1.msra.mxu0 %v270
    %1034 = vmatprep.subr.mxu0 %v269
    %1035 = vmatpush1.msra.mxu0 %v268
    %1036 = vmatprep.subr.mxu0 %v267
    %1037 = vmatpush1.msra.mxu0 %v266
    %1038 = vmatprep.subr.mxu0 %v265
    %1039 = vmatpush1.msra.mxu0 %v264
    %1040 = vmatprep.subr.mxu0 0.0
    %1041 = vmatpush2.msra.mxu0 0.0
    %1042 = vmatprep.subr.mxu0 0.0
    %1043 = vmatpush2.msra.mxu0 0.0
    %1044 = vmatprep.subr.mxu0 0.0
    %1045 = vmatpush2.msra.mxu0 0.0
    %1046 = vmatprep.subr.mxu0 0.0
    %1047 = vmatpush2.msra.mxu0 0.0
    %1048 = vmatprep.subr.mxu0 0.0
    %1049 = vmatpush2.msra.mxu0 0.0
    %1050 = vmatprep.subr.mxu0 0.0
    %1051 = vmatpush2.msra.mxu0 0.0
    %1052 = vmatprep.subr.mxu0 0.0
    %1053 = vmatpush2.msra.mxu0 0.0
    %1054 = vmatprep.subr.mxu0 0.0
    %1055 = vmatpush2.msra.mxu0 0.0
    %1056 = vmatprep.subr.mxu0 0.0
    %1057 = vmatpush2.msra.mxu0 0.0
    %1058 = vmatprep.subr.mxu0 0.0
    %1059 = vmatpush2.msra.mxu0 0.0
    %1060 = vmatprep.subr.mxu0 0.0
    %1061 = vmatpush2.msra.mxu0 0.0
    %1062 = vmatprep.subr.mxu0 0.0
    %1063 = vmatpush2.msra.mxu0 0.0
    %1064 = vmatprep.subr.mxu0 0.0
    %1065 = vmatpush2.msra.mxu0 0.0
    %1066 = vmatprep.subr.mxu0 0.0
    %1067 = vmatpush2.msra.mxu0 0.0
    %1068 = vmatprep.subr.mxu0 0.0
    %1069 = vmatpush2.msra.mxu0 0.0
    %1070 = vmatprep.subr.mxu0 0.0
    %1071 = vmatpush2.msra.mxu0 0.0
    %1072 = vmatprep.mubr.f32.mxu0 0.0
    %1073 = vmatmul.mubr.f32.gmra.mxu0 %v1006
    %v1074 = vpop.f32.mrf.mxu0
    %v1075 = vadd.f32 %v1004, %v1074
    %v1076 = vpop.f32.mrf.mxu0
    %v1077 = vadd.f32 %v1005, %v1076
    %1078 = vdwg.mxu0
    %v1079 = vxor.u32 %v1075, 2147483648
    %v1080 = vmul.f32 %v1079, 1.442695
    %v1081 = vpow.pop %v1080
    %v1082 = vadd.f32 %v1081, 1.0
    %v1083 = vrcp.pop %v1082
    %v1084 = vmul.f32 1.0, %v1083
    %v1085 = vtanh.pop %v1077
    %v1086 = vxor.u32 %v1077, 2147483648
    %v1087 = vmul.f32 %v1086, 1.442695
    %v1088 = vpow.pop %v1087
    %v1089 = vadd.f32 %v1088, 1.0
    %v1090 = vrcp.pop %v1089
    %v1091 = vmul.f32 1.0, %v1090
    %v1092 = vmul.f32 %v1084, %v989
    %v1093 = vmul.f32 %v1084, %v1085
    %1095 = vrot.lane.b32.xlu0 %v1093, 64
    %v1096 = vpop.permute.xlu0 %1095
    %v1098 = vadd.f32 %v1092, %v1096
    %v1099 = vtanh.pop %v1098
    %v1100 = vmul.f32 %v1091, %v1099
    %1102 = vrot.lane.b32.xlu0 %v1100, 64
    %v1103 = vpop.permute.xlu0 %1102
    %s1105 = scalar_lea.vmem [#allocation3], 48
    %1106 = vst.msk [vmem:[%s1105] sm:$0xff] %vm321, %v1103
    %s1107 = scalar_lea.vmem [#allocation4], 40
    %1108 = vst.msk [vmem:[%s1107] sm:$0xff] %vm321, %v1103
    %v1109 = vld [vmem:[%s777] sm:$0xff]
    %v1110 = vld [vmem:[%s777 + $0x8] sm:$0xff]
    %v1111 = vld [vmem:[%s772] sm:$0xff]
    %v1112 = vld [vmem:[%s772 + $0x8] sm:$0xff]
    %v1113 = vsel %vm307, %v1109, %v1111
    %v1114 = vsel %vm308, %v1110, %v1112
    %v1115 = vsel %vm321, %v1103, 0
    %1117 = vmatprep.subr.mxu0 0.0
    %1118 = vmatpush1.msra.mxu0 0.0
    %1119 = vmatprep.subr.mxu0 0.0
    %1120 = vmatpush1.msra.mxu0 0.0
    %1121 = vmatprep.subr.mxu0 0.0
    %1122 = vmatpush1.msra.mxu0 0.0
    %1123 = vmatprep.subr.mxu0 0.0
    %1124 = vmatpush1.msra.mxu0 0.0
    %1125 = vmatprep.subr.mxu0 0.0
    %1126 = vmatpush1.msra.mxu0 0.0
    %1127 = vmatprep.subr.mxu0 0.0
    %1128 = vmatpush1.msra.mxu0 0.0
    %1129 = vmatprep.subr.mxu0 0.0
    %1130 = vmatpush1.msra.mxu0 0.0
    %1131 = vmatprep.subr.mxu0 0.0
    %1132 = vmatpush1.msra.mxu0 0.0
    %1133 = vmatprep.subr.mxu0 %v279
    %1134 = vmatpush1.msra.mxu0 %v278
    %1135 = vmatprep.subr.mxu0 %v277
    %1136 = vmatpush1.msra.mxu0 %v276
    %1137 = vmatprep.subr.mxu0 %v275
    %1138 = vmatpush1.msra.mxu0 %v274
    %1139 = vmatprep.subr.mxu0 %v273
    %1140 = vmatpush1.msra.mxu0 %v272
    %1141 = vmatprep.subr.mxu0 %v271
    %1142 = vmatpush1.msra.mxu0 %v270
    %1143 = vmatprep.subr.mxu0 %v269
    %1144 = vmatpush1.msra.mxu0 %v268
    %1145 = vmatprep.subr.mxu0 %v267
    %1146 = vmatpush1.msra.mxu0 %v266
    %1147 = vmatprep.subr.mxu0 %v265
    %1148 = vmatpush1.msra.mxu0 %v264
    %1149 = vmatprep.subr.mxu0 0.0
    %1150 = vmatpush2.msra.mxu0 0.0
    %1151 = vmatprep.subr.mxu0 0.0
    %1152 = vmatpush2.msra.mxu0 0.0
    %1153 = vmatprep.subr.mxu0 0.0
    %1154 = vmatpush2.msra.mxu0 0.0
    %1155 = vmatprep.subr.mxu0 0.0
    %1156 = vmatpush2.msra.mxu0 0.0
    %1157 = vmatprep.subr.mxu0 0.0
    %1158 = vmatpush2.msra.mxu0 0.0
    %1159 = vmatprep.subr.mxu0 0.0
    %1160 = vmatpush2.msra.mxu0 0.0
    %1161 = vmatprep.subr.mxu0 0.0
    %1162 = vmatpush2.msra.mxu0 0.0
    %1163 = vmatprep.subr.mxu0 0.0
    %1164 = vmatpush2.msra.mxu0 0.0
    %1165 = vmatprep.subr.mxu0 0.0
    %1166 = vmatpush2.msra.mxu0 0.0
    %1167 = vmatprep.subr.mxu0 0.0
    %1168 = vmatpush2.msra.mxu0 0.0
    %1169 = vmatprep.subr.mxu0 0.0
    %1170 = vmatpush2.msra.mxu0 0.0
    %1171 = vmatprep.subr.mxu0 0.0
    %1172 = vmatpush2.msra.mxu0 0.0
    %1173 = vmatprep.subr.mxu0 0.0
    %1174 = vmatpush2.msra.mxu0 0.0
    %1175 = vmatprep.subr.mxu0 0.0
    %1176 = vmatpush2.msra.mxu0 0.0
    %1177 = vmatprep.subr.mxu0 0.0
    %1178 = vmatpush2.msra.mxu0 0.0
    %1179 = vmatprep.subr.mxu0 0.0
    %1180 = vmatpush2.msra.mxu0 0.0
    %1181 = vmatprep.mubr.f32.mxu0 0.0
    %1182 = vmatmul.mubr.f32.gmra.mxu0 %v1115
    %v1183 = vpop.f32.mrf.mxu0
    %v1184 = vadd.f32 %v1113, %v1183
    %v1185 = vpop.f32.mrf.mxu0
    %v1186 = vadd.f32 %v1114, %v1185
    %1187 = vdwg.mxu0
    %v1188 = vxor.u32 %v1184, 2147483648
    %v1189 = vmul.f32 %v1188, 1.442695
    %v1190 = vpow.pop %v1189
    %v1191 = vadd.f32 %v1190, 1.0
    %v1192 = vrcp.pop %v1191
    %v1193 = vmul.f32 1.0, %v1192
    %v1194 = vtanh.pop %v1186
    %v1195 = vxor.u32 %v1186, 2147483648
    %v1196 = vmul.f32 %v1195, 1.442695
    %v1197 = vpow.pop %v1196
    %v1198 = vadd.f32 %v1197, 1.0
    %v1199 = vrcp.pop %v1198
    %v1200 = vmul.f32 1.0, %v1199
    %v1201 = vmul.f32 %v1193, %v1098
    %v1202 = vmul.f32 %v1193, %v1194
    %1204 = vrot.lane.b32.xlu0 %v1202, 64
    %v1205 = vpop.permute.xlu0 %1204
    %v1207 = vadd.f32 %v1201, %v1205
    %v1208 = vtanh.pop %v1207
    %v1209 = vmul.f32 %v1200, %v1208
    %1211 = vrot.lane.b32.xlu0 %v1209, 64
    %v1212 = vpop.permute.xlu0 %1211
    %s1214 = scalar_lea.vmem [#allocation3], 56
    %1215 = vst.msk [vmem:[%s1214] sm:$0xff] %vm321, %v1212
    %s1216 = scalar_lea.vmem [#allocation4], 32
    %1217 = vst.msk [vmem:[%s1216] sm:$0xff] %vm321, %v1212
    %v1218 = vld [vmem:[%s662] sm:$0xff]
    %v1219 = vld [vmem:[%s662 + $0x8] sm:$0xff]
    %v1220 = vld [vmem:[%s657] sm:$0xff]
    %v1221 = vld [vmem:[%s657 + $0x8] sm:$0xff]
    %v1222 = vsel %vm307, %v1218, %v1220
    %v1223 = vsel %vm308, %v1219, %v1221
    %v1224 = vsel %vm321, %v1212, 0
    %1226 = vmatprep.subr.mxu0 0.0
    %1227 = vmatpush1.msra.mxu0 0.0
    %1228 = vmatprep.subr.mxu0 0.0
    %1229 = vmatpush1.msra.mxu0 0.0
    %1230 = vmatprep.subr.mxu0 0.0
    %1231 = vmatpush1.msra.mxu0 0.0
    %1232 = vmatprep.subr.mxu0 0.0
    %1233 = vmatpush1.msra.mxu0 0.0
    %1234 = vmatprep.subr.mxu0 0.0
    %1235 = vmatpush1.msra.mxu0 0.0
    %1236 = vmatprep.subr.mxu0 0.0
    %1237 = vmatpush1.msra.mxu0 0.0
    %1238 = vmatprep.subr.mxu0 0.0
    %1239 = vmatpush1.msra.mxu0 0.0
    %1240 = vmatprep.subr.mxu0 0.0
    %1241 = vmatpush1.msra.mxu0 0.0
    %1242 = vmatprep.subr.mxu0 %v279
    %1243 = vmatpush1.msra.mxu0 %v278
    %1244 = vmatprep.subr.mxu0 %v277
    %1245 = vmatpush1.msra.mxu0 %v276
    %1246 = vmatprep.subr.mxu0 %v275
    %1247 = vmatpush1.msra.mxu0 %v274
    %1248 = vmatprep.subr.mxu0 %v273
    %1249 = vmatpush1.msra.mxu0 %v272
    %1250 = vmatprep.subr.mxu0 %v271
    %1251 = vmatpush1.msra.mxu0 %v270
    %1252 = vmatprep.subr.mxu0 %v269
    %1253 = vmatpush1.msra.mxu0 %v268
    %1254 = vmatprep.subr.mxu0 %v267
    %1255 = vmatpush1.msra.mxu0 %v266
    %1256 = vmatprep.subr.mxu0 %v265
    %1257 = vmatpush1.msra.mxu0 %v264
    %1258 = vmatprep.subr.mxu0 0.0
    %1259 = vmatpush2.msra.mxu0 0.0
    %1260 = vmatprep.subr.mxu0 0.0
    %1261 = vmatpush2.msra.mxu0 0.0
    %1262 = vmatprep.subr.mxu0 0.0
    %1263 = vmatpush2.msra.mxu0 0.0
    %1264 = vmatprep.subr.mxu0 0.0
    %1265 = vmatpush2.msra.mxu0 0.0
    %1266 = vmatprep.subr.mxu0 0.0
    %1267 = vmatpush2.msra.mxu0 0.0
    %1268 = vmatprep.subr.mxu0 0.0
    %1269 = vmatpush2.msra.mxu0 0.0
    %1270 = vmatprep.subr.mxu0 0.0
    %1271 = vmatpush2.msra.mxu0 0.0
    %1272 = vmatprep.subr.mxu0 0.0
    %1273 = vmatpush2.msra.mxu0 0.0
    %1274 = vmatprep.subr.mxu0 0.0
    %1275 = vmatpush2.msra.mxu0 0.0
    %1276 = vmatprep.subr.mxu0 0.0
    %1277 = vmatpush2.msra.mxu0 0.0
    %1278 = vmatprep.subr.mxu0 0.0
    %1279 = vmatpush2.msra.mxu0 0.0
    %1280 = vmatprep.subr.mxu0 0.0
    %1281 = vmatpush2.msra.mxu0 0.0
    %1282 = vmatprep.subr.mxu0 0.0
    %1283 = vmatpush2.msra.mxu0 0.0
    %1284 = vmatprep.subr.mxu0 0.0
    %1285 = vmatpush2.msra.mxu0 0.0
    %1286 = vmatprep.subr.mxu0 0.0
    %1287 = vmatpush2.msra.mxu0 0.0
    %1288 = vmatprep.subr.mxu0 0.0
    %1289 = vmatpush2.msra.mxu0 0.0
    %1290 = vmatprep.mubr.f32.mxu0 0.0
    %1291 = vmatmul.mubr.f32.gmra.mxu0 %v1224
    %v1292 = vpop.f32.mrf.mxu0
    %v1293 = vadd.f32 %v1222, %v1292
    %v1294 = vpop.f32.mrf.mxu0
    %v1295 = vadd.f32 %v1223, %v1294
    %1296 = vdwg.mxu0
    %v1297 = vxor.u32 %v1293, 2147483648
    %v1298 = vmul.f32 %v1297, 1.442695
    %v1299 = vpow.pop %v1298
    %v1300 = vadd.f32 %v1299, 1.0
    %v1301 = vrcp.pop %v1300
    %v1302 = vmul.f32 1.0, %v1301
    %v1303 = vtanh.pop %v1295
    %v1304 = vxor.u32 %v1295, 2147483648
    %v1305 = vmul.f32 %v1304, 1.442695
    %v1306 = vpow.pop %v1305
    %v1307 = vadd.f32 %v1306, 1.0
    %v1308 = vrcp.pop %v1307
    %v1309 = vmul.f32 1.0, %v1308
    %v1310 = vmul.f32 %v1302, %v1207
    %v1311 = vmul.f32 %v1302, %v1303
    %1313 = vrot.lane.b32.xlu0 %v1311, 64
    %v1314 = vpop.permute.xlu0 %1313
    %v1316 = vadd.f32 %v1310, %v1314
    %v1317 = vtanh.pop %v1316
    %v1318 = vmul.f32 %v1309, %v1317
    %1320 = vrot.lane.b32.xlu0 %v1318, 64
    %v1321 = vpop.permute.xlu0 %1320
    %s1323 = scalar_lea.vmem [#allocation3], 64
    %1324 = vst.msk [vmem:[%s1323] sm:$0xff] %vm321, %v1321
    %s1325 = scalar_lea.vmem [#allocation4], 24
    %1326 = vst.msk [vmem:[%s1325] sm:$0xff] %vm321, %v1321
    %v1327 = vld [vmem:[%s547] sm:$0xff]
    %v1328 = vld [vmem:[%s547 + $0x8] sm:$0xff]
    %v1329 = vld [vmem:[%s542] sm:$0xff]
    %v1330 = vld [vmem:[%s542 + $0x8] sm:$0xff]
    %v1331 = vsel %vm307, %v1327, %v1329
    %v1332 = vsel %vm308, %v1328, %v1330
    %v1333 = vsel %vm321, %v1321, 0
    %1335 = vmatprep.subr.mxu0 0.0
    %1336 = vmatpush1.msra.mxu0 0.0
    %1337 = vmatprep.subr.mxu0 0.0
    %1338 = vmatpush1.msra.mxu0 0.0
    %1339 = vmatprep.subr.mxu0 0.0
    %1340 = vmatpush1.msra.mxu0 0.0
    %1341 = vmatprep.subr.mxu0 0.0
    %1342 = vmatpush1.msra.mxu0 0.0
    %1343 = vmatprep.subr.mxu0 0.0
    %1344 = vmatpush1.msra.mxu0 0.0
    %1345 = vmatprep.subr.mxu0 0.0
    %1346 = vmatpush1.msra.mxu0 0.0
    %1347 = vmatprep.subr.mxu0 0.0
    %1348 = vmatpush1.msra.mxu0 0.0
    %1349 = vmatprep.subr.mxu0 0.0
    %1350 = vmatpush1.msra.mxu0 0.0
    %1351 = vmatprep.subr.mxu0 %v279
    %1352 = vmatpush1.msra.mxu0 %v278
    %1353 = vmatprep.subr.mxu0 %v277
    %1354 = vmatpush1.msra.mxu0 %v276
    %1355 = vmatprep.subr.mxu0 %v275
    %1356 = vmatpush1.msra.mxu0 %v274
    %1357 = vmatprep.subr.mxu0 %v273
    %1358 = vmatpush1.msra.mxu0 %v272
    %1359 = vmatprep.subr.mxu0 %v271
    %1360 = vmatpush1.msra.mxu0 %v270
    %1361 = vmatprep.subr.mxu0 %v269
    %1362 = vmatpush1.msra.mxu0 %v268
    %1363 = vmatprep.subr.mxu0 %v267
    %1364 = vmatpush1.msra.mxu0 %v266
    %1365 = vmatprep.subr.mxu0 %v265
    %1366 = vmatpush1.msra.mxu0 %v264
    %1367 = vmatprep.subr.mxu0 0.0
    %1368 = vmatpush2.msra.mxu0 0.0
    %1369 = vmatprep.subr.mxu0 0.0
    %1370 = vmatpush2.msra.mxu0 0.0
    %1371 = vmatprep.subr.mxu0 0.0
    %1372 = vmatpush2.msra.mxu0 0.0
    %1373 = vmatprep.subr.mxu0 0.0
    %1374 = vmatpush2.msra.mxu0 0.0
    %1375 = vmatprep.subr.mxu0 0.0
    %1376 = vmatpush2.msra.mxu0 0.0
    %1377 = vmatprep.subr.mxu0 0.0
    %1378 = vmatpush2.msra.mxu0 0.0
    %1379 = vmatprep.subr.mxu0 0.0
    %1380 = vmatpush2.msra.mxu0 0.0
    %1381 = vmatprep.subr.mxu0 0.0
    %1382 = vmatpush2.msra.mxu0 0.0
    %1383 = vmatprep.subr.mxu0 0.0
    %1384 = vmatpush2.msra.mxu0 0.0
    %1385 = vmatprep.subr.mxu0 0.0
    %1386 = vmatpush2.msra.mxu0 0.0
    %1387 = vmatprep.subr.mxu0 0.0
    %1388 = vmatpush2.msra.mxu0 0.0
    %1389 = vmatprep.subr.mxu0 0.0
    %1390 = vmatpush2.msra.mxu0 0.0
    %1391 = vmatprep.subr.mxu0 0.0
    %1392 = vmatpush2.msra.mxu0 0.0
    %1393 = vmatprep.subr.mxu0 0.0
    %1394 = vmatpush2.msra.mxu0 0.0
    %1395 = vmatprep.subr.mxu0 0.0
    %1396 = vmatpush2.msra.mxu0 0.0
    %1397 = vmatprep.subr.mxu0 0.0
    %1398 = vmatpush2.msra.mxu0 0.0
    %1399 = vmatprep.mubr.f32.mxu0 0.0
    %1400 = vmatmul.mubr.f32.gmra.mxu0 %v1333
    %v1401 = vpop.f32.mrf.mxu0
    %v1402 = vadd.f32 %v1331, %v1401
    %v1403 = vpop.f32.mrf.mxu0
    %v1404 = vadd.f32 %v1332, %v1403
    %1405 = vdwg.mxu0
    %v1406 = vxor.u32 %v1402, 2147483648
    %v1407 = vmul.f32 %v1406, 1.442695
    %v1408 = vpow.pop %v1407
    %v1409 = vadd.f32 %v1408, 1.0
    %v1410 = vrcp.pop %v1409
    %v1411 = vmul.f32 1.0, %v1410
    %v1412 = vtanh.pop %v1404
    %v1413 = vxor.u32 %v1404, 2147483648
    %v1414 = vmul.f32 %v1413, 1.442695
    %v1415 = vpow.pop %v1414
    %v1416 = vadd.f32 %v1415, 1.0
    %v1417 = vrcp.pop %v1416
    %v1418 = vmul.f32 1.0, %v1417
    %v1419 = vmul.f32 %v1411, %v1316
    %v1420 = vmul.f32 %v1411, %v1412
    %1422 = vrot.lane.b32.xlu0 %v1420, 64
    %v1423 = vpop.permute.xlu0 %1422
    %v1425 = vadd.f32 %v1419, %v1423
    %v1426 = vtanh.pop %v1425
    %v1427 = vmul.f32 %v1418, %v1426
    %1429 = vrot.lane.b32.xlu0 %v1427, 64
    %v1430 = vpop.permute.xlu0 %1429
    %s1432 = scalar_lea.vmem [#allocation3], 72
    %1433 = vst.msk [vmem:[%s1432] sm:$0xff] %vm321, %v1430
    %s1434 = scalar_lea.vmem [#allocation4], 16
    %1435 = vst.msk [vmem:[%s1434] sm:$0xff] %vm321, %v1430
    %v1436 = vld [vmem:[%s432] sm:$0xff]
    %v1437 = vld [vmem:[%s432 + $0x8] sm:$0xff]
    %v1438 = vld [vmem:[%s427] sm:$0xff]
    %v1439 = vld [vmem:[%s427 + $0x8] sm:$0xff]
    %v1440 = vsel %vm307, %v1436, %v1438
    %v1441 = vsel %vm308, %v1437, %v1439
    %v1442 = vsel %vm321, %v1430, 0
    %1444 = vmatprep.subr.mxu0 0.0
    %1445 = vmatpush1.msra.mxu0 0.0
    %1446 = vmatprep.subr.mxu0 0.0
    %1447 = vmatpush1.msra.mxu0 0.0
    %1448 = vmatprep.subr.mxu0 0.0
    %1449 = vmatpush1.msra.mxu0 0.0
    %1450 = vmatprep.subr.mxu0 0.0
    %1451 = vmatpush1.msra.mxu0 0.0
    %1452 = vmatprep.subr.mxu0 0.0
    %1453 = vmatpush1.msra.mxu0 0.0
    %1454 = vmatprep.subr.mxu0 0.0
    %1455 = vmatpush1.msra.mxu0 0.0
    %1456 = vmatprep.subr.mxu0 0.0
    %1457 = vmatpush1.msra.mxu0 0.0
    %1458 = vmatprep.subr.mxu0 0.0
    %1459 = vmatpush1.msra.mxu0 0.0
    %1460 = vmatprep.subr.mxu0 %v279
    %1461 = vmatpush1.msra.mxu0 %v278
    %1462 = vmatprep.subr.mxu0 %v277
    %1463 = vmatpush1.msra.mxu0 %v276
    %1464 = vmatprep.subr.mxu0 %v275
    %1465 = vmatpush1.msra.mxu0 %v274
    %1466 = vmatprep.subr.mxu0 %v273
    %1467 = vmatpush1.msra.mxu0 %v272
    %1468 = vmatprep.subr.mxu0 %v271
    %1469 = vmatpush1.msra.mxu0 %v270
    %1470 = vmatprep.subr.mxu0 %v269
    %1471 = vmatpush1.msra.mxu0 %v268
    %1472 = vmatprep.subr.mxu0 %v267
    %1473 = vmatpush1.msra.mxu0 %v266
    %1474 = vmatprep.subr.mxu0 %v265
    %1475 = vmatpush1.msra.mxu0 %v264
    %1476 = vmatprep.subr.mxu0 0.0
    %1477 = vmatpush2.msra.mxu0 0.0
    %1478 = vmatprep.subr.mxu0 0.0
    %1479 = vmatpush2.msra.mxu0 0.0
    %1480 = vmatprep.subr.mxu0 0.0
    %1481 = vmatpush2.msra.mxu0 0.0
    %1482 = vmatprep.subr.mxu0 0.0
    %1483 = vmatpush2.msra.mxu0 0.0
    %1484 = vmatprep.subr.mxu0 0.0
    %1485 = vmatpush2.msra.mxu0 0.0
    %1486 = vmatprep.subr.mxu0 0.0
    %1487 = vmatpush2.msra.mxu0 0.0
    %1488 = vmatprep.subr.mxu0 0.0
    %1489 = vmatpush2.msra.mxu0 0.0
    %1490 = vmatprep.subr.mxu0 0.0
    %1491 = vmatpush2.msra.mxu0 0.0
    %1492 = vmatprep.subr.mxu0 0.0
    %1493 = vmatpush2.msra.mxu0 0.0
    %1494 = vmatprep.subr.mxu0 0.0
    %1495 = vmatpush2.msra.mxu0 0.0
    %1496 = vmatprep.subr.mxu0 0.0
    %1497 = vmatpush2.msra.mxu0 0.0
    %1498 = vmatprep.subr.mxu0 0.0
    %1499 = vmatpush2.msra.mxu0 0.0
    %1500 = vmatprep.subr.mxu0 0.0
    %1501 = vmatpush2.msra.mxu0 0.0
    %1502 = vmatprep.subr.mxu0 0.0
    %1503 = vmatpush2.msra.mxu0 0.0
    %1504 = vmatprep.subr.mxu0 0.0
    %1505 = vmatpush2.msra.mxu0 0.0
    %1506 = vmatprep.subr.mxu0 0.0
    %1507 = vmatpush2.msra.mxu0 0.0
    %1508 = vmatprep.mubr.f32.mxu0 0.0
    %1509 = vmatmul.mubr.f32.gmra.mxu0 %v1442
    %v1510 = vpop.f32.mrf.mxu0
    %v1511 = vadd.f32 %v1440, %v1510
    %v1512 = vpop.f32.mrf.mxu0
    %v1513 = vadd.f32 %v1441, %v1512
    %1514 = vdwg.mxu0
    %v1515 = vxor.u32 %v1511, 2147483648
    %v1516 = vmul.f32 %v1515, 1.442695
    %v1517 = vpow.pop %v1516
    %v1518 = vadd.f32 %v1517, 1.0
    %v1519 = vrcp.pop %v1518
    %v1520 = vmul.f32 1.0, %v1519
    %v1521 = vtanh.pop %v1513
    %v1522 = vxor.u32 %v1513, 2147483648
    %v1523 = vmul.f32 %v1522, 1.442695
    %v1524 = vpow.pop %v1523
    %v1525 = vadd.f32 %v1524, 1.0
    %v1526 = vrcp.pop %v1525
    %v1527 = vmul.f32 1.0, %v1526
    %v1528 = vmul.f32 %v1520, %v1425
    %v1529 = vmul.f32 %v1520, %v1521
    %1531 = vrot.lane.b32.xlu0 %v1529, 64
    %v1532 = vpop.permute.xlu0 %1531
    %v1534 = vadd.f32 %v1528, %v1532
    %v1535 = vtanh.pop %v1534
    %v1536 = vmul.f32 %v1527, %v1535
    %1538 = vrot.lane.b32.xlu0 %v1536, 64
    %v1539 = vpop.permute.xlu0 %1538
    %s1541 = scalar_lea.vmem [#allocation3], 80
    %1542 = vst.msk [vmem:[%s1541] sm:$0xff] %vm321, %v1539
    %s1543 = scalar_lea.vmem [#allocation4], 8
    %1544 = vst.msk [vmem:[%s1543] sm:$0xff] %vm321, %v1539
    %v1545 = vld [vmem:[%s316] sm:$0xff]
    %v1546 = vld [vmem:[%s316 + $0x8] sm:$0xff]
    %v1547 = vld [vmem:[%s311] sm:$0xff]
    %v1548 = vld [vmem:[%s311 + $0x8] sm:$0xff]
    %v1549 = vsel %vm307, %v1545, %v1547
    %v1550 = vsel %vm308, %v1546, %v1548
    %v1551 = vsel %vm321, %v1539, 0
    %1553 = vmatprep.subr.mxu0 0.0
    %1554 = vmatpush1.msra.mxu0 0.0
    %1555 = vmatprep.subr.mxu0 0.0
    %1556 = vmatpush1.msra.mxu0 0.0
    %1557 = vmatprep.subr.mxu0 0.0
    %1558 = vmatpush1.msra.mxu0 0.0
    %1559 = vmatprep.subr.mxu0 0.0
    %1560 = vmatpush1.msra.mxu0 0.0
    %1561 = vmatprep.subr.mxu0 0.0
    %1562 = vmatpush1.msra.mxu0 0.0
    %1563 = vmatprep.subr.mxu0 0.0
    %1564 = vmatpush1.msra.mxu0 0.0
    %1565 = vmatprep.subr.mxu0 0.0
    %1566 = vmatpush1.msra.mxu0 0.0
    %1567 = vmatprep.subr.mxu0 0.0
    %1568 = vmatpush1.msra.mxu0 0.0
    %1569 = vmatprep.subr.mxu0 %v279
    %1570 = vmatpush1.msra.mxu0 %v278
    %1571 = vmatprep.subr.mxu0 %v277
    %1572 = vmatpush1.msra.mxu0 %v276
    %1573 = vmatprep.subr.mxu0 %v275
    %1574 = vmatpush1.msra.mxu0 %v274
    %1575 = vmatprep.subr.mxu0 %v273
    %1576 = vmatpush1.msra.mxu0 %v272
    %1577 = vmatprep.subr.mxu0 %v271
    %1578 = vmatpush1.msra.mxu0 %v270
    %1579 = vmatprep.subr.mxu0 %v269
    %1580 = vmatpush1.msra.mxu0 %v268
    %1581 = vmatprep.subr.mxu0 %v267
    %1582 = vmatpush1.msra.mxu0 %v266
    %1583 = vmatprep.subr.mxu0 %v265
    %1584 = vmatpush1.msra.mxu0 %v264
    %1585 = vmatprep.subr.mxu0 0.0
    %1586 = vmatpush2.msra.mxu0 0.0
    %1587 = vmatprep.subr.mxu0 0.0
    %1588 = vmatpush2.msra.mxu0 0.0
    %1589 = vmatprep.subr.mxu0 0.0
    %1590 = vmatpush2.msra.mxu0 0.0
    %1591 = vmatprep.subr.mxu0 0.0
    %1592 = vmatpush2.msra.mxu0 0.0
    %1593 = vmatprep.subr.mxu0 0.0
    %1594 = vmatpush2.msra.mxu0 0.0
    %1595 = vmatprep.subr.mxu0 0.0
    %1596 = vmatpush2.msra.mxu0 0.0
    %1597 = vmatprep.subr.mxu0 0.0
    %1598 = vmatpush2.msra.mxu0 0.0
    %1599 = vmatprep.subr.mxu0 0.0
    %1600 = vmatpush2.msra.mxu0 0.0
    %1601 = vmatprep.subr.mxu0 0.0
    %1602 = vmatpush2.msra.mxu0 0.0
    %1603 = vmatprep.subr.mxu0 0.0
    %1604 = vmatpush2.msra.mxu0 0.0
    %1605 = vmatprep.subr.mxu0 0.0
    %1606 = vmatpush2.msra.mxu0 0.0
    %1607 = vmatprep.subr.mxu0 0.0
    %1608 = vmatpush2.msra.mxu0 0.0
    %1609 = vmatprep.subr.mxu0 0.0
    %1610 = vmatpush2.msra.mxu0 0.0
    %1611 = vmatprep.subr.mxu0 0.0
    %1612 = vmatpush2.msra.mxu0 0.0
    %1613 = vmatprep.subr.mxu0 0.0
    %1614 = vmatpush2.msra.mxu0 0.0
    %1615 = vmatprep.subr.mxu0 0.0
    %1616 = vmatpush2.msra.mxu0 0.0
    %1617 = vmatprep.mubr.f32.mxu0 0.0
    %1618 = vmatmul.mubr.f32.gmra.mxu0 %v1551
    %v1619 = vpop.f32.mrf.mxu0
    %v1620 = vadd.f32 %v1549, %v1619
    %v1621 = vpop.f32.mrf.mxu0
    %v1622 = vadd.f32 %v1550, %v1621
    %1623 = vdwg.mxu0
    %v1624 = vxor.u32 %v1620, 2147483648
    %v1625 = vmul.f32 %v1624, 1.442695
    %v1626 = vpow.pop %v1625
    %v1627 = vadd.f32 %v1626, 1.0
    %v1628 = vrcp.pop %v1627
    %v1629 = vmul.f32 1.0, %v1628
    %v1630 = vtanh.pop %v1622
    %v1631 = vxor.u32 %v1622, 2147483648
    %v1632 = vmul.f32 %v1631, 1.442695
    %v1633 = vpow.pop %v1632
    %v1634 = vadd.f32 %v1633, 1.0
    %v1635 = vrcp.pop %v1634
    %v1636 = vmul.f32 1.0, %v1635
    %v1637 = vmul.f32 %v1629, %v1534
    %v1638 = vmul.f32 %v1629, %v1630
    %1640 = vrot.lane.b32.xlu0 %v1638, 64
    %v1641 = vpop.permute.xlu0 %1640
    %v1643 = vadd.f32 %v1637, %v1641
    %v1644 = vtanh.pop %v1643
    %v1645 = vmul.f32 %v1636, %v1644
    %1647 = vrot.lane.b32.xlu0 %v1645, 64
    %v1648 = vpop.permute.xlu0 %1647
    %s1650 = scalar_lea.vmem [#allocation3], 88
    %1651 = vst.msk [vmem:[%s1650] sm:$0xff] %vm321, %v1648
    %1652 = vst.msk [vmem:[#allocation4] sm:$0xff] %vm321, %v1648
    %v1653 = vld [vmem:[#allocation3] sm:$0xff]
    %v1654 = vld [vmem:[#allocation3 + $0x8] sm:$0xff]
    %v1655 = vld [vmem:[#allocation3 + $0x10] sm:$0xff]
    %v1656 = vld [vmem:[#allocation3 + $0x18] sm:$0xff]
    %v1657 = vld [vmem:[#allocation3 + $0x20] sm:$0xff]
    %v1658 = vld [vmem:[#allocation3 + $0x28] sm:$0xff]
    %v1659 = vld [vmem:[#allocation3 + $0x30] sm:$0xff]
    %v1660 = vld [vmem:[#allocation3 + $0x38] sm:$0xff]
    %v1661 = vld [vmem:[#allocation3 + $0x40] sm:$0xff]
    %v1662 = vld [vmem:[#allocation3 + $0x48] sm:$0xff]
    %v1663 = vld [vmem:[#allocation3 + $0x50] sm:$0xff]
    %v1664 = vld [vmem:[#allocation3 + $0x58] sm:$0xff]
    %v1665 = vld [vmem:[%s5] sm:$0xff]
    %v1666 = vld [vmem:[%s5 + $0x8] sm:$0xff]
    %v1667 = vld [vmem:[%s5 + $0x10] sm:$0xff]
    %v1668 = vld [vmem:[%s5 + $0x18] sm:$0xff]
    %v1669 = vld [vmem:[%s5 + $0x20] sm:$0xff]
    %v1670 = vld [vmem:[%s5 + $0x28] sm:$0xff]
    %v1671 = vld [vmem:[%s5 + $0x30] sm:$0xff]
    %v1672 = vld [vmem:[%s5 + $0x38] sm:$0xff]
    %v1673 = vld [vmem:[#allocation4] sm:$0xff]
    %v1674 = vld [vmem:[#allocation4 + $0x8] sm:$0xff]
    %v1675 = vld [vmem:[#allocation4 + $0x10] sm:$0xff]
    %v1676 = vld [vmem:[#allocation4 + $0x18] sm:$0xff]
    %v1677 = vld [vmem:[#allocation4 + $0x20] sm:$0xff]
    %v1678 = vld [vmem:[#allocation4 + $0x28] sm:$0xff]
    %v1679 = vld [vmem:[#allocation4 + $0x30] sm:$0xff]
    %v1680 = vld [vmem:[#allocation4 + $0x38] sm:$0xff]
    %v1681 = vld [vmem:[#allocation4 + $0x40] sm:$0xff]
    %v1682 = vld [vmem:[#allocation4 + $0x48] sm:$0xff]
    %v1683 = vld [vmem:[#allocation4 + $0x50] sm:$0xff]
    %v1684 = vld [vmem:[#allocation4 + $0x58] sm:$0xff]
    %v1685 = vld [vmem:[%s6] sm:$0xff]
    %v1686 = vld [vmem:[%s6 + $0x8] sm:$0xff]
    %v1687 = vld [vmem:[%s6 + $0x10] sm:$0xff]
    %v1688 = vld [vmem:[%s6 + $0x18] sm:$0xff]
    %v1689 = vld [vmem:[%s6 + $0x20] sm:$0xff]
    %v1690 = vld [vmem:[%s6 + $0x28] sm:$0xff]
    %v1691 = vld [vmem:[%s6 + $0x30] sm:$0xff]
    %v1692 = vld [vmem:[%s6 + $0x38] sm:$0xff]
    %v1694 = vsel %vm321, %v1673, 0
    %v1697 = vsel %vm321, %v1674, 0
    %v1700 = vsel %vm321, %v1675, 0
    %v1703 = vsel %vm321, %v1676, 0
    %v1706 = vsel %vm321, %v1677, 0
    %v1709 = vsel %vm321, %v1678, 0
    %v1712 = vsel %vm321, %v1679, 0
    %v1715 = vsel %vm321, %v1680, 0
    %v1718 = vsel %vm321, %v1681, 0
    %v1721 = vsel %vm321, %v1682, 0
    %v1724 = vsel %vm321, %v1683, 0
    %v1727 = vsel %vm321, %v1684, 0
    %1729 = vmatprep.subr.mxu0 0.0
    %1730 = vmatpush1.msra.mxu0 0.0
    %1731 = vmatprep.subr.mxu0 0.0
    %1732 = vmatpush1.msra.mxu0 0.0
    %1733 = vmatprep.subr.mxu0 0.0
    %1734 = vmatpush1.msra.mxu0 0.0
    %1735 = vmatprep.subr.mxu0 0.0
    %1736 = vmatpush1.msra.mxu0 0.0
    %1737 = vmatprep.subr.mxu0 0.0
    %1738 = vmatpush1.msra.mxu0 0.0
    %1739 = vmatprep.subr.mxu0 0.0
    %1740 = vmatpush1.msra.mxu0 0.0
    %1741 = vmatprep.subr.mxu0 0.0
    %1742 = vmatpush1.msra.mxu0 0.0
    %1743 = vmatprep.subr.mxu0 0.0
    %1744 = vmatpush1.msra.mxu0 0.0
    %1745 = vmatprep.subr.mxu0 0.0
    %1746 = vmatpush1.msra.mxu0 %v1692
    %1747 = vmatprep.subr.mxu0 0.0
    %1748 = vmatpush1.msra.mxu0 %v1691
    %1749 = vmatprep.subr.mxu0 0.0
    %1750 = vmatpush1.msra.mxu0 %v1690
    %1751 = vmatprep.subr.mxu0 0.0
    %1752 = vmatpush1.msra.mxu0 %v1689
    %1753 = vmatprep.subr.mxu0 0.0
    %1754 = vmatpush1.msra.mxu0 %v1688
    %1755 = vmatprep.subr.mxu0 0.0
    %1756 = vmatpush1.msra.mxu0 %v1687
    %1757 = vmatprep.subr.mxu0 0.0
    %1758 = vmatpush1.msra.mxu0 %v1686
    %1759 = vmatprep.subr.mxu0 0.0
    %1760 = vmatpush1.msra.mxu0 %v1685
    %1761 = vmatprep.subr.mxu0 0.0
    %1762 = vmatpush2.msra.mxu0 0.0
    %1763 = vmatprep.subr.mxu0 0.0
    %1764 = vmatpush2.msra.mxu0 0.0
    %1765 = vmatprep.subr.mxu0 0.0
    %1766 = vmatpush2.msra.mxu0 0.0
    %1767 = vmatprep.subr.mxu0 0.0
    %1768 = vmatpush2.msra.mxu0 0.0
    %1769 = vmatprep.subr.mxu0 0.0
    %1770 = vmatpush2.msra.mxu0 0.0
    %1771 = vmatprep.subr.mxu0 0.0
    %1772 = vmatpush2.msra.mxu0 0.0
    %1773 = vmatprep.subr.mxu0 0.0
    %1774 = vmatpush2.msra.mxu0 0.0
    %1775 = vmatprep.subr.mxu0 0.0
    %1776 = vmatpush2.msra.mxu0 0.0
    %1777 = vmatprep.subr.mxu0 0.0
    %1778 = vmatpush2.msra.mxu0 0.0
    %1779 = vmatprep.subr.mxu0 0.0
    %1780 = vmatpush2.msra.mxu0 0.0
    %1781 = vmatprep.subr.mxu0 0.0
    %1782 = vmatpush2.msra.mxu0 0.0
    %1783 = vmatprep.subr.mxu0 0.0
    %1784 = vmatpush2.msra.mxu0 0.0
    %1785 = vmatprep.subr.mxu0 0.0
    %1786 = vmatpush2.msra.mxu0 0.0
    %1787 = vmatprep.subr.mxu0 0.0
    %1788 = vmatpush2.msra.mxu0 0.0
    %1789 = vmatprep.subr.mxu0 0.0
    %1790 = vmatpush2.msra.mxu0 0.0
    %1791 = vmatprep.subr.mxu0 0.0
    %1792 = vmatpush2.msra.mxu0 0.0
    %1793 = vmatprep.mubr.f32.mxu0 0.0
    %1794 = vmatmul.mubr.f32.gmra.mxu0 %v1694
    %v1795 = vpop.f32.mrf.mxu0
    %v1796 = vadd.f32 0.0, %v1795
    %v1797 = vpop.f32.mrf.mxu0
    %1798 = vmatprep.mubr.f32.mxu0 0.0
    %1799 = vmatmul.mubr.f32.gmra.mxu0 %v1697
    %v1800 = vpop.f32.mrf.mxu0
    %v1801 = vadd.f32 0.0, %v1800
    %v1802 = vpop.f32.mrf.mxu0
    %1803 = vmatprep.mubr.f32.mxu0 0.0
    %1804 = vmatmul.mubr.f32.gmra.mxu0 %v1700
    %v1805 = vpop.f32.mrf.mxu0
    %v1806 = vadd.f32 0.0, %v1805
    %v1807 = vpop.f32.mrf.mxu0
    %1808 = vmatprep.mubr.f32.mxu0 0.0
    %1809 = vmatmul.mubr.f32.gmra.mxu0 %v1703
    %v1810 = vpop.f32.mrf.mxu0
    %v1811 = vadd.f32 0.0, %v1810
    %v1812 = vpop.f32.mrf.mxu0
    %1813 = vmatprep.mubr.f32.mxu0 0.0
    %1814 = vmatmul.mubr.f32.gmra.mxu0 %v1706
    %v1815 = vpop.f32.mrf.mxu0
    %v1816 = vadd.f32 0.0, %v1815
    %v1817 = vpop.f32.mrf.mxu0
    %1818 = vmatprep.mubr.f32.mxu0 0.0
    %1819 = vmatmul.mubr.f32.gmra.mxu0 %v1709
    %v1820 = vpop.f32.mrf.mxu0
    %v1821 = vadd.f32 0.0, %v1820
    %v1822 = vpop.f32.mrf.mxu0
    %1823 = vmatprep.mubr.f32.mxu0 0.0
    %1824 = vmatmul.mubr.f32.gmra.mxu0 %v1712
    %v1825 = vpop.f32.mrf.mxu0
    %v1826 = vadd.f32 0.0, %v1825
    %v1827 = vpop.f32.mrf.mxu0
    %1828 = vmatprep.mubr.f32.mxu0 0.0
    %1829 = vmatmul.mubr.f32.gmra.mxu0 %v1715
    %v1830 = vpop.f32.mrf.mxu0
    %v1831 = vadd.f32 0.0, %v1830
    %v1832 = vpop.f32.mrf.mxu0
    %1833 = vmatprep.mubr.f32.mxu0 0.0
    %1834 = vmatmul.mubr.f32.gmra.mxu0 %v1718
    %v1835 = vpop.f32.mrf.mxu0
    %v1836 = vadd.f32 0.0, %v1835
    %v1837 = vpop.f32.mrf.mxu0
    %1838 = vmatprep.mubr.f32.mxu0 0.0
    %1839 = vmatmul.mubr.f32.gmra.mxu0 %v1721
    %v1840 = vpop.f32.mrf.mxu0
    %v1841 = vadd.f32 0.0, %v1840
    %v1842 = vpop.f32.mrf.mxu0
    %1843 = vmatprep.mubr.f32.mxu0 0.0
    %1844 = vmatmul.mubr.f32.gmra.mxu0 %v1724
    %v1845 = vpop.f32.mrf.mxu0
    %v1846 = vadd.f32 0.0, %v1845
    %v1847 = vpop.f32.mrf.mxu0
    %1848 = vmatprep.mubr.f32.mxu0 0.0
    %1849 = vmatmul.mubr.f32.gmra.mxu0 %v1727
    %v1850 = vpop.f32.mrf.mxu0
    %v1851 = vadd.f32 0.0, %v1850
    %v1852 = vpop.f32.mrf.mxu0
    %1853 = vdwg.mxu0
    %v1855 = vsel %vm321, %v1653, 0
    %v1858 = vsel %vm321, %v1654, 0
    %v1861 = vsel %vm321, %v1655, 0
    %v1864 = vsel %vm321, %v1656, 0
    %v1867 = vsel %vm321, %v1657, 0
    %v1870 = vsel %vm321, %v1658, 0
    %v1873 = vsel %vm321, %v1659, 0
    %v1876 = vsel %vm321, %v1660, 0
    %v1879 = vsel %vm321, %v1661, 0
    %v1882 = vsel %vm321, %v1662, 0
    %v1885 = vsel %vm321, %v1663, 0
    %v1888 = vsel %vm321, %v1664, 0
    %1890 = vmatprep.subr.mxu0 0.0
    %1891 = vmatpush1.msra.mxu0 0.0
    %1892 = vmatprep.subr.mxu0 0.0
    %1893 = vmatpush1.msra.mxu0 0.0
    %1894 = vmatprep.subr.mxu0 0.0
    %1895 = vmatpush1.msra.mxu0 0.0
    %1896 = vmatprep.subr.mxu0 0.0
    %1897 = vmatpush1.msra.mxu0 0.0
    %1898 = vmatprep.subr.mxu0 0.0
    %1899 = vmatpush1.msra.mxu0 0.0
    %1900 = vmatprep.subr.mxu0 0.0
    %1901 = vmatpush1.msra.mxu0 0.0
    %1902 = vmatprep.subr.mxu0 0.0
    %1903 = vmatpush1.msra.mxu0 0.0
    %1904 = vmatprep.subr.mxu0 0.0
    %1905 = vmatpush1.msra.mxu0 0.0
    %1906 = vmatprep.subr.mxu0 0.0
    %1907 = vmatpush1.msra.mxu0 %v1672
    %1908 = vmatprep.subr.mxu0 0.0
    %1909 = vmatpush1.msra.mxu0 %v1671
    %1910 = vmatprep.subr.mxu0 0.0
    %1911 = vmatpush1.msra.mxu0 %v1670
    %1912 = vmatprep.subr.mxu0 0.0
    %1913 = vmatpush1.msra.mxu0 %v1669
    %1914 = vmatprep.subr.mxu0 0.0
    %1915 = vmatpush1.msra.mxu0 %v1668
    %1916 = vmatprep.subr.mxu0 0.0
    %1917 = vmatpush1.msra.mxu0 %v1667
    %1918 = vmatprep.subr.mxu0 0.0
    %1919 = vmatpush1.msra.mxu0 %v1666
    %1920 = vmatprep.subr.mxu0 0.0
    %1921 = vmatpush1.msra.mxu0 %v1665
    %1922 = vmatprep.subr.mxu0 0.0
    %1923 = vmatpush2.msra.mxu0 0.0
    %1924 = vmatprep.subr.mxu0 0.0
    %1925 = vmatpush2.msra.mxu0 0.0
    %1926 = vmatprep.subr.mxu0 0.0
    %1927 = vmatpush2.msra.mxu0 0.0
    %1928 = vmatprep.subr.mxu0 0.0
    %1929 = vmatpush2.msra.mxu0 0.0
    %1930 = vmatprep.subr.mxu0 0.0
    %1931 = vmatpush2.msra.mxu0 0.0
    %1932 = vmatprep.subr.mxu0 0.0
    %1933 = vmatpush2.msra.mxu0 0.0
    %1934 = vmatprep.subr.mxu0 0.0
    %1935 = vmatpush2.msra.mxu0 0.0
    %1936 = vmatprep.subr.mxu0 0.0
    %1937 = vmatpush2.msra.mxu0 0.0
    %1938 = vmatprep.subr.mxu0 0.0
    %1939 = vmatpush2.msra.mxu0 0.0
    %1940 = vmatprep.subr.mxu0 0.0
    %1941 = vmatpush2.msra.mxu0 0.0
    %1942 = vmatprep.subr.mxu0 0.0
    %1943 = vmatpush2.msra.mxu0 0.0
    %1944 = vmatprep.subr.mxu0 0.0
    %1945 = vmatpush2.msra.mxu0 0.0
    %1946 = vmatprep.subr.mxu0 0.0
    %1947 = vmatpush2.msra.mxu0 0.0
    %1948 = vmatprep.subr.mxu0 0.0
    %1949 = vmatpush2.msra.mxu0 0.0
    %1950 = vmatprep.subr.mxu0 0.0
    %1951 = vmatpush2.msra.mxu0 0.0
    %1952 = vmatprep.subr.mxu0 0.0
    %1953 = vmatpush2.msra.mxu0 0.0
    %1954 = vmatprep.mubr.f32.mxu0 0.0
    %1955 = vmatmul.mubr.f32.gmra.mxu0 %v1855
    %v1956 = vpop.f32.mrf.mxu0
    %v1957 = vadd.f32 %v1796, %v1956
    %v1958 = vpop.f32.mrf.mxu0
    %1959 = vmatprep.mubr.f32.mxu0 0.0
    %1960 = vmatmul.mubr.f32.gmra.mxu0 %v1858
    %v1961 = vpop.f32.mrf.mxu0
    %v1962 = vadd.f32 %v1801, %v1961
    %v1963 = vpop.f32.mrf.mxu0
    %1964 = vmatprep.mubr.f32.mxu0 0.0
    %1965 = vmatmul.mubr.f32.gmra.mxu0 %v1861
    %v1966 = vpop.f32.mrf.mxu0
    %v1967 = vadd.f32 %v1806, %v1966
    %v1968 = vpop.f32.mrf.mxu0
    %1969 = vmatprep.mubr.f32.mxu0 0.0
    %1970 = vmatmul.mubr.f32.gmra.mxu0 %v1864
    %v1971 = vpop.f32.mrf.mxu0
    %v1972 = vadd.f32 %v1811, %v1971
    %v1973 = vpop.f32.mrf.mxu0
    %1974 = vmatprep.mubr.f32.mxu0 0.0
    %1975 = vmatmul.mubr.f32.gmra.mxu0 %v1867
    %v1976 = vpop.f32.mrf.mxu0
    %v1977 = vadd.f32 %v1816, %v1976
    %v1978 = vpop.f32.mrf.mxu0
    %1979 = vmatprep.mubr.f32.mxu0 0.0
    %1980 = vmatmul.mubr.f32.gmra.mxu0 %v1870
    %v1981 = vpop.f32.mrf.mxu0
    %v1982 = vadd.f32 %v1821, %v1981
    %v1983 = vpop.f32.mrf.mxu0
    %1984 = vmatprep.mubr.f32.mxu0 0.0
    %1985 = vmatmul.mubr.f32.gmra.mxu0 %v1873
    %v1986 = vpop.f32.mrf.mxu0
    %v1987 = vadd.f32 %v1826, %v1986
    %v1988 = vpop.f32.mrf.mxu0
    %1989 = vmatprep.mubr.f32.mxu0 0.0
    %1990 = vmatmul.mubr.f32.gmra.mxu0 %v1876
    %v1991 = vpop.f32.mrf.mxu0
    %v1992 = vadd.f32 %v1831, %v1991
    %v1993 = vpop.f32.mrf.mxu0
    %1994 = vmatprep.mubr.f32.mxu0 0.0
    %1995 = vmatmul.mubr.f32.gmra.mxu0 %v1879
    %v1996 = vpop.f32.mrf.mxu0
    %v1997 = vadd.f32 %v1836, %v1996
    %v1998 = vpop.f32.mrf.mxu0
    %1999 = vmatprep.mubr.f32.mxu0 0.0
    %2000 = vmatmul.mubr.f32.gmra.mxu0 %v1882
    %v2001 = vpop.f32.mrf.mxu0
    %v2002 = vadd.f32 %v1841, %v2001
    %v2003 = vpop.f32.mrf.mxu0
    %2004 = vmatprep.mubr.f32.mxu0 0.0
    %2005 = vmatmul.mubr.f32.gmra.mxu0 %v1885
    %v2006 = vpop.f32.mrf.mxu0
    %v2007 = vadd.f32 %v1846, %v2006
    %v2008 = vpop.f32.mrf.mxu0
    %2009 = vmatprep.mubr.f32.mxu0 0.0
    %2010 = vmatmul.mubr.f32.gmra.mxu0 %v1888
    %v2011 = vpop.f32.mrf.mxu0
    %v2012 = vadd.f32 %v1851, %v2011
    %v2013 = vpop.f32.mrf.mxu0
    %2014 = vdwg.mxu0
    %v2015 = vld [vmem:[%s7] sm:$0x1]
    %v2017 = vlaneseq
    %v2018 = vshrl.u32 %v2017, 7
    %v2019 = vsub.s32 0, %v2018
    %v2020 = vrot.slane %v2015, %v2019
    %v2022 = vadd.f32 %v1957, %v2020
    %v2023 = vadd.f32 %v1962, %v2020
    %v2024 = vadd.f32 %v1967, %v2020
    %v2025 = vadd.f32 %v1972, %v2020
    %v2026 = vadd.f32 %v1977, %v2020
    %v2027 = vadd.f32 %v1982, %v2020
    %v2028 = vadd.f32 %v1987, %v2020
    %v2029 = vadd.f32 %v1992, %v2020
    %v2030 = vadd.f32 %v1997, %v2020
    %v2031 = vadd.f32 %v2002, %v2020
    %v2032 = vadd.f32 %v2007, %v2020
    %v2033 = vadd.f32 %v2012, %v2020
    %v2034 = vsub.f32 %v2022, 5.0
    %v2035 = vsub.f32 %v2023, 5.0
    %v2036 = vsub.f32 %v2024, 5.0
    %v2037 = vsub.f32 %v2025, 5.0
    %v2038 = vsub.f32 %v2026, 5.0
    %v2039 = vsub.f32 %v2027, 5.0
    %v2040 = vsub.f32 %v2028, 5.0
    %v2041 = vsub.f32 %v2029, 5.0
    %v2042 = vsub.f32 %v2030, 5.0
    %v2043 = vsub.f32 %v2031, 5.0
    %v2044 = vsub.f32 %v2032, 5.0
    %v2045 = vsub.f32 %v2033, 5.0
    %v2046 = vmax.f32 %v2034, 0.0
    %v2047 = vmax.f32 %v2035, 0.0
    %v2048 = vmax.f32 %v2036, 0.0
    %v2049 = vmax.f32 %v2037, 0.0
    %v2050 = vmax.f32 %v2038, 0.0
    %v2051 = vmax.f32 %v2039, 0.0
    %v2052 = vmax.f32 %v2040, 0.0
    %v2053 = vmax.f32 %v2041, 0.0
    %v2054 = vmax.f32 %v2042, 0.0
    %v2055 = vmax.f32 %v2043, 0.0
    %v2056 = vmax.f32 %v2044, 0.0
    %v2057 = vmax.f32 %v2045, 0.0
    %vm2058 = vcmp.ne.f32.partialorder %v2034, %v2034
    %vm2059 = vcmp.ne.f32.partialorder %v2035, %v2035
    %vm2060 = vcmp.ne.f32.partialorder %v2036, %v2036
    %vm2061 = vcmp.ne.f32.partialorder %v2037, %v2037
    %vm2062 = vcmp.ne.f32.partialorder %v2038, %v2038
    %vm2063 = vcmp.ne.f32.partialorder %v2039, %v2039
    %vm2064 = vcmp.ne.f32.partialorder %v2040, %v2040
    %vm2065 = vcmp.ne.f32.partialorder %v2041, %v2041
    %vm2066 = vcmp.ne.f32.partialorder %v2042, %v2042
    %vm2067 = vcmp.ne.f32.partialorder %v2043, %v2043
    %vm2068 = vcmp.ne.f32.partialorder %v2044, %v2044
    %vm2069 = vcmp.ne.f32.partialorder %v2045, %v2045
    %v2070 = vadd.f32 %v2034, 0.0
    %v2071 = vadd.f32 %v2035, 0.0
    %v2072 = vadd.f32 %v2036, 0.0
    %v2073 = vadd.f32 %v2037, 0.0
    %v2074 = vadd.f32 %v2038, 0.0
    %v2075 = vadd.f32 %v2039, 0.0
    %v2076 = vadd.f32 %v2040, 0.0
    %v2077 = vadd.f32 %v2041, 0.0
    %v2078 = vadd.f32 %v2042, 0.0
    %v2079 = vadd.f32 %v2043, 0.0
    %v2080 = vadd.f32 %v2044, 0.0
    %v2081 = vadd.f32 %v2045, 0.0
    %v2082 = vand.u32 2147483647, %v2034
    %v2083 = vand.u32 2147483647, %v2035
    %v2084 = vand.u32 2147483647, %v2036
    %v2085 = vand.u32 2147483647, %v2037
    %v2086 = vand.u32 2147483647, %v2038
    %v2087 = vand.u32 2147483647, %v2039
    %v2088 = vand.u32 2147483647, %v2040
    %v2089 = vand.u32 2147483647, %v2041
    %v2090 = vand.u32 2147483647, %v2042
    %v2091 = vand.u32 2147483647, %v2043
    %v2092 = vand.u32 2147483647, %v2044
    %v2093 = vand.u32 2147483647, %v2045
    %v2094 = vsub.f32 0.0, %v2082
    %v2095 = vsub.f32 0.0, %v2083
    %v2096 = vsub.f32 0.0, %v2084
    %v2097 = vsub.f32 0.0, %v2085
    %v2098 = vsub.f32 0.0, %v2086
    %v2099 = vsub.f32 0.0, %v2087
    %v2100 = vsub.f32 0.0, %v2088
    %v2101 = vsub.f32 0.0, %v2089
    %v2102 = vsub.f32 0.0, %v2090
    %v2103 = vsub.f32 0.0, %v2091
    %v2104 = vsub.f32 0.0, %v2092
    %v2105 = vsub.f32 0.0, %v2093
    %v2106 = vmul.f32 %v2094, 1.442695
    %v2107 = vpow.pop %v2106
    %v2108 = vmul.f32 %v2095, 1.442695
    %v2109 = vpow.pop %v2108
    %v2110 = vmul.f32 %v2096, 1.442695
    %v2111 = vpow.pop %v2110
    %v2112 = vmul.f32 %v2097, 1.442695
    %v2113 = vpow.pop %v2112
    %v2114 = vmul.f32 %v2098, 1.442695
    %v2115 = vpow.pop %v2114
    %v2116 = vmul.f32 %v2099, 1.442695
    %v2117 = vpow.pop %v2116
    %v2118 = vmul.f32 %v2100, 1.442695
    %v2119 = vpow.pop %v2118
    %v2120 = vmul.f32 %v2101, 1.442695
    %v2121 = vpow.pop %v2120
    %v2122 = vmul.f32 %v2102, 1.442695
    %v2123 = vpow.pop %v2122
    %v2124 = vmul.f32 %v2103, 1.442695
    %v2125 = vpow.pop %v2124
    %v2126 = vmul.f32 %v2104, 1.442695
    %v2127 = vpow.pop %v2126
    %v2128 = vmul.f32 %v2105, 1.442695
    %v2129 = vpow.pop %v2128
    %v2130 = vadd.f32 %v2107, 1.0
    %v2131 = vlog2.pop %v2130
    %v2132 = vmul.f32 %v2131, 0.6931472
    %v2133 = vmul.f32 -0.5, %v2107
    %v2134 = vadd.f32 %v2133, 1.0
    %v2135 = vmul.f32 %v2134, %v2107
    %v2136 = vand.u32 2147483647, %v2107
    %vm2137 = vcmp.lt.f32.partialorder %v2136, 0.0004427343
    %v2138 = vsel %vm2137, %v2135, %v2132
    %v2139 = vadd.f32 %v2109, 1.0
    %v2140 = vlog2.pop %v2139
    %v2141 = vmul.f32 %v2140, 0.6931472
    %v2142 = vmul.f32 -0.5, %v2109
    %v2143 = vadd.f32 %v2142, 1.0
    %v2144 = vmul.f32 %v2143, %v2109
    %v2145 = vand.u32 2147483647, %v2109
    %vm2146 = vcmp.lt.f32.partialorder %v2145, 0.0004427343
    %v2147 = vsel %vm2146, %v2144, %v2141
    %v2148 = vadd.f32 %v2111, 1.0
    %v2149 = vlog2.pop %v2148
    %v2150 = vmul.f32 %v2149, 0.6931472
    %v2151 = vmul.f32 -0.5, %v2111
    %v2152 = vadd.f32 %v2151, 1.0
    %v2153 = vmul.f32 %v2152, %v2111
    %v2154 = vand.u32 2147483647, %v2111
    %vm2155 = vcmp.lt.f32.partialorder %v2154, 0.0004427343
    %v2156 = vsel %vm2155, %v2153, %v2150
    %v2157 = vadd.f32 %v2113, 1.0
    %v2158 = vlog2.pop %v2157
    %v2159 = vmul.f32 %v2158, 0.6931472
    %v2160 = vmul.f32 -0.5, %v2113
    %v2161 = vadd.f32 %v2160, 1.0
    %v2162 = vmul.f32 %v2161, %v2113
    %v2163 = vand.u32 2147483647, %v2113
    %vm2164 = vcmp.lt.f32.partialorder %v2163, 0.0004427343
    %v2165 = vsel %vm2164, %v2162, %v2159
    %v2166 = vadd.f32 %v2115, 1.0
    %v2167 = vlog2.pop %v2166
    %v2168 = vmul.f32 %v2167, 0.6931472
    %v2169 = vmul.f32 -0.5, %v2115
    %v2170 = vadd.f32 %v2169, 1.0
    %v2171 = vmul.f32 %v2170, %v2115
    %v2172 = vand.u32 2147483647, %v2115
    %vm2173 = vcmp.lt.f32.partialorder %v2172, 0.0004427343
    %v2174 = vsel %vm2173, %v2171, %v2168
    %v2175 = vadd.f32 %v2117, 1.0
    %v2176 = vlog2.pop %v2175
    %v2177 = vmul.f32 %v2176, 0.6931472
    %v2178 = vmul.f32 -0.5, %v2117
    %v2179 = vadd.f32 %v2178, 1.0
    %v2180 = vmul.f32 %v2179, %v2117
    %v2181 = vand.u32 2147483647, %v2117
    %vm2182 = vcmp.lt.f32.partialorder %v2181, 0.0004427343
    %v2183 = vsel %vm2182, %v2180, %v2177
    %v2184 = vadd.f32 %v2119, 1.0
    %v2185 = vlog2.pop %v2184
    %v2186 = vmul.f32 %v2185, 0.6931472
    %v2187 = vmul.f32 -0.5, %v2119
    %v2188 = vadd.f32 %v2187, 1.0
    %v2189 = vmul.f32 %v2188, %v2119
    %v2190 = vand.u32 2147483647, %v2119
    %vm2191 = vcmp.lt.f32.partialorder %v2190, 0.0004427343
    %v2192 = vsel %vm2191, %v2189, %v2186
    %v2193 = vadd.f32 %v2121, 1.0
    %v2194 = vlog2.pop %v2193
    %v2195 = vmul.f32 %v2194, 0.6931472
    %v2196 = vmul.f32 -0.5, %v2121
    %v2197 = vadd.f32 %v2196, 1.0
    %v2198 = vmul.f32 %v2197, %v2121
    %v2199 = vand.u32 2147483647, %v2121
    %vm2200 = vcmp.lt.f32.partialorder %v2199, 0.0004427343
    %v2201 = vsel %vm2200, %v2198, %v2195
    %v2202 = vadd.f32 %v2123, 1.0
    %v2203 = vlog2.pop %v2202
    %v2204 = vmul.f32 %v2203, 0.6931472
    %v2205 = vmul.f32 -0.5, %v2123
    %v2206 = vadd.f32 %v2205, 1.0
    %v2207 = vmul.f32 %v2206, %v2123
    %v2208 = vand.u32 2147483647, %v2123
    %vm2209 = vcmp.lt.f32.partialorder %v2208, 0.0004427343
    %v2210 = vsel %vm2209, %v2207, %v2204
    %v2211 = vadd.f32 %v2125, 1.0
    %v2212 = vlog2.pop %v2211
    %v2213 = vmul.f32 %v2212, 0.6931472
    %v2214 = vmul.f32 -0.5, %v2125
    %v2215 = vadd.f32 %v2214, 1.0
    %v2216 = vmul.f32 %v2215, %v2125
    %v2217 = vand.u32 2147483647, %v2125
    %vm2218 = vcmp.lt.f32.partialorder %v2217, 0.0004427343
    %v2219 = vsel %vm2218, %v2216, %v2213
    %v2220 = vadd.f32 %v2127, 1.0
    %v2221 = vlog2.pop %v2220
    %v2222 = vmul.f32 %v2221, 0.6931472
    %v2223 = vmul.f32 -0.5, %v2127
    %v2224 = vadd.f32 %v2223, 1.0
    %v2225 = vmul.f32 %v2224, %v2127
    %v2226 = vand.u32 2147483647, %v2127
    %vm2227 = vcmp.lt.f32.partialorder %v2226, 0.0004427343
    %v2228 = vsel %vm2227, %v2225, %v2222
    %v2229 = vadd.f32 %v2129, 1.0
    %v2230 = vlog2.pop %v2229
    %v2231 = vmul.f32 %v2230, 0.6931472
    %v2232 = vmul.f32 -0.5, %v2129
    %v2233 = vadd.f32 %v2232, 1.0
    %v2234 = vmul.f32 %v2233, %v2129
    %v2235 = vand.u32 2147483647, %v2129
    %vm2236 = vcmp.lt.f32.partialorder %v2235, 0.0004427343
    %v2237 = vsel %vm2236, %v2234, %v2231
    %v2238 = vadd.f32 %v2046, %v2138
    %v2239 = vadd.f32 %v2047, %v2147
    %v2240 = vadd.f32 %v2048, %v2156
    %v2241 = vadd.f32 %v2049, %v2165
    %v2242 = vadd.f32 %v2050, %v2174
    %v2243 = vadd.f32 %v2051, %v2183
    %v2244 = vadd.f32 %v2052, %v2192
    %v2245 = vadd.f32 %v2053, %v2201
    %v2246 = vadd.f32 %v2054, %v2210
    %v2247 = vadd.f32 %v2055, %v2219
    %v2248 = vadd.f32 %v2056, %v2228
    %v2249 = vadd.f32 %v2057, %v2237
    %v2250 = vsel %vm2058, %v2070, %v2238
    %v2251 = vsel %vm2059, %v2071, %v2239
    %v2252 = vsel %vm2060, %v2072, %v2240
    %v2253 = vsel %vm2061, %v2073, %v2241
    %v2254 = vsel %vm2062, %v2074, %v2242
    %v2255 = vsel %vm2063, %v2075, %v2243
    %v2256 = vsel %vm2064, %v2076, %v2244
    %v2257 = vsel %vm2065, %v2077, %v2245
    %v2258 = vsel %vm2066, %v2078, %v2246
    %v2259 = vsel %vm2067, %v2079, %v2247
    %v2260 = vsel %vm2068, %v2080, %v2248
    %v2261 = vsel %vm2069, %v2081, %v2249
    %vm2262 = vcmp.lt.s32.totalorder %v281, 64
    %v2263 = vsel %vm2262, %v2022, %v2250
    %v2264 = vsel %vm2262, %v2023, %v2251
    %v2265 = vsel %vm2262, %v2024, %v2252
    %v2266 = vsel %vm2262, %v2025, %v2253
    %v2267 = vsel %vm2262, %v2026, %v2254
    %v2268 = vsel %vm2262, %v2027, %v2255
    %v2269 = vsel %vm2262, %v2028, %v2256
    %v2270 = vsel %vm2262, %v2029, %v2257
    %v2271 = vsel %vm2262, %v2030, %v2258
    %v2272 = vsel %vm2262, %v2031, %v2259
    %v2273 = vsel %vm2262, %v2032, %v2260
    %v2274 = vsel %vm2262, %v2033, %v2261
    %2275 = vst [vmem:[#allocation5] sm:$0xff] %v2263
    %2276 = vst [vmem:[#allocation5 + $0x8] sm:$0xff] %v2264
    %2277 = vst [vmem:[#allocation5 + $0x10] sm:$0xff] %v2265
    %2278 = vst [vmem:[#allocation5 + $0x18] sm:$0xff] %v2266
    %2279 = vst [vmem:[#allocation5 + $0x20] sm:$0xff] %v2267
    %2280 = vst [vmem:[#allocation5 + $0x28] sm:$0xff] %v2268
    %2281 = vst [vmem:[#allocation5 + $0x30] sm:$0xff] %v2269
    %2282 = vst [vmem:[#allocation5 + $0x38] sm:$0xff] %v2270
    %2283 = vst [vmem:[#allocation5 + $0x40] sm:$0xff] %v2271
    %2284 = vst [vmem:[#allocation5 + $0x48] sm:$0xff] %v2272
    %2285 = vst [vmem:[#allocation5 + $0x50] sm:$0xff] %v2273
    %2286 = vst [vmem:[#allocation5 + $0x58] sm:$0xff] %v2274
    %v2287 = vld [vmem:[%s1] sm:$0xff]
    %v2288 = vld [vmem:[%s1 + $0x8] sm:$0xff]
    %v2289 = vld [vmem:[%s1 + $0x10] sm:$0xff]
    %v2290 = vld [vmem:[%s1 + $0x18] sm:$0xff]
    %v2291 = vld [vmem:[%s1 + $0x20] sm:$0xff]
    %v2292 = vld [vmem:[%s1 + $0x28] sm:$0xff]
    %v2293 = vld [vmem:[%s1 + $0x30] sm:$0xff]
    %v2294 = vld [vmem:[%s1 + $0x38] sm:$0xff]
    %v2295 = vld [vmem:[%s1 + $0x40] sm:$0xff]
    %v2296 = vld [vmem:[%s1 + $0x48] sm:$0xff]
    %v2297 = vld [vmem:[%s1 + $0x50] sm:$0xff]
    %v2298 = vld [vmem:[%s1 + $0x58] sm:$0xff]
    %2311 = vrot.lane.b32.xlu0 %v2250, 64
    %v2312 = vpop.permute.xlu0 %2311
    %2313 = vrot.lane.b32.xlu0 %v2251, 64
    %v2314 = vpop.permute.xlu0 %2313
    %2315 = vrot.lane.b32.xlu0 %v2252, 64
    %v2316 = vpop.permute.xlu0 %2315
    %2317 = vrot.lane.b32.xlu0 %v2253, 64
    %v2318 = vpop.permute.xlu0 %2317
    %2319 = vrot.lane.b32.xlu0 %v2254, 64
    %v2320 = vpop.permute.xlu0 %2319
    %2321 = vrot.lane.b32.xlu0 %v2255, 64
    %v2322 = vpop.permute.xlu0 %2321
    %2323 = vrot.lane.b32.xlu0 %v2256, 64
    %v2324 = vpop.permute.xlu0 %2323
    %2325 = vrot.lane.b32.xlu0 %v2257, 64
    %v2326 = vpop.permute.xlu0 %2325
    %2327 = vrot.lane.b32.xlu0 %v2258, 64
    %v2328 = vpop.permute.xlu0 %2327
    %2329 = vrot.lane.b32.xlu0 %v2259, 64
    %v2330 = vpop.permute.xlu0 %2329
    %2331 = vrot.lane.b32.xlu0 %v2260, 64
    %v2332 = vpop.permute.xlu0 %2331
    %2333 = vrot.lane.b32.xlu0 %v2261, 64
    %v2334 = vpop.permute.xlu0 %2333
    %v2347 = vmul.f32 %v2287, %v2312
    %v2348 = vmul.f32 %v2288, %v2314
    %v2349 = vmul.f32 %v2289, %v2316
    %v2350 = vmul.f32 %v2290, %v2318
    %v2351 = vmul.f32 %v2291, %v2320
    %v2352 = vmul.f32 %v2292, %v2322
    %v2353 = vmul.f32 %v2293, %v2324
    %v2354 = vmul.f32 %v2294, %v2326
    %v2355 = vmul.f32 %v2295, %v2328
    %v2356 = vmul.f32 %v2296, %v2330
    %v2357 = vmul.f32 %v2297, %v2332
    %v2358 = vmul.f32 %v2298, %v2334
    %v2359 = vadd.f32 %v2022, %v2347
    %v2360 = vadd.f32 %v2023, %v2348
    %v2361 = vadd.f32 %v2024, %v2349
    %v2362 = vadd.f32 %v2025, %v2350
    %v2363 = vadd.f32 %v2026, %v2351
    %v2364 = vadd.f32 %v2027, %v2352
    %v2365 = vadd.f32 %v2028, %v2353
    %v2366 = vadd.f32 %v2029, %v2354
    %v2367 = vadd.f32 %v2030, %v2355
    %v2368 = vadd.f32 %v2031, %v2356
    %v2369 = vadd.f32 %v2032, %v2357
    %v2370 = vadd.f32 %v2033, %v2358
    %v2371 = vld [vmem:[%s8] sm:$0xff]
    %v2372 = vld [vmem:[%s8 + $0x8] sm:$0xff]
    %v2373 = vld [vmem:[%s8 + $0x10] sm:$0xff]
    %v2374 = vld [vmem:[%s8 + $0x18] sm:$0xff]
    %v2375 = vld [vmem:[%s8 + $0x20] sm:$0xff]
    %v2376 = vld [vmem:[%s8 + $0x28] sm:$0xff]
    %v2377 = vld [vmem:[%s8 + $0x30] sm:$0xff]
    %v2378 = vld [vmem:[%s8 + $0x38] sm:$0xff]
    %v2379 = vld [vmem:[%s9] sm:$0x1]
    %v2381 = vlaneseq
    %v2382 = vshrl.u32 %v2381, 7
    %v2383 = vsub.s32 0, %v2382
    %v2384 = vrot.slane %v2379, %v2383
    %v2387 = vsel %vm321, %v2359, 0
    %v2390 = vsel %vm321, %v2360, 0
    %v2393 = vsel %vm321, %v2361, 0
    %v2396 = vsel %vm321, %v2362, 0
    %v2399 = vsel %vm321, %v2363, 0
    %v2402 = vsel %vm321, %v2364, 0
    %v2405 = vsel %vm321, %v2365, 0
    %v2408 = vsel %vm321, %v2366, 0
    %v2411 = vsel %vm321, %v2367, 0
    %v2414 = vsel %vm321, %v2368, 0
    %v2417 = vsel %vm321, %v2369, 0
    %v2420 = vsel %vm321, %v2370, 0
    %2422 = vmatprep.subr.mxu0 0.0
    %2423 = vmatpush1.msra.mxu0 0.0
    %2424 = vmatprep.subr.mxu0 0.0
    %2425 = vmatpush1.msra.mxu0 0.0
    %2426 = vmatprep.subr.mxu0 0.0
    %2427 = vmatpush1.msra.mxu0 0.0
    %2428 = vmatprep.subr.mxu0 0.0
    %2429 = vmatpush1.msra.mxu0 0.0
    %2430 = vmatprep.subr.mxu0 0.0
    %2431 = vmatpush1.msra.mxu0 0.0
    %2432 = vmatprep.subr.mxu0 0.0
    %2433 = vmatpush1.msra.mxu0 0.0
    %2434 = vmatprep.subr.mxu0 0.0
    %2435 = vmatpush1.msra.mxu0 0.0
    %2436 = vmatprep.subr.mxu0 0.0
    %2437 = vmatpush1.msra.mxu0 0.0
    %2438 = vmatprep.subr.mxu0 0.0
    %2439 = vmatpush1.msra.mxu0 %v2378
    %2440 = vmatprep.subr.mxu0 0.0
    %2441 = vmatpush1.msra.mxu0 %v2377
    %2442 = vmatprep.subr.mxu0 0.0
    %2443 = vmatpush1.msra.mxu0 %v2376
    %2444 = vmatprep.subr.mxu0 0.0
    %2445 = vmatpush1.msra.mxu0 %v2375
    %2446 = vmatprep.subr.mxu0 0.0
    %2447 = vmatpush1.msra.mxu0 %v2374
    %2448 = vmatprep.subr.mxu0 0.0
    %2449 = vmatpush1.msra.mxu0 %v2373
    %2450 = vmatprep.subr.mxu0 0.0
    %2451 = vmatpush1.msra.mxu0 %v2372
    %2452 = vmatprep.subr.mxu0 0.0
    %2453 = vmatpush1.msra.mxu0 %v2371
    %2454 = vmatprep.subr.mxu0 0.0
    %2455 = vmatpush2.msra.mxu0 0.0
    %2456 = vmatprep.subr.mxu0 0.0
    %2457 = vmatpush2.msra.mxu0 0.0
    %2458 = vmatprep.subr.mxu0 0.0
    %2459 = vmatpush2.msra.mxu0 0.0
    %2460 = vmatprep.subr.mxu0 0.0
    %2461 = vmatpush2.msra.mxu0 0.0
    %2462 = vmatprep.subr.mxu0 0.0
    %2463 = vmatpush2.msra.mxu0 0.0
    %2464 = vmatprep.subr.mxu0 0.0
    %2465 = vmatpush2.msra.mxu0 0.0
    %2466 = vmatprep.subr.mxu0 0.0
    %2467 = vmatpush2.msra.mxu0 0.0
    %2468 = vmatprep.subr.mxu0 0.0
    %2469 = vmatpush2.msra.mxu0 0.0
    %2470 = vmatprep.subr.mxu0 0.0
    %2471 = vmatpush2.msra.mxu0 0.0
    %2472 = vmatprep.subr.mxu0 0.0
    %2473 = vmatpush2.msra.mxu0 0.0
    %2474 = vmatprep.subr.mxu0 0.0
    %2475 = vmatpush2.msra.mxu0 0.0
    %2476 = vmatprep.subr.mxu0 0.0
    %2477 = vmatpush2.msra.mxu0 0.0
    %2478 = vmatprep.subr.mxu0 0.0
    %2479 = vmatpush2.msra.mxu0 0.0
    %2480 = vmatprep.subr.mxu0 0.0
    %2481 = vmatpush2.msra.mxu0 0.0
    %2482 = vmatprep.subr.mxu0 0.0
    %2483 = vmatpush2.msra.mxu0 0.0
    %2484 = vmatprep.subr.mxu0 0.0
    %2485 = vmatpush2.msra.mxu0 0.0
    %2486 = vmatprep.mubr.f32.mxu0 0.0
    %2487 = vmatmul.mubr.f32.gmra.mxu0 %v2387
    %v2488 = vpop.f32.mrf.mxu0
    %v2489 = vadd.f32 %v2384, %v2488
    %v2490 = vpop.f32.mrf.mxu0
    %2491 = vmatprep.mubr.f32.mxu0 0.0
    %2492 = vmatmul.mubr.f32.gmra.mxu0 %v2390
    %v2493 = vpop.f32.mrf.mxu0
    %v2494 = vadd.f32 %v2384, %v2493
    %v2495 = vpop.f32.mrf.mxu0
    %2496 = vmatprep.mubr.f32.mxu0 0.0
    %2497 = vmatmul.mubr.f32.gmra.mxu0 %v2393
    %v2498 = vpop.f32.mrf.mxu0
    %v2499 = vadd.f32 %v2384, %v2498
    %v2500 = vpop.f32.mrf.mxu0
    %2501 = vmatprep.mubr.f32.mxu0 0.0
    %2502 = vmatmul.mubr.f32.gmra.mxu0 %v2396
    %v2503 = vpop.f32.mrf.mxu0
    %v2504 = vadd.f32 %v2384, %v2503
    %v2505 = vpop.f32.mrf.mxu0
    %2506 = vmatprep.mubr.f32.mxu0 0.0
    %2507 = vmatmul.mubr.f32.gmra.mxu0 %v2399
    %v2508 = vpop.f32.mrf.mxu0
    %v2509 = vadd.f32 %v2384, %v2508
    %v2510 = vpop.f32.mrf.mxu0
    %2511 = vmatprep.mubr.f32.mxu0 0.0
    %2512 = vmatmul.mubr.f32.gmra.mxu0 %v2402
    %v2513 = vpop.f32.mrf.mxu0
    %v2514 = vadd.f32 %v2384, %v2513
    %v2515 = vpop.f32.mrf.mxu0
    %2516 = vmatprep.mubr.f32.mxu0 0.0
    %2517 = vmatmul.mubr.f32.gmra.mxu0 %v2405
    %v2518 = vpop.f32.mrf.mxu0
    %v2519 = vadd.f32 %v2384, %v2518
    %v2520 = vpop.f32.mrf.mxu0
    %2521 = vmatprep.mubr.f32.mxu0 0.0
    %2522 = vmatmul.mubr.f32.gmra.mxu0 %v2408
    %v2523 = vpop.f32.mrf.mxu0
    %v2524 = vadd.f32 %v2384, %v2523
    %v2525 = vpop.f32.mrf.mxu0
    %2526 = vmatprep.mubr.f32.mxu0 0.0
    %2527 = vmatmul.mubr.f32.gmra.mxu0 %v2411
    %v2528 = vpop.f32.mrf.mxu0
    %v2529 = vadd.f32 %v2384, %v2528
    %v2530 = vpop.f32.mrf.mxu0
    %2531 = vmatprep.mubr.f32.mxu0 0.0
    %2532 = vmatmul.mubr.f32.gmra.mxu0 %v2414
    %v2533 = vpop.f32.mrf.mxu0
    %v2534 = vadd.f32 %v2384, %v2533
    %v2535 = vpop.f32.mrf.mxu0
    %2536 = vmatprep.mubr.f32.mxu0 0.0
    %2537 = vmatmul.mubr.f32.gmra.mxu0 %v2417
    %v2538 = vpop.f32.mrf.mxu0
    %v2539 = vadd.f32 %v2384, %v2538
    %v2540 = vpop.f32.mrf.mxu0
    %2541 = vmatprep.mubr.f32.mxu0 0.0
    %2542 = vmatmul.mubr.f32.gmra.mxu0 %v2420
    %v2543 = vpop.f32.mrf.mxu0
    %v2544 = vadd.f32 %v2384, %v2543
    %v2545 = vpop.f32.mrf.mxu0
    %2546 = vdwg.mxu0
    %2547 = vst.msk [vmem:[%s11] sm:$0xff] %vm66, %v2489
    %2548 = vst.msk [vmem:[%s11 + $0x8] sm:$0xff] %vm66, %v2494
    %2549 = vst.msk [vmem:[%s11 + $0x10] sm:$0xff] %vm66, %v2499
    %2550 = vst.msk [vmem:[%s11 + $0x18] sm:$0xff] %vm66, %v2504
    %2551 = vst.msk [vmem:[%s11 + $0x20] sm:$0xff] %vm66, %v2509
    %2552 = vst.msk [vmem:[%s11 + $0x28] sm:$0xff] %vm66, %v2514
    %2553 = vst.msk [vmem:[%s11 + $0x30] sm:$0xff] %vm66, %v2519
    %2554 = vst.msk [vmem:[%s11 + $0x38] sm:$0xff] %vm66, %v2524
    %2555 = vst.msk [vmem:[%s11 + $0x40] sm:$0xff] %vm66, %v2529
    %2556 = vst.msk [vmem:[%s11 + $0x48] sm:$0xff] %vm66, %v2534
    %2557 = vst.msk [vmem:[%s11 + $0x50] sm:$0xff] %vm66, %v2539
    %2558 = vst.msk [vmem:[%s11 + $0x58] sm:$0xff] %vm66, %v2544
    // Predicated region
    $region42: #{tpu_custom_call.1} parent=1 // pred_check
      _
    $region43: #{tpu_custom_call.1} parent=1 // pred_check_branch
      %2560 = sbr.rel (0) target = $region45
    $region44: #{tpu_custom_call.1} parent=1 // pred_region
      %s2562 = ssub.s32 1536, 1536
      %2563 = vsyncadd [#allocation6], %s2562
      %s2564 = sshll.u32 [#allocation5], 4
      %s2565 = int_to_ptr.vmem [resolvable:$true] %s2564
      %2570 = dma.vmem_to_hbm [thread:$0]  %s2565, 1536, %s10, [#allocation6], 128, 128, 8
    $region45: #{tpu_custom_call.1} parent=1 // pred_fallthru
      _
    // Predicated region
    $region46: #{tpu_custom_call.1} parent=1 // pred_check
      _
    $region47: #{tpu_custom_call.1} parent=1 // pred_check_branch
      %2572 = sbr.rel (0) target = $region49
    $region48: #{tpu_custom_call.1} parent=1 // pred_region
      _
    $region49: #{tpu_custom_call.1} parent=1 // pred_fallthru
      _
    // Predicated region
    $region50: #{tpu_custom_call.1} parent=1 // pred_check
      _
    $region51: #{tpu_custom_call.1} parent=1 // pred_check_branch
      %2574 = sbr.rel (0) target = $region53
    $region52: #{tpu_custom_call.1} parent=1 // pred_region
      %2575 = dma.done [#allocation6], 1536
    $region53: #{tpu_custom_call.1} parent=1 // pred_fallthru
      _
    // Predicated region
    $region54: #{tpu_custom_call.1} parent=1 // pred_check
      _
    $region55: #{tpu_custom_call.1} parent=1 // pred_check_branch
      %2577 = sbr.rel (0) target = $region57
    $region56: #{tpu_custom_call.1} parent=1 // pred_region
      _
    $region57: #{tpu_custom_call.1} parent=1 // pred_fallthru
      _
    %2578 = vsyncpa [#allocation6], 1

</llo_original>
